<compile_context>
chip_gen: v7x
topology: tpu7x:2x2x1
jax: 0.10.0
libtpu: 0.0.40
codegen_flags: <defaults>
</compile_context>

<pallas_src>
import functools
import math

import jax
import jax.numpy as jnp
from jax.experimental import pallas as pl
from jax.experimental.pallas import tpu as pltpu


# ----------------------------- configuration --------------------------------
class Config:
    vocab_size = 128
    hidden_size = 64
    num_heads = 4
    num_layers = 2
    intermediate_size = 256          # 4 * hidden
    rotary_pct = 0.25                # GPTNeoX default
    rotary_base = 10000.0
    layer_norm_eps = 1e-5
    eos_token_id = 0


def _default_vmem_limit():
    """Generation-aware scoped-VMEM budget (v5e/v6e: 128 MiB, v7x: 64 MiB)."""
    try:
        cap = int(pltpu.get_tpu_info().vmem_capacity_bytes)
        return min(cap * 3 // 4, 100 * 1024 * 1024)
    except Exception:
        return 32 * 1024 * 1024


def _default_row_tile_target():
    """v5e MXU is 4x128^2 -> 128-row tiles saturate it; 256 elsewhere."""
    try:
        kind = jax.devices()[0].device_kind.lower()
        if "v5 lite" in kind or "v5e" in kind or "v5litepod" in kind:
            return 128
    except Exception:
        pass
    return 256


_VMEM_LIMIT = _default_vmem_limit()
_ROW_TILE_TARGET = _default_row_tile_target()


def _row_tile(m):
    """Row tile: multiple of 16 (bf16-safe sublanes), prefer >=2 grid steps
    (v7x megacore) while staying under the per-generation target."""
    target = _ROW_TILE_TARGET
    if m >= 32:
        target = min(target, max(16, (m // 2) // 16 * 16))
    if m <= target:
        return m
    t = (target // 16) * 16
    while t >= 16:
        if m % t == 0:
            return t
        t -= 16
    return m


def _vocab_tile(v):
    if v <= 512:
        return v
    for tv in (512, 384, 256, 128):
        if v % tv == 0:
            return tv
    return v


# ----------------------------- in-kernel helpers -----------------------------
def _layernorm(x, g, b, eps):
    mean = jnp.mean(x, axis=-1, keepdims=True)
    var = jnp.mean(jnp.square(x - mean), axis=-1, keepdims=True)   # biased, as torch
    return (x - mean) * jax.lax.rsqrt(var + eps) * g + b


def _erf_approx(x):
    # Abramowitz & Stegun 7.1.26 (<= 1.5e-7 abs error); exp + reciprocal ride
    # the EUP slot, keeping the VALU free in the fused MLP kernel.
    a1, a2, a3, a4, a5 = (0.254829592, -0.284496736, 1.421413741,
                          -1.453152027, 1.061405429)
    p = 0.3275911
    ax = jnp.abs(x)
    t = pl.reciprocal(1.0 + p * ax, approx=True)
    poly = ((((a5 * t + a4) * t + a3) * t + a2) * t + a1) * t
    y = 1.0 - poly * jnp.exp(-ax * ax)
    return jnp.where(x < 0, -y, y)


def _gelu_exact(x):
    return 0.5 * x * (1.0 + _erf_approx(x * 0.7071067811865476))


# ------------------------------ Pallas kernels -------------------------------
def _embed_combine_kernel(l_ref, r_ref, w_ref, b_ref, o_ref):
    adapted = jnp.dot(r_ref[...].astype(jnp.bfloat16), w_ref[...],
                      preferred_element_type=jnp.float32) + b_ref[...]
    o_ref[...] = (l_ref[...] + adapted).astype(o_ref.dtype)


def embed_combine_pallas(emb_left, emb_right, w_bf16, b_row):
    """left + (right @ w + b), tiled over rows.  Weights pre-cast bf16."""
    M, H = emb_left.shape
    tm = _row_tile(M)
    return pl.pallas_call(
        _embed_combine_kernel,
        out_shape=jax.ShapeDtypeStruct((M, H), jnp.float32),
        grid=(M // tm,),
        in_specs=[
            pl.BlockSpec((tm, H), lambda i: (i, 0)),
            pl.BlockSpec((tm, H), lambda i: (i, 0)),
            # TODO(synk): mark resident weights pipeline_mode=pl.Buffered(1)
            # once validated on the target jax version (halves weight VMEM).
            pl.BlockSpec((H, H), lambda i: (0, 0)),
            pl.BlockSpec((1, H), lambda i: (0, 0)),
        ],
        out_specs=pl.BlockSpec((tm, H), lambda i: (i, 0)),
        compiler_params=pltpu.CompilerParams(
            dimension_semantics=("parallel",),
            vmem_limit_bytes=_VMEM_LIMIT),
        cost_estimate=pl.CostEstimate(
            flops=2 * M * H * H, transcendentals=0,
            bytes_accessed=8 * M * H + 2 * H * H + 4 * M * H),
    )(emb_left, emb_right, w_bf16, b_row)


def _ln_attn_kernel(x_ref, g_ref, b_ref, w_ref, bias_ref, cos_ref, sin_ref,
                    o_ref, *, n_heads, head_dim, rot, scale, eps):
    """Fused LN1 + QKV projection + rotary + causal softmax attention for one
    batch element.  qkv_w is de-interleaved: columns [Q heads | K heads | V]."""
    hidden = n_heads * head_dim
    x = x_ref[0].astype(jnp.float32)                     # (S, H)
    seq = x.shape[0]

    xn = _layernorm(x, g_ref[...], b_ref[...], eps)
    qkv = jnp.dot(xn.astype(jnp.bfloat16), w_ref[...],
                  preferred_element_type=jnp.float32) + bias_ref[...]   # (S, 3H)

    def stack_heads(base):
        return jnp.stack(
            [qkv[:, base + h * head_dim: base + (h + 1) * head_dim]
             for h in range(n_heads)], axis=0)           # (nH, S, D)

    q = stack_heads(0)
    k = stack_heads(hidden)
    v = stack_heads(2 * hidden)

    cos = cos_ref[...][None, :, :]                       # (1, S, D) padded cos=1
    sin = sin_ref[...][None, :, :]                       # (1, S, D) padded sin=0

    def rope(t):
        # TODO(synk): switch to pltpu.roll (+/-1 sign vector) for the rotation
        # once head_dim-aligned lanes make the XLU form worthwhile.
        if rot == 0:
            return t
        half = rot // 2
        parts = [-t[..., half:rot], t[..., :half]]
        if rot < head_dim:
            parts.append(jnp.zeros_like(t[..., rot:]))
        tr = jnp.concatenate(parts, axis=-1)
        return t * cos + tr * sin

    q = rope(q) * scale                                  # pre-scale q (SxD, not SxS)
    k = rope(k)

    row = jax.lax.broadcasted_iota(jnp.int32, (seq, seq), 0)
    col = jax.lax.broadcasted_iota(jnp.int32, (seq, seq), 1)
    causal = (col <= row)[None, :, :]

    # batched over heads: (nH, S, S)
    s = jax.lax.dot_general(q.astype(jnp.bfloat16), k.astype(jnp.bfloat16),
                            (((2,), (2,)), ((0,), (0,))),
                            preferred_element_type=jnp.float32)
    s = jnp.where(causal, s, -1e30)
    m = jnp.max(s, axis=-1, keepdims=True)
    p = jnp.exp(s - m)
    l = jnp.sum(p, axis=-1, keepdims=True)
    p = p * pl.reciprocal(l, approx=True)                # EUP, not a VPU divide
    o = jax.lax.dot_general(p.astype(jnp.bfloat16), v.astype(jnp.bfloat16),
                            (((2,), (1,)), ((0,), (0,))),
                            preferred_element_type=jnp.float32)   # (nH, S, D)

    # single lane-dense (S, H) bf16 store
    o_ref[0] = jnp.concatenate([o[h] for h in range(n_heads)],
                               axis=-1).astype(o_ref.dtype)


def ln_attention_pallas(x, p, cos_full, sin_full, n_heads, head_dim, rot, eps):
    """x:[B,S,H] f32 -> attention context [B,S,H] bf16 (LN1+QKV fused in)."""
    B, S, H = x.shape
    scale = 1.0 / math.sqrt(head_dim)
    # TODO(synk): for long sequences switch to flash-style KV tiling (online
    # softmax over an 'arbitrary' KV grid axis) instead of full SxS scores.
    flops = 2 * B * S * H * 3 * H + 4 * B * n_heads * S * S * head_dim
    byts = 4 * B * S * H + 2 * H * 3 * H + 2 * B * S * H
    return pl.pallas_call(
        functools.partial(_ln_attn_kernel, n_heads=n_heads, head_dim=head_dim,
                          rot=rot, scale=scale, eps=eps),
        out_shape=jax.ShapeDtypeStruct((B, S, H), jnp.bfloat16),
        grid=(B,),
        in_specs=[
            pl.BlockSpec((1, S, H), lambda b: (b, 0, 0)),
            pl.BlockSpec((1, H), lambda b: (0, 0)),
            pl.BlockSpec((1, H), lambda b: (0, 0)),
            pl.BlockSpec((H, 3 * H), lambda b: (0, 0)),
            pl.BlockSpec((1, 3 * H), lambda b: (0, 0)),
            pl.BlockSpec((S, head_dim), lambda b: (0, 0)),
            pl.BlockSpec((S, head_dim), lambda b: (0, 0)),
        ],
        out_specs=pl.BlockSpec((1, S, H), lambda b: (b, 0, 0)),
        compiler_params=pltpu.CompilerParams(
            dimension_semantics=("parallel",),
            vmem_limit_bytes=_VMEM_LIMIT),
        cost_estimate=pl.CostEstimate(
            flops=flops, transcendentals=B * n_heads * S * S,
            bytes_accessed=byts),
    )(x, p["ln1_g"], p["ln1_b"], p["qkv_w"], p["qkv_b"], cos_full, sin_full)


def _post_attn_mlp_kernel(x_ref, a_ref, dw_ref, db_ref, g_ref, b_ref,
                          w1_ref, b1_ref, w2_ref, b2_ref, o_ref, *, eps):
    x = x_ref[...]                                        # f32 residual
    # attention output projection (attn already bf16)
    attn_out = jnp.dot(a_ref[...], dw_ref[...],
                       preferred_element_type=jnp.float32) + db_ref[...]
    # LN2 -> MLP with in-kernel exact-erf GELU (no [M, 4H] HBM round trip)
    xn = _layernorm(x, g_ref[...], b_ref[...], eps)
    h = jnp.dot(xn.astype(jnp.bfloat16), w1_ref[...],
                preferred_element_type=jnp.float32) + b1_ref[...]
    h = _gelu_exact(h)
    mlp_out = jnp.dot(h.astype(jnp.bfloat16), w2_ref[...],
                      preferred_element_type=jnp.float32) + b2_ref[...]
    # parallel residual (GPTNeoX use_parallel_residual=True)
    o_ref[...] = (x + attn_out + mlp_out).astype(o_ref.dtype)


def post_attn_mlp_pallas(x, attn_bf16, p, eps):
    M, H = x.shape
    I = p["h4h_w"].shape[1]
    tm = _row_tile(M)
    flops = 2 * M * (H * H + 2 * H * I)
    byts = 4 * M * H + 2 * M * H + 2 * (H * H + 2 * H * I) + 4 * M * H
    return pl.pallas_call(
        functools.partial(_post_attn_mlp_kernel, eps=eps),
        out_shape=jax.ShapeDtypeStruct((M, H), jnp.float32),
        grid=(M // tm,),
        in_specs=[
            pl.BlockSpec((tm, H), lambda i: (i, 0)),    # x (residual, f32)
            pl.BlockSpec((tm, H), lambda i: (i, 0)),    # attention output (bf16)
            pl.BlockSpec((H, H), lambda i: (0, 0)),     # dense_w
            pl.BlockSpec((1, H), lambda i: (0, 0)),     # dense_b
            pl.BlockSpec((1, H), lambda i: (0, 0)),     # ln2 gamma
            pl.BlockSpec((1, H), lambda i: (0, 0)),     # ln2 beta
            pl.BlockSpec((H, I), lambda i: (0, 0)),     # h4h_w
            pl.BlockSpec((1, I), lambda i: (0, 0)),     # h4h_b
            pl.BlockSpec((I, H), lambda i: (0, 0)),     # fhh_w
            pl.BlockSpec((1, H), lambda i: (0, 0)),     # fhh_b
        ],
        out_specs=pl.BlockSpec((tm, H), lambda i: (i, 0)),
        compiler_params=pltpu.CompilerParams(
            dimension_semantics=("parallel",),
            vmem_limit_bytes=_VMEM_LIMIT),
        cost_estimate=pl.CostEstimate(flops=flops, transcendentals=M * I,
                                      bytes_accessed=byts),
    )(x, attn_bf16, p["dense_w"], p["dense_b"], p["ln2_g"], p["ln2_b"],
      p["h4h_w"], p["h4h_b"], p["fhh_w"], p["fhh_b"])


def _unembed_ce_kernel(x_ref, g_ref, b_ref, aw_ref, ab_ref, ew_ref,
                       lab_l_ref, lab_r_ref, msk_l_ref, msk_r_ref,
                       nll_l_ref, nll_r_ref,
                       h16_s, hr16_s,
                       max_l, sum_l, pick_l, max_r, sum_r, pick_r,
                       *, eps, tv):
    """Vocab-tiled CE head: final-LN + left/right unembed + masked CE with an
    online logsumexp per row tile.  Logits never touch HBM."""
    i = pl.program_id(0)
    j = pl.program_id(1)
    nv = pl.num_programs(1)

    @pl.when((i == 0) & (j == 0))
    def _():
        nll_l_ref[...] = jnp.zeros_like(nll_l_ref)
        nll_r_ref[...] = jnp.zeros_like(nll_r_ref)

    @pl.when(j == 0)
    def _():
        h = _layernorm(x_ref[...].astype(jnp.float32), g_ref[...], b_ref[...],
                       eps)
        h16 = h.astype(jnp.bfloat16)
        hr = jnp.dot(h16, aw_ref[...],
                     preferred_element_type=jnp.float32) + ab_ref[...]
        h16_s[...] = h16
        hr16_s[...] = hr.astype(jnp.bfloat16)
        max_l[...] = jnp.full_like(max_l, -1e30)
        max_r[...] = jnp.full_like(max_r, -1e30)
        sum_l[...] = jnp.zeros_like(sum_l)
        sum_r[...] = jnp.zeros_like(sum_r)
        pick_l[...] = jnp.zeros_like(pick_l)
        pick_r[...] = jnp.zeros_like(pick_r)

    ew = ew_ref[...]                                     # (H, tv) bf16
    tm = x_ref.shape[0]
    col = jax.lax.broadcasted_iota(jnp.int32, (tm, tv), 1) + j * tv

    def online_update(h16, labels, m_s, s_s, p_s):
        logits = jnp.dot(h16, ew, preferred_element_type=jnp.float32)  # (tm, tv)
        m_old = m_s[...]
        m_new = jnp.maximum(m_old, jnp.max(logits, axis=-1, keepdims=True))
        s_s[...] = (s_s[...] * jnp.exp(m_old - m_new)
                    + jnp.sum(jnp.exp(logits - m_new), axis=-1, keepdims=True))
        m_s[...] = m_new
        p_s[...] += jnp.sum(jnp.where(col == labels, logits, 0.0),
                            axis=-1, keepdims=True)

    online_update(h16_s[...], lab_l_ref[...], max_l, sum_l, pick_l)
    online_update(hr16_s[...], lab_r_ref[...], max_r, sum_r, pick_r)

    @pl.when(j == nv - 1)
    def _():
        nll_l = (max_l[...] + jnp.log(sum_l[...]) - pick_l[...]) * msk_l_ref[...]
        nll_r = (max_r[...] + jnp.log(sum_r[...]) - pick_r[...]) * msk_r_ref[...]
        nll_l_ref[...] += jnp.sum(nll_l, axis=0, keepdims=True)
        nll_r_ref[...] += jnp.sum(nll_r, axis=0, keepdims=True)


def unembed_ce_pallas(hidden, g, b, aw, ab, ew,
                      labels_l, labels_r, mask_l, mask_r, eps):
    """Fused final-LN + (left, right) unembed + masked CE; returns NLL sums."""
    M, H = hidden.shape
    V = ew.shape[1]
    tm = _row_tile(M)
    tv = _vocab_tile(V)
    flops = 2 * M * H * H + 4 * M * H * V
    byts = 4 * M * H + 2 * (H * H + H * V) + 16 * M
    sums_l, sums_r = pl.pallas_call(
        functools.partial(_unembed_ce_kernel, eps=eps, tv=tv),
        out_shape=(jax.ShapeDtypeStruct((1, 1), jnp.float32),
                   jax.ShapeDtypeStruct((1, 1), jnp.float32)),
        grid=(M // tm, V // tv),
        in_specs=[
            pl.BlockSpec((tm, H), lambda i, j: (i, 0)),    # hidden
            pl.BlockSpec((1, H), lambda i, j: (0, 0)),     # final_ln gamma
            pl.BlockSpec((1, H), lambda i, j: (0, 0)),     # final_ln beta
            pl.BlockSpec((H, H), lambda i, j: (0, 0)),     # unembed_adapter w
            pl.BlockSpec((1, H), lambda i, j: (0, 0)),     # unembed_adapter b
            pl.BlockSpec((H, tv), lambda i, j: (0, j)),    # embed_out chunk
            pl.BlockSpec((tm, 1), lambda i, j: (i, 0)),    # labels left
            pl.BlockSpec((tm, 1), lambda i, j: (i, 0)),    # labels right
            pl.BlockSpec((tm, 1), lambda i, j: (i, 0)),    # mask left
            pl.BlockSpec((tm, 1), lambda i, j: (i, 0)),    # mask right
        ],
        out_specs=(pl.BlockSpec((1, 1), lambda i, j: (0, 0)),
                   pl.BlockSpec((1, 1), lambda i, j: (0, 0))),
        scratch_shapes=[
            pltpu.VMEM((tm, H), jnp.bfloat16),   # h16
            pltpu.VMEM((tm, H), jnp.bfloat16),   # hr16
            pltpu.VMEM((tm, 1), jnp.float32),    # max_l
            pltpu.VMEM((tm, 1), jnp.float32),    # sum_l
            pltpu.VMEM((tm, 1), jnp.float32),    # pick_l
            pltpu.VMEM((tm, 1), jnp.float32),    # max_r
            pltpu.VMEM((tm, 1), jnp.float32),    # sum_r
            pltpu.VMEM((tm, 1), jnp.float32),    # pick_r
        ],
        compiler_params=pltpu.CompilerParams(
            dimension_semantics=("arbitrary", "arbitrary"),
            vmem_limit_bytes=_VMEM_LIMIT),
        cost_estimate=pl.CostEstimate(flops=flops, transcendentals=2 * M * V,
                                      bytes_accessed=byts),
    )(hidden, g, b, aw, ab, ew, labels_l, labels_r, mask_l, mask_r)
    return sums_l[0, 0], sums_r[0, 0]


# ------------------------------- JAX glue ------------------------------------
def make_rotary_full(seq_len, head_dim, rot, base):
    """cos/sin tables padded to full head_dim (cos=1, sin=0 on pass-through)."""
    if rot == 0:
        return (jnp.ones((seq_len, head_dim), jnp.float32),
                jnp.zeros((seq_len, head_dim), jnp.float32))
    inv_freq = 1.0 / (base ** (jnp.arange(0, rot, 2, dtype=jnp.float32) / rot))
    t = jnp.arange(seq_len, dtype=jnp.float32)
    freqs = jnp.outer(t, inv_freq)                       # (S, rot/2)
    emb = jnp.concatenate([freqs, freqs], axis=-1)       # (S, rot)
    cos, sin = jnp.cos(emb), jnp.sin(emb)
    if rot < head_dim:
        cos = jnp.concatenate(
            [cos, jnp.ones((seq_len, head_dim - rot), jnp.float32)], axis=-1)
        sin = jnp.concatenate(
            [sin, jnp.zeros((seq_len, head_dim - rot), jnp.float32)], axis=-1)
    return cos, sin


def make_shifted_targets(input_ids, row_mask):
    """Per-row next-token labels + masks aligned to the B*S hidden rows."""
    B, S = input_ids.shape
    labels = jnp.concatenate(
        [input_ids[:, 1:], jnp.zeros((B, 1), input_ids.dtype)], axis=1)
    pos_mask = (jnp.arange(S) < (S - 1)).astype(jnp.float32)[None, :]
    mask = row_mask.astype(jnp.float32)[:, None] * pos_mask
    return (labels.reshape(B * S, 1).astype(jnp.int32),
            mask.reshape(B * S, 1))


def gpt_neox_layer(x, p, cfg, cos_full, sin_full):
    B, S, H = x.shape
    nH = cfg.num_heads
    D = H // nH
    rot = int(D * cfg.rotary_pct)
    attn = ln_attention_pallas(x, p, cos_full, sin_full, nH, D, rot,
                               cfg.layer_norm_eps)             # (B,S,H) bf16
    out = post_attn_mlp_pallas(x.reshape(B * S, H), attn.reshape(B * S, H),
                               p, cfg.layer_norm_eps)
    return out.reshape(B, S, H)


def double_causal_lm_forward(params, input_ids_left, input_ids_right, cfg):
    B, S = input_ids_left.shape
    H = cfg.hidden_size
    eos = cfg.eos_token_id
    D = H // cfg.num_heads
    rot = int(D * cfg.rotary_pct)

    # skip_pad = True
    not_only_pad_left = jnp.any(input_ids_left != eos, axis=-1)    # (B,)
    not_only_pad_right = jnp.any(input_ids_right != eos, axis=-1)  # (B,)

    # TODO(synk): fuse the token-embedding gather via PrefetchScalarGridSpec +
    # pl.Element row-gather once shapes justify it; plain-JAX gather here.
    embeds_left = params["embed_in"][input_ids_left].reshape(B * S, H)
    embeds_right = params["embed_in"][input_ids_right].reshape(B * S, H)
    x = embed_combine_pallas(embeds_left, embeds_right,
                             params["embed_adapter_w"],
                             params["embed_adapter_b"]).reshape(B, S, H)

    cos_full, sin_full = make_rotary_full(S, D, rot, cfg.rotary_base)
    for lp in params["layers"]:
        x = gpt_neox_layer(x, lp, cfg, cos_full, sin_full)

    hidden = x.reshape(B * S, H)

    labels_l, mask_l = make_shifted_targets(input_ids_left, not_only_pad_left)
    labels_r, mask_r = make_shifted_targets(input_ids_right, not_only_pad_right)

    nll_sum_l, nll_sum_r = unembed_ce_pallas(
        hidden, params["final_ln_g"], params["final_ln_b"],
        params["unembed_adapter_w"], params["unembed_adapter_b"],
        params["embed_out_w"], labels_l, labels_r, mask_l, mask_r,
        cfg.layer_norm_eps)

    def finalize(nll_sum, row_mask):
        # CrossEntropyLoss(mean over selected rows' shifted tokens) * mean(sel)
        n_rows = jnp.sum(row_mask.astype(jnp.float32))
        count = n_rows * (S - 1)
        mean = nll_sum / jnp.maximum(count, 1.0)
        return jnp.where(n_rows > 0, mean * (n_rows / B), jnp.float32(0.0))

    loss_left = finalize(nll_sum_l, not_only_pad_left)
    loss_right = finalize(nll_sum_r, not_only_pad_right)
    return loss_left, loss_right


# --------------------------- parameter construction --------------------------
def init_params(key, cfg):
    """Raw f32 params in (transposed) torch-equivalent layout: weights [in,out],
    QKV columns packed per-head [q_h|k_h|v_h] like HF GPTNeoX."""
    H, V, I = cfg.hidden_size, cfg.vocab_size, cfg.intermediate_size

    def nrm(k, shape, scale=0.02):
        return scale * jax.random.normal(k, shape, dtype=jnp.float32)

    keys = jax.random.split(key, 2 + cfg.num_layers)
    params = {
        "embed_in": nrm(keys[0], (V, H)),
        "embed_out_w": nrm(keys[1], (H, V)),               # bias-free, as GPTNeoX
        "final_ln_g": jnp.ones((H,), jnp.float32),
        "final_ln_b": jnp.zeros((H,), jnp.float32),
        # adapters: identity init, as get_identity_init_linear
        "embed_adapter_w": jnp.eye(H, dtype=jnp.float32),
        "embed_adapter_b": jnp.zeros((H,), jnp.float32),
        "unembed_adapter_w": jnp.eye(H, dtype=jnp.float32),
        "unembed_adapter_b": jnp.zeros((H,), jnp.float32),
        "layers": [],
    }
    for layer in range(cfg.num_layers):
        lk = jax.random.split(keys[2 + layer], 4)
        params["layers"].append({
            "ln1_g": jnp.ones((H,), jnp.float32),
            "ln1_b": jnp.zeros((H,), jnp.float32),
            "ln2_g": jnp.ones((H,), jnp.float32),
            "ln2_b": jnp.zeros((H,), jnp.float32),
            "qkv_w": nrm(lk[0], (H, 3 * H)),
            "qkv_b": jnp.zeros((3 * H,), jnp.float32),
            "dense_w": nrm(lk[1], (H, H)),
            "dense_b": jnp.zeros((H,), jnp.float32),
            "h4h_w": nrm(lk[2], (H, I)),
            "h4h_b": jnp.zeros((I,), jnp.float32),
            "fhh_w": nrm(lk[3], (I, H)),
            "fhh_b": jnp.zeros((H,), jnp.float32),
        })
    return params


def prepare_params(params, cfg):
    """One-time kernel-side prep: bf16 pre-cast of all matmul weights,
    (1, N) bias/LN reshapes, and QKV column de-interleaving."""
    H, I = cfg.hidden_size, cfg.intermediate_size
    nH = cfg.num_heads
    D = H // nH

    def bf16(w):
        return w.astype(jnp.bfloat16)

    def deinterleave_qkv_w(w):
        # HF GPTNeoX packs output columns per head as [q_h | k_h | v_h];
        # regroup to [all-Q | all-K | all-V] (head-major) so the attention
        # kernel slices contiguous lane blocks per head.
        return w.reshape(H, nH, 3, D).transpose(0, 2, 1, 3).reshape(H, 3 * H)

    def deinterleave_qkv_b(bias):
        return bias.reshape(nH, 3, D).transpose(1, 0, 2).reshape(3 * H)

    fp = {
        "embed_in": params["embed_in"],
        "embed_adapter_w": bf16(params["embed_adapter_w"]),
        "embed_adapter_b": params["embed_adapter_b"].reshape(1, H),
        "unembed_adapter_w": bf16(params["unembed_adapter_w"]),
        "unembed_adapter_b": params["unembed_adapter_b"].reshape(1, H),
        "embed_out_w": bf16(params["embed_out_w"]),
        "final_ln_g": params["final_ln_g"].reshape(1, H),
        "final_ln_b": params["final_ln_b"].reshape(1, H),
        "layers": [],
    }
    for lp in params["layers"]:
        fp["layers"].append({
            "ln1_g": lp["ln1_g"].reshape(1, H),
            "ln1_b": lp["ln1_b"].reshape(1, H),
            "ln2_g": lp["ln2_g"].reshape(1, H),
            "ln2_b": lp["ln2_b"].reshape(1, H),
            "qkv_w": bf16(deinterleave_qkv_w(lp["qkv_w"])),
            "qkv_b": deinterleave_qkv_b(lp["qkv_b"]).reshape(1, 3 * H),
            "dense_w": bf16(lp["dense_w"]),
            "dense_b": lp["dense_b"].reshape(1, H),
            "h4h_w": bf16(lp["h4h_w"]),
            "h4h_b": lp["h4h_b"].reshape(1, I),
            "fhh_w": bf16(lp["fhh_w"]),
            "fhh_b": lp["fhh_b"].reshape(1, H),
        })
    return fp


# ----------------------------------- main ------------------------------------
if __name__ == "__main__":
    cfg = Config()
    key = jax.random.PRNGKey(0)
    kp, kl, kr = jax.random.split(key, 3)

    raw_params = init_params(kp, cfg)
    params = prepare_params(raw_params, cfg)      # one-time bf16 cast / prep

    B, S = 2, 16
    input_ids_left = jax.random.randint(kl, (B, S), 1, cfg.vocab_size,
                                        dtype=jnp.int32)
    input_ids_right = jax.random.randint(kr, (B, S), 1, cfg.vocab_size,
                                         dtype=jnp.int32)
    # make one "right" row all padding (eos) to exercise row masking / scaling
    input_ids_right = input_ids_right.at[1].set(cfg.eos_token_id)

    fwd = jax.jit(lambda p, a, b: double_causal_lm_forward(p, a, b, cfg))
    loss_left, loss_right = fwd(params, input_ids_left, input_ids_right)
    jax.block_until_ready((loss_left, loss_right))

    assert bool(jnp.isfinite(loss_left)) and bool(jnp.isfinite(loss_right))
    print("KERNEL_OK")
</pallas_src>

<mosaic_0001>
module attributes {stable_mosaic.version = 11 : i64} {
  func.func @_embed_combine_kernel(%arg0: i32, %arg1: memref<16x64xf32, #tpu.memory_space<vmem>>, %arg2: memref<16x64xf32, #tpu.memory_space<vmem>>, %arg3: memref<64x64xbf16, #tpu.memory_space<vmem>>, %arg4: memref<1x64xf32, #tpu.memory_space<vmem>>, %arg5: memref<16x64xf32, #tpu.memory_space<vmem>>) attributes {dimension_semantics = [#tpu.dimension_semantics<parallel>], iteration_bounds = array<i64: 2>, scalar_prefetch = 0 : i64, scratch_operands = 0 : i64, tpu.core_type = #tpu.core_type<tc>, window_params = [{transform_indices = @transform_0, window_bounds = array<i64: 16, 64>}, {transform_indices = @transform_1, window_bounds = array<i64: 16, 64>}, {pipeline_mode = #tpu.pipeline_mode<synchronous>, transform_indices = @transform_2, window_bounds = array<i64: 64, 64>}, {pipeline_mode = #tpu.pipeline_mode<synchronous>, transform_indices = @transform_3, window_bounds = array<i64: 1, 64>}, {transform_indices = @transform_4, window_bounds = array<i64: 16, 64>}]} {
    %c0 = arith.constant 0 : index
    %c0_0 = arith.constant 0 : index
    %0 = vector.load %arg2[%c0, %c0_0] : memref<16x64xf32, #tpu.memory_space<vmem>>, vector<16x64xf32>
    %1 = arith.truncf %0 : vector<16x64xf32> to vector<16x64xbf16>
    %c0_1 = arith.constant 0 : index
    %c0_2 = arith.constant 0 : index
    %2 = vector.load %arg3[%c0_1, %c0_2] : memref<64x64xbf16, #tpu.memory_space<vmem>>, vector<64x64xbf16>
    %cst = arith.constant dense<0.000000e+00> : vector<16x64xf32>
    %3 = tpu.matmul %1, %2, %cst {dimension_numbers = #tpu.dot_dimension_numbers<[1], [0], [0], [1], [0, 0, 1, 1], [], []>} : vector<16x64xbf16>, vector<64x64xbf16>, vector<16x64xf32> -> vector<16x64xf32>
    %c0_3 = arith.constant 0 : index
    %c0_4 = arith.constant 0 : index
    %4 = vector.load %arg4[%c0_3, %c0_4] : memref<1x64xf32, #tpu.memory_space<vmem>>, vector<1x64xf32>
    %5 = vector.broadcast %4 : vector<1x64xf32> to vector<16x64xf32>
    %6 = arith.addf %3, %5 : vector<16x64xf32>
    %c0_5 = arith.constant 0 : index
    %c0_6 = arith.constant 0 : index
    %7 = vector.load %arg1[%c0_5, %c0_6] : memref<16x64xf32, #tpu.memory_space<vmem>>, vector<16x64xf32>
    %8 = arith.addf %7, %6 : vector<16x64xf32>
    %c0_7 = arith.constant 0 : index
    %c0_8 = arith.constant 0 : index
    %9 = vector.load %arg5[%c0_7, %c0_8] : memref<16x64xf32, #tpu.memory_space<vmem>>, vector<16x64xf32>
    tpu.vector_store %arg5[%c0_7, %c0_8], %8 {strides = array<i32>} : memref<16x64xf32, #tpu.memory_space<vmem>>, vector<16x64xf32>,
    return
  }
  func.func @transform_0(%arg0: i32) -> (i32, i32) {
    %c0_i32 = arith.constant 0 : i32
    %c0_i32_0 = arith.constant 0 : i32
    return %arg0, %c0_i32 : i32, i32
  }
  func.func @transform_1(%arg0: i32) -> (i32, i32) {
    %c0_i32 = arith.constant 0 : i32
    %c0_i32_0 = arith.constant 0 : i32
    return %arg0, %c0_i32 : i32, i32
  }
  func.func @transform_2(%arg0: i32) -> (i32, i32) {
    %c0_i32 = arith.constant 0 : i32
    %c0_i32_0 = arith.constant 0 : i32
    %c0_i32_1 = arith.constant 0 : i32
    return %c0_i32, %c0_i32_0 : i32, i32
  }
  func.func @transform_3(%arg0: i32) -> (i32, i32) {
    %c0_i32 = arith.constant 0 : i32
    %c0_i32_0 = arith.constant 0 : i32
    %c0_i32_1 = arith.constant 0 : i32
    return %c0_i32, %c0_i32_0 : i32, i32
  }
  func.func @transform_4(%arg0: i32) -> (i32, i32) {
    %c0_i32 = arith.constant 0 : i32
    %c0_i32_0 = arith.constant 0 : i32
    return %arg0, %c0_i32 : i32, i32
  }
}

module attributes {stable_mosaic.version = 11 : i64} {
  func.func @_ln_attn_kernel(%arg0: i32, %arg1: memref<1x16x64xf32, #tpu.memory_space<vmem>>, %arg2: memref<1x64xf32, #tpu.memory_space<vmem>>, %arg3: memref<1x64xf32, #tpu.memory_space<vmem>>, %arg4: memref<64x192xbf16, #tpu.memory_space<vmem>>, %arg5: memref<1x192xf32, #tpu.memory_space<vmem>>, %arg6: memref<16x16xf32, #tpu.memory_space<vmem>>, %arg7: memref<16x16xf32, #tpu.memory_space<vmem>>, %arg8: memref<1x16x64xbf16, #tpu.memory_space<vmem>>) attributes {dimension_semantics = [#tpu.dimension_semantics<parallel>], iteration_bounds = array<i64: 2>, scalar_prefetch = 0 : i64, scratch_operands = 0 : i64, tpu.core_type = #tpu.core_type<tc>, window_params = [{transform_indices = @transform_0, window_bounds = array<i64: 1, 16, 64>}, {pipeline_mode = #tpu.pipeline_mode<synchronous>, transform_indices = @transform_1, window_bounds = array<i64: 1, 64>}, {pipeline_mode = #tpu.pipeline_mode<synchronous>, transform_indices = @transform_2, window_bounds = array<i64: 1, 64>}, {pipeline_mode = #tpu.pipeline_mode<synchronous>, transform_indices = @transform_3, window_bounds = array<i64: 64, 192>}, {pipeline_mode = #tpu.pipeline_mode<synchronous>, transform_indices = @transform_4, window_bounds = array<i64: 1, 192>}, {pipeline_mode = #tpu.pipeline_mode<synchronous>, transform_indices = @transform_5, window_bounds = array<i64: 16, 16>}, {pipeline_mode = #tpu.pipeline_mode<synchronous>, transform_indices = @transform_6, window_bounds = array<i64: 16, 16>}, {transform_indices = @transform_7, window_bounds = array<i64: 1, 16, 64>}]} {
    %c0 = arith.constant 0 : index
    %c0_0 = arith.constant 0 : index
    %c0_1 = arith.constant 0 : index
    %0 = vector.load %arg1[%c0, %c0_0, %c0_1] : memref<1x16x64xf32, #tpu.memory_space<vmem>>, vector<1x16x64xf32>
    %1 = vector.shape_cast %0 : vector<1x16x64xf32> to vector<16x64xf32>
    %c0_2 = arith.constant 0 : index
    %c0_3 = arith.constant 0 : index
    %2 = vector.load %arg2[%c0_2, %c0_3] : memref<1x64xf32, #tpu.memory_space<vmem>>, vector<1x64xf32>
    %c0_4 = arith.constant 0 : index
    %c0_5 = arith.constant 0 : index
    %3 = vector.load %arg3[%c0_4, %c0_5] : memref<1x64xf32, #tpu.memory_space<vmem>>, vector<1x64xf32>
    %cst = arith.constant dense<0.000000e+00> : vector<16xf32>
    %4 = vector.multi_reduction <add>, %1, %cst [1] : vector<16x64xf32> to vector<16xf32>
    %5 = vector.shape_cast %4 : vector<16xf32> to vector<16x1xf32>
    %cst_6 = arith.constant 6.400000e+01 : f32
    %6 = vector.broadcast %cst_6 : f32 to vector<16x1xf32>
    %7 = arith.divf %5, %6 : vector<16x1xf32>
    %8 = vector.broadcast %7 : vector<16x1xf32> to vector<16x64xf32>
    %9 = arith.subf %1, %8 : vector<16x64xf32>
    %10 = arith.mulf %9, %9 : vector<16x64xf32>
    %cst_7 = arith.constant dense<0.000000e+00> : vector<16xf32>
    %11 = vector.multi_reduction <add>, %10, %cst_7 [1] : vector<16x64xf32> to vector<16xf32>
    %12 = vector.shape_cast %11 : vector<16xf32> to vector<16x1xf32>
    %cst_8 = arith.constant 6.400000e+01 : f32
    %13 = vector.broadcast %cst_8 : f32 to vector<16x1xf32>
    %14 = arith.divf %12, %13 : vector<16x1xf32>
    %15 = vector.broadcast %7 : vector<16x1xf32> to vector<16x64xf32>
    %16 = arith.subf %1, %15 : vector<16x64xf32>
    %cst_9 = arith.constant 9.99999974E-6 : f32
    %17 = vector.broadcast %cst_9 : f32 to vector<16x1xf32>
    %18 = arith.addf %14, %17 : vector<16x1xf32>
    %19 = math.rsqrt %18 : vector<16x1xf32>
    %20 = vector.broadcast %19 : vector<16x1xf32> to vector<16x64xf32>
    %21 = arith.mulf %16, %20 : vector<16x64xf32>
    %22 = vector.broadcast %2 : vector<1x64xf32> to vector<16x64xf32>
    %23 = arith.mulf %21, %22 : vector<16x64xf32>
    %24 = vector.broadcast %3 : vector<1x64xf32> to vector<16x64xf32>
    %25 = arith.addf %23, %24 : vector<16x64xf32>
    %26 = arith.truncf %25 : vector<16x64xf32> to vector<16x64xbf16>
    %c0_10 = arith.constant 0 : index
    %c0_11 = arith.constant 0 : index
    %27 = vector.load %arg4[%c0_10, %c0_11] : memref<64x192xbf16, #tpu.memory_space<vmem>>, vector<64x192xbf16>
    %cst_12 = arith.constant dense<0.000000e+00> : vector<16x192xf32>
    %28 = tpu.matmul %26, %27, %cst_12 {dimension_numbers = #tpu.dot_dimension_numbers<[1], [0], [0], [1], [0, 0, 1, 1], [], []>} : vector<16x64xbf16>, vector<64x192xbf16>, vector<16x192xf32> -> vector<16x192xf32>
    %c0_13 = arith.constant 0 : index
    %c0_14 = arith.constant 0 : index
    %29 = vector.load %arg5[%c0_13, %c0_14] : memref<1x192xf32, #tpu.memory_space<vmem>>, vector<1x192xf32>
    %30 = vector.broadcast %29 : vector<1x192xf32> to vector<16x192xf32>
    %31 = arith.addf %28, %30 : vector<16x192xf32>
    %32 = vector.extract_strided_slice %31 {offsets = [0, 0], sizes = [16, 16], strides = [1, 1]} : vector<16x192xf32> to vector<16x16xf32>
    %33 = vector.extract_strided_slice %31 {offsets = [0, 16], sizes = [16, 16], strides = [1, 1]} : vector<16x192xf32> to vector<16x16xf32>
    %34 = vector.extract_strided_slice %31 {offsets = [0, 32], sizes = [16, 16], strides = [1, 1]} : vector<16x192xf32> to vector<16x16xf32>
    %35 = vector.extract_strided_slice %31 {offsets = [0, 48], sizes = [16, 16], strides = [1, 1]} : vector<16x192xf32> to vector<16x16xf32>
    %36 = vector.shape_cast %32 : vector<16x16xf32> to vector<1x16x16xf32>
    %37 = vector.shape_cast %33 : vector<16x16xf32> to vector<1x16x16xf32>
    %38 = vector.shape_cast %34 : vector<16x16xf32> to vector<1x16x16xf32>
    %39 = vector.shape_cast %35 : vector<16x16xf32> to vector<1x16x16xf32>
    %40 = tpu.concatenate %36, %37, %38, %39 in 0 : vector<1x16x16xf32>, vector<1x16x16xf32>, vector<1x16x16xf32>, vector<1x16x16xf32> -> vector<4x16x16xf32>
    %41 = vector.extract_strided_slice %31 {offsets = [0, 64], sizes = [16, 16], strides = [1, 1]} : vector<16x192xf32> to vector<16x16xf32>
    %42 = vector.extract_strided_slice %31 {offsets = [0, 80], sizes = [16, 16], strides = [1, 1]} : vector<16x192xf32> to vector<16x16xf32>
    %43 = vector.extract_strided_slice %31 {offsets = [0, 96], sizes = [16, 16], strides = [1, 1]} : vector<16x192xf32> to vector<16x16xf32>
    %44 = vector.extract_strided_slice %31 {offsets = [0, 112], sizes = [16, 16], strides = [1, 1]} : vector<16x192xf32> to vector<16x16xf32>
    %45 = vector.shape_cast %41 : vector<16x16xf32> to vector<1x16x16xf32>
    %46 = vector.shape_cast %42 : vector<16x16xf32> to vector<1x16x16xf32>
    %47 = vector.shape_cast %43 : vector<16x16xf32> to vector<1x16x16xf32>
    %48 = vector.shape_cast %44 : vector<16x16xf32> to vector<1x16x16xf32>
    %49 = tpu.concatenate %45, %46, %47, %48 in 0 : vector<1x16x16xf32>, vector<1x16x16xf32>, vector<1x16x16xf32>, vector<1x16x16xf32> -> vector<4x16x16xf32>
    %50 = vector.extract_strided_slice %31 {offsets = [0, 128], sizes = [16, 16], strides = [1, 1]} : vector<16x192xf32> to vector<16x16xf32>
    %51 = vector.extract_strided_slice %31 {offsets = [0, 144], sizes = [16, 16], strides = [1, 1]} : vector<16x192xf32> to vector<16x16xf32>
    %52 = vector.extract_strided_slice %31 {offsets = [0, 160], sizes = [16, 16], strides = [1, 1]} : vector<16x192xf32> to vector<16x16xf32>
    %53 = vector.extract_strided_slice %31 {offsets = [0, 176], sizes = [16, 16], strides = [1, 1]} : vector<16x192xf32> to vector<16x16xf32>
    %54 = vector.shape_cast %50 : vector<16x16xf32> to vector<1x16x16xf32>
    %55 = vector.shape_cast %51 : vector<16x16xf32> to vector<1x16x16xf32>
    %56 = vector.shape_cast %52 : vector<16x16xf32> to vector<1x16x16xf32>
    %57 = vector.shape_cast %53 : vector<16x16xf32> to vector<1x16x16xf32>
    %58 = tpu.concatenate %54, %55, %56, %57 in 0 : vector<1x16x16xf32>, vector<1x16x16xf32>, vector<1x16x16xf32>, vector<1x16x16xf32> -> vector<4x16x16xf32>
    %c0_15 = arith.constant 0 : index
    %c0_16 = arith.constant 0 : index
    %59 = vector.load %arg6[%c0_15, %c0_16] : memref<16x16xf32, #tpu.memory_space<vmem>>, vector<16x16xf32>
    %60 = vector.shape_cast %59 : vector<16x16xf32> to vector<1x16x16xf32>
    %c0_17 = arith.constant 0 : index
    %c0_18 = arith.constant 0 : index
    %61 = vector.load %arg7[%c0_17, %c0_18] : memref<16x16xf32, #tpu.memory_space<vmem>>, vector<16x16xf32>
    %62 = vector.shape_cast %61 : vector<16x16xf32> to vector<1x16x16xf32>
    %63 = vector.extract_strided_slice %40 {offsets = [0, 0, 2], sizes = [4, 16, 2], strides = [1, 1, 1]} : vector<4x16x16xf32> to vector<4x16x2xf32>
    %cst_19 = arith.constant 0.000000e+00 : f32
    %64 = vector.broadcast %cst_19 : f32 to vector<4x16x2xf32>
    %65 = arith.subf %64, %63 : vector<4x16x2xf32>
    %66 = vector.extract_strided_slice %40 {offsets = [0, 0, 0], sizes = [4, 16, 2], strides = [1, 1, 1]} : vector<4x16x16xf32> to vector<4x16x2xf32>
    %cst_20 = arith.constant 0.000000e+00 : f32
    %67 = vector.broadcast %cst_20 : f32 to vector<4x16x12xf32>
    %68 = tpu.concatenate %65, %66, %67 in 2 : vector<4x16x2xf32>, vector<4x16x2xf32>, vector<4x16x12xf32> -> vector<4x16x16xf32>
    %69 = vector.broadcast %60 : vector<1x16x16xf32> to vector<4x16x16xf32>
    %70 = arith.mulf %40, %69 : vector<4x16x16xf32>
    %71 = vector.broadcast %62 : vector<1x16x16xf32> to vector<4x16x16xf32>
    %72 = arith.mulf %68, %71 : vector<4x16x16xf32>
    %73 = arith.addf %70, %72 : vector<4x16x16xf32>
    %cst_21 = arith.constant 2.500000e-01 : f32
    %74 = vector.broadcast %cst_21 : f32 to vector<4x16x16xf32>
    %75 = arith.mulf %73, %74 : vector<4x16x16xf32>
    %76 = vector.extract_strided_slice %49 {offsets = [0, 0, 2], sizes = [4, 16, 2], strides = [1, 1, 1]} : vector<4x16x16xf32> to vector<4x16x2xf32>
    %cst_22 = arith.constant 0.000000e+00 : f32
    %77 = vector.broadcast %cst_22 : f32 to vector<4x16x2xf32>
    %78 = arith.subf %77, %76 : vector<4x16x2xf32>
    %79 = vector.extract_strided_slice %49 {offsets = [0, 0, 0], sizes = [4, 16, 2], strides = [1, 1, 1]} : vector<4x16x16xf32> to vector<4x16x2xf32>
    %cst_23 = arith.constant 0.000000e+00 : f32
    %80 = vector.broadcast %cst_23 : f32 to vector<4x16x12xf32>
    %81 = tpu.concatenate %78, %79, %80 in 2 : vector<4x16x2xf32>, vector<4x16x2xf32>, vector<4x16x12xf32> -> vector<4x16x16xf32>
    %82 = vector.broadcast %60 : vector<1x16x16xf32> to vector<4x16x16xf32>
    %83 = arith.mulf %49, %82 : vector<4x16x16xf32>
    %84 = vector.broadcast %62 : vector<1x16x16xf32> to vector<4x16x16xf32>
    %85 = arith.mulf %81, %84 : vector<4x16x16xf32>
    %86 = arith.addf %83, %85 : vector<4x16x16xf32>
    %87 = tpu.iota {dimensions = array<i32: 0>} : vector<16x16xi32>
    %88 = tpu.iota {dimensions = array<i32: 1>} : vector<16x16xi32>
    %89 = arith.cmpi sle, %88, %87 : vector<16x16xi32>
    %90 = vector.shape_cast %89 : vector<16x16xi1> to vector<1x16x16xi1>
    %91 = arith.truncf %75 : vector<4x16x16xf32> to vector<4x16x16xbf16>
    %92 = arith.truncf %86 : vector<4x16x16xf32> to vector<4x16x16xbf16>
    %cst_24 = arith.constant dense<0.000000e+00> : vector<4x16x16xf32>
    %93 = tpu.matmul %91, %92, %cst_24 {dimension_numbers = #tpu.dot_dimension_numbers<[2], [2], [1], [1], [0, 0, 0, 1, 1, 1], [0], [0]>} : vector<4x16x16xbf16>, vector<4x16x16xbf16>, vector<4x16x16xf32> -> vector<4x16x16xf32>
    %cst_25 = arith.constant -1.000000e+30 : f32
    %94 = vector.shape_cast %90 : vector<1x16x16xi1> to vector<1x16x16xi1>
    %95 = vector.broadcast %94 : vector<1x16x16xi1> to vector<4x16x16xi1>
    %96 = vector.broadcast %cst_25 : f32 to vector<4x16x16xf32>
    %97 = arith.select %95, %93, %96 : vector<4x16x16xi1>, vector<4x16x16xf32>
    %cst_26 = arith.constant dense<0xFF800000> : vector<4x16xf32>
    %98 = vector.multi_reduction <maximumf>, %97, %cst_26 [2] : vector<4x16x16xf32> to vector<4x16xf32>
    %99 = vector.shape_cast %98 : vector<4x16xf32> to vector<4x16x1xf32>
    %100 = vector.broadcast %99 : vector<4x16x1xf32> to vector<4x16x16xf32>
    %101 = arith.subf %97, %100 : vector<4x16x16xf32>
    %102 = math.exp %101 : vector<4x16x16xf32>
    %cst_27 = arith.constant dense<0.000000e+00> : vector<4x16xf32>
    %103 = vector.multi_reduction <add>, %102, %cst_27 [2] : vector<4x16x16xf32> to vector<4x16xf32>
    %104 = vector.shape_cast %103 : vector<4x16xf32> to vector<4x16x1xf32>
    %105 = tpu.reciprocal %104 {approx = true} : vector<4x16x1xf32> -> vector<4x16x1xf32>
    %106 = vector.broadcast %105 : vector<4x16x1xf32> to vector<4x16x16xf32>
    %107 = arith.mulf %102, %106 : vector<4x16x16xf32>
    %108 = arith.truncf %107 : vector<4x16x16xf32> to vector<4x16x16xbf16>
    %109 = arith.truncf %58 : vector<4x16x16xf32> to vector<4x16x16xbf16>
    %cst_28 = arith.constant dense<0.000000e+00> : vector<4x16x16xf32>
    %110 = tpu.matmul %108, %109, %cst_28 {dimension_numbers = #tpu.dot_dimension_numbers<[2], [1], [1], [2], [0, 0, 0, 1, 1, 2], [0], [0]>} : vector<4x16x16xbf16>, vector<4x16x16xbf16>, vector<4x16x16xf32> -> vector<4x16x16xf32>
    %111 = vector.extract_strided_slice %110 {offsets = [0, 0, 0], sizes = [1, 16, 16], strides = [1, 1, 1]} : vector<4x16x16xf32> to vector<1x16x16xf32>
    %112 = vector.shape_cast %111 : vector<1x16x16xf32> to vector<16x16xf32>
    %113 = vector.extract_strided_slice %110 {offsets = [1, 0, 0], sizes = [1, 16, 16], strides = [1, 1, 1]} : vector<4x16x16xf32> to vector<1x16x16xf32>
    %114 = vector.shape_cast %113 : vector<1x16x16xf32> to vector<16x16xf32>
    %115 = vector.extract_strided_slice %110 {offsets = [2, 0, 0], sizes = [1, 16, 16], strides = [1, 1, 1]} : vector<4x16x16xf32> to vector<1x16x16xf32>
    %116 = vector.shape_cast %115 : vector<1x16x16xf32> to vector<16x16xf32>
    %117 = vector.extract_strided_slice %110 {offsets = [3, 0, 0], sizes = [1, 16, 16], strides = [1, 1, 1]} : vector<4x16x16xf32> to vector<1x16x16xf32>
    %118 = vector.shape_cast %117 : vector<1x16x16xf32> to vector<16x16xf32>
    %119 = tpu.concatenate %112, %114, %116, %118 in 1 : vector<16x16xf32>, vector<16x16xf32>, vector<16x16xf32>, vector<16x16xf32> -> vector<16x64xf32>
    %120 = arith.truncf %119 : vector<16x64xf32> to vector<16x64xbf16>
    %c0_29 = arith.constant 0 : index
    %c0_30 = arith.constant 0 : index
    %c0_31 = arith.constant 0 : index
    %121 = vector.load %arg8[%c0_29, %c0_30, %c0_31] : memref<1x16x64xbf16, #tpu.memory_space<vmem>>, vector<1x16x64xbf16>
    %122 = vector.shape_cast %121 : vector<1x16x64xbf16> to vector<16x64xbf16>
    %123 = vector.shape_cast %120 : vector<16x64xbf16> to vector<1x16x64xbf16>
    tpu.vector_store %arg8[%c0_29, %c0_30, %c0_31], %123 {strides = array<i32>} : memref<1x16x64xbf16, #tpu.memory_space<vmem>>, vector<1x16x64xbf16>,
    return
  }
  func.func @transform_0(%arg0: i32) -> (i32, i32, i32) {
    %c0_i32 = arith.constant 0 : i32
    %c0_i32_0 = arith.constant 0 : i32
    %c0_i32_1 = arith.constant 0 : i32
    return %arg0, %c0_i32, %c0_i32_0 : i32, i32, i32
  }
  func.func @transform_1(%arg0: i32) -> (i32, i32) {
    %c0_i32 = arith.constant 0 : i32
    %c0_i32_0 = arith.constant 0 : i32
    %c0_i32_1 = arith.constant 0 : i32
    return %c0_i32, %c0_i32_0 : i32, i32
  }
  func.func @transform_2(%arg0: i32) -> (i32, i32) {
    %c0_i32 = arith.constant 0 : i32
    %c0_i32_0 = arith.constant 0 : i32
    %c0_i32_1 = arith.constant 0 : i32
    return %c0_i32, %c0_i32_0 : i32, i32
  }
  func.func @transform_3(%arg0: i32) -> (i32, i32) {
    %c0_i32 = arith.constant 0 : i32
    %c0_i32_0 = arith.constant 0 : i32
    %c0_i32_1 = arith.constant 0 : i32
    return %c0_i32, %c0_i32_0 : i32, i32
  }
  func.func @transform_4(%arg0: i32) -> (i32, i32) {
    %c0_i32 = arith.constant 0 : i32
    %c0_i32_0 = arith.constant 0 : i32
    %c0_i32_1 = arith.constant 0 : i32
    return %c0_i32, %c0_i32_0 : i32, i32
  }
  func.func @transform_5(%arg0: i32) -> (i32, i32) {
    %c0_i32 = arith.constant 0 : i32
    %c0_i32_0 = arith.constant 0 : i32
    %c0_i32_1 = arith.constant 0 : i32
    return %c0_i32, %c0_i32_0 : i32, i32
  }
  func.func @transform_6(%arg0: i32) -> (i32, i32) {
    %c0_i32 = arith.constant 0 : i32
    %c0_i32_0 = arith.constant 0 : i32
    %c0_i32_1 = arith.constant 0 : i32
    return %c0_i32, %c0_i32_0 : i32, i32
  }
  func.func @transform_7(%arg0: i32) -> (i32, i32, i32) {
    %c0_i32 = arith.constant 0 : i32
    %c0_i32_0 = arith.constant 0 : i32
    %c0_i32_1 = arith.constant 0 : i32
    return %arg0, %c0_i32, %c0_i32_0 : i32, i32, i32
  }
}

module attributes {stable_mosaic.version = 11 : i64} {
  func.func @_post_attn_mlp_kernel(%arg0: i32, %arg1: memref<16x64xf32, #tpu.memory_space<vmem>>, %arg2: memref<16x64xbf16, #tpu.memory_space<vmem>>, %arg3: memref<64x64xbf16, #tpu.memory_space<vmem>>, %arg4: memref<1x64xf32, #tpu.memory_space<vmem>>, %arg5: memref<1x64xf32, #tpu.memory_space<vmem>>, %arg6: memref<1x64xf32, #tpu.memory_space<vmem>>, %arg7: memref<64x256xbf16, #tpu.memory_space<vmem>>, %arg8: memref<1x256xf32, #tpu.memory_space<vmem>>, %arg9: memref<256x64xbf16, #tpu.memory_space<vmem>>, %arg10: memref<1x64xf32, #tpu.memory_space<vmem>>, %arg11: memref<16x64xf32, #tpu.memory_space<vmem>>) attributes {dimension_semantics = [#tpu.dimension_semantics<parallel>], iteration_bounds = array<i64: 2>, scalar_prefetch = 0 : i64, scratch_operands = 0 : i64, tpu.core_type = #tpu.core_type<tc>, window_params = [{transform_indices = @transform_0, window_bounds = array<i64: 16, 64>}, {transform_indices = @transform_1, window_bounds = array<i64: 16, 64>}, {pipeline_mode = #tpu.pipeline_mode<synchronous>, transform_indices = @transform_2, window_bounds = array<i64: 64, 64>}, {pipeline_mode = #tpu.pipeline_mode<synchronous>, transform_indices = @transform_3, window_bounds = array<i64: 1, 64>}, {pipeline_mode = #tpu.pipeline_mode<synchronous>, transform_indices = @transform_4, window_bounds = array<i64: 1, 64>}, {pipeline_mode = #tpu.pipeline_mode<synchronous>, transform_indices = @transform_5, window_bounds = array<i64: 1, 64>}, {pipeline_mode = #tpu.pipeline_mode<synchronous>, transform_indices = @transform_6, window_bounds = array<i64: 64, 256>}, {pipeline_mode = #tpu.pipeline_mode<synchronous>, transform_indices = @transform_7, window_bounds = array<i64: 1, 256>}, {pipeline_mode = #tpu.pipeline_mode<synchronous>, transform_indices = @transform_8, window_bounds = array<i64: 256, 64>}, {pipeline_mode = #tpu.pipeline_mode<synchronous>, transform_indices = @transform_9, window_bounds = array<i64: 1, 64>}, {transform_indices = @transform_10, window_bounds = array<i64: 16, 64>}]} {
    %c0 = arith.constant 0 : index
    %c0_0 = arith.constant 0 : index
    %0 = vector.load %arg1[%c0, %c0_0] : memref<16x64xf32, #tpu.memory_space<vmem>>, vector<16x64xf32>
    %c0_1 = arith.constant 0 : index
    %c0_2 = arith.constant 0 : index
    %1 = vector.load %arg2[%c0_1, %c0_2] : memref<16x64xbf16, #tpu.memory_space<vmem>>, vector<16x64xbf16>
    %c0_3 = arith.constant 0 : index
    %c0_4 = arith.constant 0 : index
    %2 = vector.load %arg3[%c0_3, %c0_4] : memref<64x64xbf16, #tpu.memory_space<vmem>>, vector<64x64xbf16>
    %cst = arith.constant dense<0.000000e+00> : vector<16x64xf32>
    %3 = tpu.matmul %1, %2, %cst {dimension_numbers = #tpu.dot_dimension_numbers<[1], [0], [0], [1], [0, 0, 1, 1], [], []>} : vector<16x64xbf16>, vector<64x64xbf16>, vector<16x64xf32> -> vector<16x64xf32>
    %c0_5 = arith.constant 0 : index
    %c0_6 = arith.constant 0 : index
    %4 = vector.load %arg4[%c0_5, %c0_6] : memref<1x64xf32, #tpu.memory_space<vmem>>, vector<1x64xf32>
    %5 = vector.broadcast %4 : vector<1x64xf32> to vector<16x64xf32>
    %6 = arith.addf %3, %5 : vector<16x64xf32>
    %c0_7 = arith.constant 0 : index
    %c0_8 = arith.constant 0 : index
    %7 = vector.load %arg5[%c0_7, %c0_8] : memref<1x64xf32, #tpu.memory_space<vmem>>, vector<1x64xf32>
    %c0_9 = arith.constant 0 : index
    %c0_10 = arith.constant 0 : index
    %8 = vector.load %arg6[%c0_9, %c0_10] : memref<1x64xf32, #tpu.memory_space<vmem>>, vector<1x64xf32>
    %cst_11 = arith.constant dense<0.000000e+00> : vector<16xf32>
    %9 = vector.multi_reduction <add>, %0, %cst_11 [1] : vector<16x64xf32> to vector<16xf32>
    %10 = vector.shape_cast %9 : vector<16xf32> to vector<16x1xf32>
    %cst_12 = arith.constant 6.400000e+01 : f32
    %11 = vector.broadcast %cst_12 : f32 to vector<16x1xf32>
    %12 = arith.divf %10, %11 : vector<16x1xf32>
    %13 = vector.broadcast %12 : vector<16x1xf32> to vector<16x64xf32>
    %14 = arith.subf %0, %13 : vector<16x64xf32>
    %15 = arith.mulf %14, %14 : vector<16x64xf32>
    %cst_13 = arith.constant dense<0.000000e+00> : vector<16xf32>
    %16 = vector.multi_reduction <add>, %15, %cst_13 [1] : vector<16x64xf32> to vector<16xf32>
    %17 = vector.shape_cast %16 : vector<16xf32> to vector<16x1xf32>
    %cst_14 = arith.constant 6.400000e+01 : f32
    %18 = vector.broadcast %cst_14 : f32 to vector<16x1xf32>
    %19 = arith.divf %17, %18 : vector<16x1xf32>
    %20 = vector.broadcast %12 : vector<16x1xf32> to vector<16x64xf32>
    %21 = arith.subf %0, %20 : vector<16x64xf32>
    %cst_15 = arith.constant 9.99999974E-6 : f32
    %22 = vector.broadcast %cst_15 : f32 to vector<16x1xf32>
    %23 = arith.addf %19, %22 : vector<16x1xf32>
    %24 = math.rsqrt %23 : vector<16x1xf32>
    %25 = vector.broadcast %24 : vector<16x1xf32> to vector<16x64xf32>
    %26 = arith.mulf %21, %25 : vector<16x64xf32>
    %27 = vector.broadcast %7 : vector<1x64xf32> to vector<16x64xf32>
    %28 = arith.mulf %26, %27 : vector<16x64xf32>
    %29 = vector.broadcast %8 : vector<1x64xf32> to vector<16x64xf32>
    %30 = arith.addf %28, %29 : vector<16x64xf32>
    %31 = arith.truncf %30 : vector<16x64xf32> to vector<16x64xbf16>
    %c0_16 = arith.constant 0 : index
    %c0_17 = arith.constant 0 : index
    %32 = vector.load %arg7[%c0_16, %c0_17] : memref<64x256xbf16, #tpu.memory_space<vmem>>, vector<64x256xbf16>
    %cst_18 = arith.constant dense<0.000000e+00> : vector<16x256xf32>
    %33 = tpu.matmul %31, %32, %cst_18 {dimension_numbers = #tpu.dot_dimension_numbers<[1], [0], [0], [1], [0, 0, 1, 1], [], []>} : vector<16x64xbf16>, vector<64x256xbf16>, vector<16x256xf32> -> vector<16x256xf32>
    %c0_19 = arith.constant 0 : index
    %c0_20 = arith.constant 0 : index
    %34 = vector.load %arg8[%c0_19, %c0_20] : memref<1x256xf32, #tpu.memory_space<vmem>>, vector<1x256xf32>
    %35 = vector.broadcast %34 : vector<1x256xf32> to vector<16x256xf32>
    %36 = arith.addf %33, %35 : vector<16x256xf32>
    %cst_21 = arith.constant 5.000000e-01 : f32
    %37 = vector.broadcast %cst_21 : f32 to vector<16x256xf32>
    %38 = arith.mulf %37, %36 : vector<16x256xf32>
    %cst_22 = arith.constant 0.707106769 : f32
    %39 = vector.broadcast %cst_22 : f32 to vector<16x256xf32>
    %40 = arith.mulf %36, %39 : vector<16x256xf32>
    %41 = math.absf %40 : vector<16x256xf32>
    %cst_23 = arith.constant 0.327591091 : f32
    %42 = vector.broadcast %cst_23 : f32 to vector<16x256xf32>
    %43 = arith.mulf %42, %41 : vector<16x256xf32>
    %cst_24 = arith.constant 1.000000e+00 : f32
    %44 = vector.broadcast %cst_24 : f32 to vector<16x256xf32>
    %45 = arith.addf %44, %43 : vector<16x256xf32>
    %46 = tpu.reciprocal %45 {approx = true} : vector<16x256xf32> -> vector<16x256xf32>
    %cst_25 = arith.constant 1.06140542 : f32
    %47 = vector.broadcast %cst_25 : f32 to vector<16x256xf32>
    %48 = arith.mulf %47, %46 : vector<16x256xf32>
    %cst_26 = arith.constant -1.45315206 : f32
    %49 = vector.broadcast %cst_26 : f32 to vector<16x256xf32>
    %50 = arith.addf %48, %49 : vector<16x256xf32>
    %51 = arith.mulf %50, %46 : vector<16x256xf32>
    %cst_27 = arith.constant 1.42141378 : f32
    %52 = vector.broadcast %cst_27 : f32 to vector<16x256xf32>
    %53 = arith.addf %51, %52 : vector<16x256xf32>
    %54 = arith.mulf %53, %46 : vector<16x256xf32>
    %cst_28 = arith.constant -0.284496725 : f32
    %55 = vector.broadcast %cst_28 : f32 to vector<16x256xf32>
    %56 = arith.addf %54, %55 : vector<16x256xf32>
    %57 = arith.mulf %56, %46 : vector<16x256xf32>
    %cst_29 = arith.constant 0.254829586 : f32
    %58 = vector.broadcast %cst_29 : f32 to vector<16x256xf32>
    %59 = arith.addf %57, %58 : vector<16x256xf32>
    %60 = arith.mulf %59, %46 : vector<16x256xf32>
    %cst_30 = arith.constant 0.000000e+00 : f32
    %61 = vector.broadcast %cst_30 : f32 to vector<16x256xf32>
    %62 = arith.subf %61, %41 : vector<16x256xf32>
    %63 = arith.mulf %62, %41 : vector<16x256xf32>
    %64 = math.exp %63 : vector<16x256xf32>
    %65 = arith.mulf %60, %64 : vector<16x256xf32>
    %cst_31 = arith.constant 1.000000e+00 : f32
    %66 = vector.broadcast %cst_31 : f32 to vector<16x256xf32>
    %67 = arith.subf %66, %65 : vector<16x256xf32>
    %cst_32 = arith.constant 0.000000e+00 : f32
    %68 = vector.broadcast %cst_32 : f32 to vector<16x256xf32>
    %69 = arith.cmpf olt, %40, %68 : vector<16x256xf32>
    %cst_33 = arith.constant 0.000000e+00 : f32
    %70 = vector.broadcast %cst_33 : f32 to vector<16x256xf32>
    %71 = arith.subf %70, %67 : vector<16x256xf32>
    %72 = arith.select %69, %71, %67 : vector<16x256xi1>, vector<16x256xf32>
    %cst_34 = arith.constant 1.000000e+00 : f32
    %73 = vector.broadcast %cst_34 : f32 to vector<16x256xf32>
    %74 = arith.addf %73, %72 : vector<16x256xf32>
    %75 = arith.mulf %38, %74 : vector<16x256xf32>
    %76 = arith.truncf %75 : vector<16x256xf32> to vector<16x256xbf16>
    %c0_35 = arith.constant 0 : index
    %c0_36 = arith.constant 0 : index
    %77 = vector.load %arg9[%c0_35, %c0_36] : memref<256x64xbf16, #tpu.memory_space<vmem>>, vector<256x64xbf16>
    %cst_37 = arith.constant dense<0.000000e+00> : vector<16x64xf32>
    %78 = tpu.matmul %76, %77, %cst_37 {dimension_numbers = #tpu.dot_dimension_numbers<[1], [0], [0], [1], [0, 0, 1, 1], [], []>} : vector<16x256xbf16>, vector<256x64xbf16>, vector<16x64xf32> -> vector<16x64xf32>
    %c0_38 = arith.constant 0 : index
    %c0_39 = arith.constant 0 : index
    %79 = vector.load %arg10[%c0_38, %c0_39] : memref<1x64xf32, #tpu.memory_space<vmem>>, vector<1x64xf32>
    %80 = vector.broadcast %79 : vector<1x64xf32> to vector<16x64xf32>
    %81 = arith.addf %78, %80 : vector<16x64xf32>
    %82 = arith.addf %0, %6 : vector<16x64xf32>
    %83 = arith.addf %82, %81 : vector<16x64xf32>
    %c0_40 = arith.constant 0 : index
    %c0_41 = arith.constant 0 : index
    %84 = vector.load %arg11[%c0_40, %c0_41] : memref<16x64xf32, #tpu.memory_space<vmem>>, vector<16x64xf32>
    tpu.vector_store %arg11[%c0_40, %c0_41], %83 {strides = array<i32>} : memref<16x64xf32, #tpu.memory_space<vmem>>, vector<16x64xf32>,
    return
  }
  func.func @transform_0(%arg0: i32) -> (i32, i32) {
    %c0_i32 = arith.constant 0 : i32
    %c0_i32_0 = arith.constant 0 : i32
    return %arg0, %c0_i32 : i32, i32
  }
  func.func @transform_1(%arg0: i32) -> (i32, i32) {
    %c0_i32 = arith.constant 0 : i32
    %c0_i32_0 = arith.constant 0 : i32
    return %arg0, %c0_i32 : i32, i32
  }
  func.func @transform_2(%arg0: i32) -> (i32, i32) {
    %c0_i32 = arith.constant 0 : i32
    %c0_i32_0 = arith.constant 0 : i32
    %c0_i32_1 = arith.constant 0 : i32
    return %c0_i32, %c0_i32_0 : i32, i32
  }
  func.func @transform_3(%arg0: i32) -> (i32, i32) {
    %c0_i32 = arith.constant 0 : i32
    %c0_i32_0 = arith.constant 0 : i32
    %c0_i32_1 = arith.constant 0 : i32
    return %c0_i32, %c0_i32_0 : i32, i32
  }
  func.func @transform_4(%arg0: i32) -> (i32, i32) {
    %c0_i32 = arith.constant 0 : i32
    %c0_i32_0 = arith.constant 0 : i32
    %c0_i32_1 = arith.constant 0 : i32
    return %c0_i32, %c0_i32_0 : i32, i32
  }
  func.func @transform_5(%arg0: i32) -> (i32, i32) {
    %c0_i32 = arith.constant 0 : i32
    %c0_i32_0 = arith.constant 0 : i32
    %c0_i32_1 = arith.constant 0 : i32
    return %c0_i32, %c0_i32_0 : i32, i32
  }
  func.func @transform_6(%arg0: i32) -> (i32, i32) {
    %c0_i32 = arith.constant 0 : i32
    %c0_i32_0 = arith.constant 0 : i32
    %c0_i32_1 = arith.constant 0 : i32
    return %c0_i32, %c0_i32_0 : i32, i32
  }
  func.func @transform_7(%arg0: i32) -> (i32, i32) {
    %c0_i32 = arith.constant 0 : i32
    %c0_i32_0 = arith.constant 0 : i32
    %c0_i32_1 = arith.constant 0 : i32
    return %c0_i32, %c0_i32_0 : i32, i32
  }
  func.func @transform_8(%arg0: i32) -> (i32, i32) {
    %c0_i32 = arith.constant 0 : i32
    %c0_i32_0 = arith.constant 0 : i32
    %c0_i32_1 = arith.constant 0 : i32
    return %c0_i32, %c0_i32_0 : i32, i32
  }
  func.func @transform_9(%arg0: i32) -> (i32, i32) {
    %c0_i32 = arith.constant 0 : i32
    %c0_i32_0 = arith.constant 0 : i32
    %c0_i32_1 = arith.constant 0 : i32
    return %c0_i32, %c0_i32_0 : i32, i32
  }
  func.func @transform_10(%arg0: i32) -> (i32, i32) {
    %c0_i32 = arith.constant 0 : i32
    %c0_i32_0 = arith.constant 0 : i32
    return %arg0, %c0_i32 : i32, i32
  }
}

module attributes {stable_mosaic.version = 11 : i64} {
  func.func @_unembed_ce_kernel(%arg0: i32, %arg1: i32, %arg2: memref<16x64xf32, #tpu.memory_space<vmem>>, %arg3: memref<1x64xf32, #tpu.memory_space<vmem>>, %arg4: memref<1x64xf32, #tpu.memory_space<vmem>>, %arg5: memref<64x64xbf16, #tpu.memory_space<vmem>>, %arg6: memref<1x64xf32, #tpu.memory_space<vmem>>, %arg7: memref<64x128xbf16, #tpu.memory_space<vmem>>, %arg8: memref<16x1xi32, #tpu.memory_space<vmem>>, %arg9: memref<16x1xi32, #tpu.memory_space<vmem>>, %arg10: memref<16x1xf32, #tpu.memory_space<vmem>>, %arg11: memref<16x1xf32, #tpu.memory_space<vmem>>, %arg12: memref<1x1xf32, #tpu.memory_space<vmem>>, %arg13: memref<1x1xf32, #tpu.memory_space<vmem>>, %arg14: memref<16x64xbf16, #tpu.memory_space<vmem>>, %arg15: memref<16x64xbf16, #tpu.memory_space<vmem>>, %arg16: memref<16x1xf32, #tpu.memory_space<vmem>>, %arg17: memref<16x1xf32, #tpu.memory_space<vmem>>, %arg18: memref<16x1xf32, #tpu.memory_space<vmem>>, %arg19: memref<16x1xf32, #tpu.memory_space<vmem>>, %arg20: memref<16x1xf32, #tpu.memory_space<vmem>>, %arg21: memref<16x1xf32, #tpu.memory_space<vmem>>) attributes {dimension_semantics = [#tpu.dimension_semantics<arbitrary>, #tpu.dimension_semantics<arbitrary>], iteration_bounds = array<i64: 2, 1>, scalar_prefetch = 0 : i64, scratch_operands = 8 : i64, tpu.core_type = #tpu.core_type<tc>, window_params = [{transform_indices = @transform_0, window_bounds = array<i64: 16, 64>}, {pipeline_mode = #tpu.pipeline_mode<synchronous>, transform_indices = @transform_1, window_bounds = array<i64: 1, 64>}, {pipeline_mode = #tpu.pipeline_mode<synchronous>, transform_indices = @transform_2, window_bounds = array<i64: 1, 64>}, {pipeline_mode = #tpu.pipeline_mode<synchronous>, transform_indices = @transform_3, window_bounds = array<i64: 64, 64>}, {pipeline_mode = #tpu.pipeline_mode<synchronous>, transform_indices = @transform_4, window_bounds = array<i64: 1, 64>}, {transform_indices = @transform_5, window_bounds = array<i64: 64, 128>}, {transform_indices = @transform_6, window_bounds = array<i64: 16, 1>}, {transform_indices = @transform_7, window_bounds = array<i64: 16, 1>}, {transform_indices = @transform_8, window_bounds = array<i64: 16, 1>}, {transform_indices = @transform_9, window_bounds = array<i64: 16, 1>}, {pipeline_mode = #tpu.pipeline_mode<synchronous>, transform_indices = @transform_10, window_bounds = array<i64: 1, 1>}, {pipeline_mode = #tpu.pipeline_mode<synchronous>, transform_indices = @transform_11, window_bounds = array<i64: 1, 1>}]} {
    %c0_i32 = arith.constant 0 : i32
    %0 = arith.cmpi eq, %arg0, %c0_i32 : i32
    %c0_i32_0 = arith.constant 0 : i32
    %1 = arith.cmpi eq, %arg1, %c0_i32_0 : i32
    %2 = arith.andi %0, %1 : i1
    %3 = arith.extui %2 : i1 to i32
    %c0_i32_1 = arith.constant 0 : i32
    %4 = arith.cmpi ne, %3, %c0_i32_1 : i32
    scf.if %4 {
      %cst_48 = arith.constant 0.000000e+00 : f32
      %72 = vector.broadcast %cst_48 : f32 to vector<1x1xf32>
      %c0_49 = arith.constant 0 : index
      %c0_50 = arith.constant 0 : index
      %73 = vector.load %arg12[%c0_49, %c0_50] : memref<1x1xf32, #tpu.memory_space<vmem>>, vector<1x1xf32>
      tpu.vector_store %arg12[%c0_49, %c0_50], %72 {strides = array<i32>} : memref<1x1xf32, #tpu.memory_space<vmem>>, vector<1x1xf32>,
      %cst_51 = arith.constant 0.000000e+00 : f32
      %74 = vector.broadcast %cst_51 : f32 to vector<1x1xf32>
      %c0_52 = arith.constant 0 : index
      %c0_53 = arith.constant 0 : index
      %75 = vector.load %arg13[%c0_52, %c0_53] : memref<1x1xf32, #tpu.memory_space<vmem>>, vector<1x1xf32>
      tpu.vector_store %arg13[%c0_52, %c0_53], %74 {strides = array<i32>} : memref<1x1xf32, #tpu.memory_space<vmem>>, vector<1x1xf32>,
    } else {
    }
    %c0_i32_2 = arith.constant 0 : i32
    %5 = arith.cmpi eq, %arg1, %c0_i32_2 : i32
    %6 = arith.extui %5 : i1 to i32
    %c0_i32_3 = arith.constant 0 : i32
    %7 = arith.cmpi ne, %6, %c0_i32_3 : i32
    scf.if %7 {
      %c0_48 = arith.constant 0 : index
      %c0_49 = arith.constant 0 : index
      %72 = vector.load %arg2[%c0_48, %c0_49] : memref<16x64xf32, #tpu.memory_space<vmem>>, vector<16x64xf32>
      %c0_50 = arith.constant 0 : index
      %c0_51 = arith.constant 0 : index
      %73 = vector.load %arg3[%c0_50, %c0_51] : memref<1x64xf32, #tpu.memory_space<vmem>>, vector<1x64xf32>
      %c0_52 = arith.constant 0 : index
      %c0_53 = arith.constant 0 : index
      %74 = vector.load %arg4[%c0_52, %c0_53] : memref<1x64xf32, #tpu.memory_space<vmem>>, vector<1x64xf32>
      %cst_54 = arith.constant dense<0.000000e+00> : vector<16xf32>
      %75 = vector.multi_reduction <add>, %72, %cst_54 [1] : vector<16x64xf32> to vector<16xf32>
      %76 = vector.shape_cast %75 : vector<16xf32> to vector<16x1xf32>
      %cst_55 = arith.constant 6.400000e+01 : f32
      %77 = vector.broadcast %cst_55 : f32 to vector<16x1xf32>
      %78 = arith.divf %76, %77 : vector<16x1xf32>
      %79 = vector.broadcast %78 : vector<16x1xf32> to vector<16x64xf32>
      %80 = arith.subf %72, %79 : vector<16x64xf32>
      %81 = arith.mulf %80, %80 : vector<16x64xf32>
      %cst_56 = arith.constant dense<0.000000e+00> : vector<16xf32>
      %82 = vector.multi_reduction <add>, %81, %cst_56 [1] : vector<16x64xf32> to vector<16xf32>
      %83 = vector.shape_cast %82 : vector<16xf32> to vector<16x1xf32>
      %cst_57 = arith.constant 6.400000e+01 : f32
      %84 = vector.broadcast %cst_57 : f32 to vector<16x1xf32>
      %85 = arith.divf %83, %84 : vector<16x1xf32>
      %86 = vector.broadcast %78 : vector<16x1xf32> to vector<16x64xf32>
      %87 = arith.subf %72, %86 : vector<16x64xf32>
      %cst_58 = arith.constant 9.99999974E-6 : f32
      %88 = vector.broadcast %cst_58 : f32 to vector<16x1xf32>
      %89 = arith.addf %85, %88 : vector<16x1xf32>
      %90 = math.rsqrt %89 : vector<16x1xf32>
      %91 = vector.broadcast %90 : vector<16x1xf32> to vector<16x64xf32>
      %92 = arith.mulf %87, %91 : vector<16x64xf32>
      %93 = vector.broadcast %73 : vector<1x64xf32> to vector<16x64xf32>
      %94 = arith.mulf %92, %93 : vector<16x64xf32>
      %95 = vector.broadcast %74 : vector<1x64xf32> to vector<16x64xf32>
      %96 = arith.addf %94, %95 : vector<16x64xf32>
      %97 = arith.truncf %96 : vector<16x64xf32> to vector<16x64xbf16>
      %c0_59 = arith.constant 0 : index
      %c0_60 = arith.constant 0 : index
      %98 = vector.load %arg5[%c0_59, %c0_60] : memref<64x64xbf16, #tpu.memory_space<vmem>>, vector<64x64xbf16>
      %cst_61 = arith.constant dense<0.000000e+00> : vector<16x64xf32>
      %99 = tpu.matmul %97, %98, %cst_61 {dimension_numbers = #tpu.dot_dimension_numbers<[1], [0], [0], [1], [0, 0, 1, 1], [], []>} : vector<16x64xbf16>, vector<64x64xbf16>, vector<16x64xf32> -> vector<16x64xf32>
      %c0_62 = arith.constant 0 : index
      %c0_63 = arith.constant 0 : index
      %100 = vector.load %arg6[%c0_62, %c0_63] : memref<1x64xf32, #tpu.memory_space<vmem>>, vector<1x64xf32>
      %101 = vector.broadcast %100 : vector<1x64xf32> to vector<16x64xf32>
      %102 = arith.addf %99, %101 : vector<16x64xf32>
      %c0_64 = arith.constant 0 : index
      %c0_65 = arith.constant 0 : index
      %103 = vector.load %arg14[%c0_64, %c0_65] : memref<16x64xbf16, #tpu.memory_space<vmem>>, vector<16x64xbf16>
      tpu.vector_store %arg14[%c0_64, %c0_65], %97 {strides = array<i32>} : memref<16x64xbf16, #tpu.memory_space<vmem>>, vector<16x64xbf16>,
      %104 = arith.truncf %102 : vector<16x64xf32> to vector<16x64xbf16>
      %c0_66 = arith.constant 0 : index
      %c0_67 = arith.constant 0 : index
      %105 = vector.load %arg15[%c0_66, %c0_67] : memref<16x64xbf16, #tpu.memory_space<vmem>>, vector<16x64xbf16>
      tpu.vector_store %arg15[%c0_66, %c0_67], %104 {strides = array<i32>} : memref<16x64xbf16, #tpu.memory_space<vmem>>, vector<16x64xbf16>,
      %cst_68 = arith.constant -1.000000e+30 : f32
      %106 = vector.broadcast %cst_68 : f32 to vector<16x1xf32>
      %c0_69 = arith.constant 0 : index
      %c0_70 = arith.constant 0 : index
      %107 = vector.load %arg16[%c0_69, %c0_70] : memref<16x1xf32, #tpu.memory_space<vmem>>, vector<16x1xf32>
      tpu.vector_store %arg16[%c0_69, %c0_70], %106 {strides = array<i32>} : memref<16x1xf32, #tpu.memory_space<vmem>>, vector<16x1xf32>,
      %cst_71 = arith.constant -1.000000e+30 : f32
      %108 = vector.broadcast %cst_71 : f32 to vector<16x1xf32>
      %c0_72 = arith.constant 0 : index
      %c0_73 = arith.constant 0 : index
      %109 = vector.load %arg19[%c0_72, %c0_73] : memref<16x1xf32, #tpu.memory_space<vmem>>, vector<16x1xf32>
      tpu.vector_store %arg19[%c0_72, %c0_73], %108 {strides = array<i32>} : memref<16x1xf32, #tpu.memory_space<vmem>>, vector<16x1xf32>,
      %cst_74 = arith.constant 0.000000e+00 : f32
      %110 = vector.broadcast %cst_74 : f32 to vector<16x1xf32>
      %c0_75 = arith.constant 0 : index
      %c0_76 = arith.constant 0 : index
      %111 = vector.load %arg17[%c0_75, %c0_76] : memref<16x1xf32, #tpu.memory_space<vmem>>, vector<16x1xf32>
      tpu.vector_store %arg17[%c0_75, %c0_76], %110 {strides = array<i32>} : memref<16x1xf32, #tpu.memory_space<vmem>>, vector<16x1xf32>,
      %cst_77 = arith.constant 0.000000e+00 : f32
      %112 = vector.broadcast %cst_77 : f32 to vector<16x1xf32>
      %c0_78 = arith.constant 0 : index
      %c0_79 = arith.constant 0 : index
      %113 = vector.load %arg20[%c0_78, %c0_79] : memref<16x1xf32, #tpu.memory_space<vmem>>, vector<16x1xf32>
      tpu.vector_store %arg20[%c0_78, %c0_79], %112 {strides = array<i32>} : memref<16x1xf32, #tpu.memory_space<vmem>>, vector<16x1xf32>,
      %cst_80 = arith.constant 0.000000e+00 : f32
      %114 = vector.broadcast %cst_80 : f32 to vector<16x1xf32>
      %c0_81 = arith.constant 0 : index
      %c0_82 = arith.constant 0 : index
      %115 = vector.load %arg18[%c0_81, %c0_82] : memref<16x1xf32, #tpu.memory_space<vmem>>, vector<16x1xf32>
      tpu.vector_store %arg18[%c0_81, %c0_82], %114 {strides = array<i32>} : memref<16x1xf32, #tpu.memory_space<vmem>>, vector<16x1xf32>,
      %cst_83 = arith.constant 0.000000e+00 : f32
      %116 = vector.broadcast %cst_83 : f32 to vector<16x1xf32>
      %c0_84 = arith.constant 0 : index
      %c0_85 = arith.constant 0 : index
      %117 = vector.load %arg21[%c0_84, %c0_85] : memref<16x1xf32, #tpu.memory_space<vmem>>, vector<16x1xf32>
      tpu.vector_store %arg21[%c0_84, %c0_85], %116 {strides = array<i32>} : memref<16x1xf32, #tpu.memory_space<vmem>>, vector<16x1xf32>,
    } else {
    }
    %c0 = arith.constant 0 : index
    %c0_4 = arith.constant 0 : index
    %8 = vector.load %arg7[%c0, %c0_4] : memref<64x128xbf16, #tpu.memory_space<vmem>>, vector<64x128xbf16>
    %9 = tpu.iota {dimensions = array<i32: 1>} : vector<16x128xi32>
    %c128_i32 = arith.constant 128 : i32
    %10 = arith.muli %arg1, %c128_i32 : i32
    %11 = vector.broadcast %10 : i32 to vector<16x128xi32>
    %12 = arith.addi %9, %11 : vector<16x128xi32>
    %c0_5 = arith.constant 0 : index
    %c0_6 = arith.constant 0 : index
    %13 = vector.load %arg14[%c0_5, %c0_6] : memref<16x64xbf16, #tpu.memory_space<vmem>>, vector<16x64xbf16>
    %c0_7 = arith.constant 0 : index
    %c0_8 = arith.constant 0 : index
    %14 = vector.load %arg8[%c0_7, %c0_8] : memref<16x1xi32, #tpu.memory_space<vmem>>, vector<16x1xi32>
    %cst = arith.constant dense<0.000000e+00> : vector<16x128xf32>
    %15 = tpu.matmul %13, %8, %cst {dimension_numbers = #tpu.dot_dimension_numbers<[1], [0], [0], [1], [0, 0, 1, 1], [], []>} : vector<16x64xbf16>, vector<64x128xbf16>, vector<16x128xf32> -> vector<16x128xf32>
    %c0_9 = arith.constant 0 : index
    %c0_10 = arith.constant 0 : index
    %16 = vector.load %arg16[%c0_9, %c0_10] : memref<16x1xf32, #tpu.memory_space<vmem>>, vector<16x1xf32>
    %cst_11 = arith.constant dense<0xFF800000> : vector<16xf32>
    %17 = vector.multi_reduction <maximumf>, %15, %cst_11 [1] : vector<16x128xf32> to vector<16xf32>
    %18 = vector.shape_cast %17 : vector<16xf32> to vector<16x1xf32>
    %19 = arith.maximumf %16, %18 : vector<16x1xf32>
    %c0_12 = arith.constant 0 : index
    %c0_13 = arith.constant 0 : index
    %20 = vector.load %arg17[%c0_12, %c0_13] : memref<16x1xf32, #tpu.memory_space<vmem>>, vector<16x1xf32>
    %21 = arith.subf %16, %19 : vector<16x1xf32>
    %22 = math.exp %21 : vector<16x1xf32>
    %23 = arith.mulf %20, %22 : vector<16x1xf32>
    %24 = vector.broadcast %19 : vector<16x1xf32> to vector<16x128xf32>
    %25 = arith.subf %15, %24 : vector<16x128xf32>
    %26 = math.exp %25 : vector<16x128xf32>
    %cst_14 = arith.constant dense<0.000000e+00> : vector<16xf32>
    %27 = vector.multi_reduction <add>, %26, %cst_14 [1] : vector<16x128xf32> to vector<16xf32>
    %28 = vector.shape_cast %27 : vector<16xf32> to vector<16x1xf32>
    %29 = arith.addf %23, %28 : vector<16x1xf32>
    %c0_15 = arith.constant 0 : index
    %c0_16 = arith.constant 0 : index
    %30 = vector.load %arg17[%c0_15, %c0_16] : memref<16x1xf32, #tpu.memory_space<vmem>>, vector<16x1xf32>
    tpu.vector_store %arg17[%c0_15, %c0_16], %29 {strides = array<i32>} : memref<16x1xf32, #tpu.memory_space<vmem>>, vector<16x1xf32>,
    %c0_17 = arith.constant 0 : index
    %c0_18 = arith.constant 0 : index
    %31 = vector.load %arg16[%c0_17, %c0_18] : memref<16x1xf32, #tpu.memory_space<vmem>>, vector<16x1xf32>
    tpu.vector_store %arg16[%c0_17, %c0_18], %19 {strides = array<i32>} : memref<16x1xf32, #tpu.memory_space<vmem>>, vector<16x1xf32>,
    %c0_19 = arith.constant 0 : index
    %c0_20 = arith.constant 0 : index
    %32 = vector.load %arg18[%c0_19, %c0_20] : memref<16x1xf32, #tpu.memory_space<vmem>>, vector<16x1xf32>
    %33 = vector.broadcast %14 : vector<16x1xi32> to vector<16x128xi32>
    %34 = arith.cmpi eq, %12, %33 : vector<16x128xi32>
    %cst_21 = arith.constant 0.000000e+00 : f32
    %35 = vector.broadcast %cst_21 : f32 to vector<16x128xf32>
    %36 = arith.select %34, %15, %35 : vector<16x128xi1>, vector<16x128xf32>
    %cst_22 = arith.constant dense<0.000000e+00> : vector<16xf32>
    %37 = vector.multi_reduction <add>, %36, %cst_22 [1] : vector<16x128xf32> to vector<16xf32>
    %38 = vector.shape_cast %37 : vector<16xf32> to vector<16x1xf32>
    %39 = arith.addf %32, %38 : vector<16x1xf32>
    %c0_23 = arith.constant 0 : index
    %c0_24 = arith.constant 0 : index
    %40 = vector.load %arg18[%c0_23, %c0_24] : memref<16x1xf32, #tpu.memory_space<vmem>>, vector<16x1xf32>
    tpu.vector_store %arg18[%c0_23, %c0_24], %39 {strides = array<i32>} : memref<16x1xf32, #tpu.memory_space<vmem>>, vector<16x1xf32>,
    %c0_25 = arith.constant 0 : index
    %c0_26 = arith.constant 0 : index
    %41 = vector.load %arg15[%c0_25, %c0_26] : memref<16x64xbf16, #tpu.memory_space<vmem>>, vector<16x64xbf16>
    %c0_27 = arith.constant 0 : index
    %c0_28 = arith.constant 0 : index
    %42 = vector.load %arg9[%c0_27, %c0_28] : memref<16x1xi32, #tpu.memory_space<vmem>>, vector<16x1xi32>
    %cst_29 = arith.constant dense<0.000000e+00> : vector<16x128xf32>
    %43 = tpu.matmul %41, %8, %cst_29 {dimension_numbers = #tpu.dot_dimension_numbers<[1], [0], [0], [1], [0, 0, 1, 1], [], []>} : vector<16x64xbf16>, vector<64x128xbf16>, vector<16x128xf32> -> vector<16x128xf32>
    %c0_30 = arith.constant 0 : index
    %c0_31 = arith.constant 0 : index
    %44 = vector.load %arg19[%c0_30, %c0_31] : memref<16x1xf32, #tpu.memory_space<vmem>>, vector<16x1xf32>
    %cst_32 = arith.constant dense<0xFF800000> : vector<16xf32>
    %45 = vector.multi_reduction <maximumf>, %43, %cst_32 [1] : vector<16x128xf32> to vector<16xf32>
    %46 = vector.shape_cast %45 : vector<16xf32> to vector<16x1xf32>
    %47 = arith.maximumf %44, %46 : vector<16x1xf32>
    %c0_33 = arith.constant 0 : index
    %c0_34 = arith.constant 0 : index
    %48 = vector.load %arg20[%c0_33, %c0_34] : memref<16x1xf32, #tpu.memory_space<vmem>>, vector<16x1xf32>
    %49 = arith.subf %44, %47 : vector<16x1xf32>
    %50 = math.exp %49 : vector<16x1xf32>
    %51 = arith.mulf %48, %50 : vector<16x1xf32>
    %52 = vector.broadcast %47 : vector<16x1xf32> to vector<16x128xf32>
    %53 = arith.subf %43, %52 : vector<16x128xf32>
    %54 = math.exp %53 : vector<16x128xf32>
    %cst_35 = arith.constant dense<0.000000e+00> : vector<16xf32>
    %55 = vector.multi_reduction <add>, %54, %cst_35 [1] : vector<16x128xf32> to vector<16xf32>
    %56 = vector.shape_cast %55 : vector<16xf32> to vector<16x1xf32>
    %57 = arith.addf %51, %56 : vector<16x1xf32>
    %c0_36 = arith.constant 0 : index
    %c0_37 = arith.constant 0 : index
    %58 = vector.load %arg20[%c0_36, %c0_37] : memref<16x1xf32, #tpu.memory_space<vmem>>, vector<16x1xf32>
    tpu.vector_store %arg20[%c0_36, %c0_37], %57 {strides = array<i32>} : memref<16x1xf32, #tpu.memory_space<vmem>>, vector<16x1xf32>,
    %c0_38 = arith.constant 0 : index
    %c0_39 = arith.constant 0 : index
    %59 = vector.load %arg19[%c0_38, %c0_39] : memref<16x1xf32, #tpu.memory_space<vmem>>, vector<16x1xf32>
    tpu.vector_store %arg19[%c0_38, %c0_39], %47 {strides = array<i32>} : memref<16x1xf32, #tpu.memory_space<vmem>>, vector<16x1xf32>,
    %c0_40 = arith.constant 0 : index
    %c0_41 = arith.constant 0 : index
    %60 = vector.load %arg21[%c0_40, %c0_41] : memref<16x1xf32, #tpu.memory_space<vmem>>, vector<16x1xf32>
    %61 = vector.broadcast %42 : vector<16x1xi32> to vector<16x128xi32>
    %62 = arith.cmpi eq, %12, %61 : vector<16x128xi32>
    %cst_42 = arith.constant 0.000000e+00 : f32
    %63 = vector.broadcast %cst_42 : f32 to vector<16x128xf32>
    %64 = arith.select %62, %43, %63 : vector<16x128xi1>, vector<16x128xf32>
    %cst_43 = arith.constant dense<0.000000e+00> : vector<16xf32>
    %65 = vector.multi_reduction <add>, %64, %cst_43 [1] : vector<16x128xf32> to vector<16xf32>
    %66 = vector.shape_cast %65 : vector<16xf32> to vector<16x1xf32>
    %67 = arith.addf %60, %66 : vector<16x1xf32>
    %c0_44 = arith.constant 0 : index
    %c0_45 = arith.constant 0 : index
    %68 = vector.load %arg21[%c0_44, %c0_45] : memref<16x1xf32, #tpu.memory_space<vmem>>, vector<16x1xf32>
    tpu.vector_store %arg21[%c0_44, %c0_45], %67 {strides = array<i32>} : memref<16x1xf32, #tpu.memory_space<vmem>>, vector<16x1xf32>,
    %c0_i32_46 = arith.constant 0 : i32
    %69 = arith.cmpi eq, %arg1, %c0_i32_46 : i32
    %70 = arith.extui %69 : i1 to i32
    %c0_i32_47 = arith.constant 0 : i32
    %71 = arith.cmpi ne, %70, %c0_i32_47 : i32
    scf.if %71 {
      %c0_48 = arith.constant 0 : index
      %c0_49 = arith.constant 0 : index
      %72 = vector.load %arg16[%c0_48, %c0_49] : memref<16x1xf32, #tpu.memory_space<vmem>>, vector<16x1xf32>
      %c0_50 = arith.constant 0 : index
      %c0_51 = arith.constant 0 : index
      %73 = vector.load %arg17[%c0_50, %c0_51] : memref<16x1xf32, #tpu.memory_space<vmem>>, vector<16x1xf32>
      %74 = math.log %73 : vector<16x1xf32>
      %75 = arith.addf %72, %74 : vector<16x1xf32>
      %c0_52 = arith.constant 0 : index
      %c0_53 = arith.constant 0 : index
      %76 = vector.load %arg18[%c0_52, %c0_53] : memref<16x1xf32, #tpu.memory_space<vmem>>, vector<16x1xf32>
      %77 = arith.subf %75, %76 : vector<16x1xf32>
      %c0_54 = arith.constant 0 : index
      %c0_55 = arith.constant 0 : index
      %78 = vector.load %arg10[%c0_54, %c0_55] : memref<16x1xf32, #tpu.memory_space<vmem>>, vector<16x1xf32>
      %79 = arith.mulf %77, %78 : vector<16x1xf32>
      %c0_56 = arith.constant 0 : index
      %c0_57 = arith.constant 0 : index
      %80 = vector.load %arg19[%c0_56, %c0_57] : memref<16x1xf32, #tpu.memory_space<vmem>>, vector<16x1xf32>
      %c0_58 = arith.constant 0 : index
      %c0_59 = arith.constant 0 : index
      %81 = vector.load %arg20[%c0_58, %c0_59] : memref<16x1xf32, #tpu.memory_space<vmem>>, vector<16x1xf32>
      %82 = math.log %81 : vector<16x1xf32>
      %83 = arith.addf %80, %82 : vector<16x1xf32>
      %c0_60 = arith.constant 0 : index
      %c0_61 = arith.constant 0 : index
      %84 = vector.load %arg21[%c0_60, %c0_61] : memref<16x1xf32, #tpu.memory_space<vmem>>, vector<16x1xf32>
      %85 = arith.subf %83, %84 : vector<16x1xf32>
      %c0_62 = arith.constant 0 : index
      %c0_63 = arith.constant 0 : index
      %86 = vector.load %arg11[%c0_62, %c0_63] : memref<16x1xf32, #tpu.memory_space<vmem>>, vector<16x1xf32>
      %87 = arith.mulf %85, %86 : vector<16x1xf32>
      %c0_64 = arith.constant 0 : index
      %c0_65 = arith.constant 0 : index
      %88 = vector.load %arg12[%c0_64, %c0_65] : memref<1x1xf32, #tpu.memory_space<vmem>>, vector<1x1xf32>
      %cst_66 = arith.constant dense<0.000000e+00> : vector<1xf32>
      %89 = vector.multi_reduction <add>, %79, %cst_66 [0] : vector<16x1xf32> to vector<1xf32>
      %90 = vector.shape_cast %89 : vector<1xf32> to vector<1x1xf32>
      %91 = arith.addf %88, %90 : vector<1x1xf32>
      %c0_67 = arith.constant 0 : index
      %c0_68 = arith.constant 0 : index
      %92 = vector.load %arg12[%c0_67, %c0_68] : memref<1x1xf32, #tpu.memory_space<vmem>>, vector<1x1xf32>
      tpu.vector_store %arg12[%c0_67, %c0_68], %91 {strides = array<i32>} : memref<1x1xf32, #tpu.memory_space<vmem>>, vector<1x1xf32>,
      %c0_69 = arith.constant 0 : index
      %c0_70 = arith.constant 0 : index
      %93 = vector.load %arg13[%c0_69, %c0_70] : memref<1x1xf32, #tpu.memory_space<vmem>>, vector<1x1xf32>
      %cst_71 = arith.constant dense<0.000000e+00> : vector<1xf32>
      %94 = vector.multi_reduction <add>, %87, %cst_71 [0] : vector<16x1xf32> to vector<1xf32>
      %95 = vector.shape_cast %94 : vector<1xf32> to vector<1x1xf32>
      %96 = arith.addf %93, %95 : vector<1x1xf32>
      %c0_72 = arith.constant 0 : index
      %c0_73 = arith.constant 0 : index
      %97 = vector.load %arg13[%c0_72, %c0_73] : memref<1x1xf32, #tpu.memory_space<vmem>>, vector<1x1xf32>
      tpu.vector_store %arg13[%c0_72, %c0_73], %96 {strides = array<i32>} : memref<1x1xf32, #tpu.memory_space<vmem>>, vector<1x1xf32>,
    } else {
    }
    return
  }
  func.func @transform_0(%arg0: i32, %arg1: i32) -> (i32, i32) {
    %c0_i32 = arith.constant 0 : i32
    %c0_i32_0 = arith.constant 0 : i32
    return %arg0, %c0_i32 : i32, i32
  }
  func.func @transform_1(%arg0: i32, %arg1: i32) -> (i32, i32) {
    %c0_i32 = arith.constant 0 : i32
    %c0_i32_0 = arith.constant 0 : i32
    %c0_i32_1 = arith.constant 0 : i32
    return %c0_i32, %c0_i32_0 : i32, i32
  }
  func.func @transform_2(%arg0: i32, %arg1: i32) -> (i32, i32) {
    %c0_i32 = arith.constant 0 : i32
    %c0_i32_0 = arith.constant 0 : i32
    %c0_i32_1 = arith.constant 0 : i32
    return %c0_i32, %c0_i32_0 : i32, i32
  }
  func.func @transform_3(%arg0: i32, %arg1: i32) -> (i32, i32) {
    %c0_i32 = arith.constant 0 : i32
    %c0_i32_0 = arith.constant 0 : i32
    %c0_i32_1 = arith.constant 0 : i32
    return %c0_i32, %c0_i32_0 : i32, i32
  }
  func.func @transform_4(%arg0: i32, %arg1: i32) -> (i32, i32) {
    %c0_i32 = arith.constant 0 : i32
    %c0_i32_0 = arith.constant 0 : i32
    %c0_i32_1 = arith.constant 0 : i32
    return %c0_i32, %c0_i32_0 : i32, i32
  }
  func.func @transform_5(%arg0: i32, %arg1: i32) -> (i32, i32) {
    %c0_i32 = arith.constant 0 : i32
    %c0_i32_0 = arith.constant 0 : i32
    return %c0_i32, %arg1 : i32, i32
  }
  func.func @transform_6(%arg0: i32, %arg1: i32) -> (i32, i32) {
    %c0_i32 = arith.constant 0 : i32
    %c0_i32_0 = arith.constant 0 : i32
    return %arg0, %c0_i32 : i32, i32
  }
  func.func @transform_7(%arg0: i32, %arg1: i32) -> (i32, i32) {
    %c0_i32 = arith.constant 0 : i32
    %c0_i32_0 = arith.constant 0 : i32
    return %arg0, %c0_i32 : i32, i32
  }
  func.func @transform_8(%arg0: i32, %arg1: i32) -> (i32, i32) {
    %c0_i32 = arith.constant 0 : i32
    %c0_i32_0 = arith.constant 0 : i32
    return %arg0, %c0_i32 : i32, i32
  }
  func.func @transform_9(%arg0: i32, %arg1: i32) -> (i32, i32) {
    %c0_i32 = arith.constant 0 : i32
    %c0_i32_0 = arith.constant 0 : i32
    return %arg0, %c0_i32 : i32, i32
  }
  func.func @transform_10(%arg0: i32, %arg1: i32) -> (i32, i32) {
    %c0_i32 = arith.constant 0 : i32
    %c0_i32_0 = arith.constant 0 : i32
    %c0_i32_1 = arith.constant 0 : i32
    return %c0_i32, %c0_i32_0 : i32, i32
  }
  func.func @transform_11(%arg0: i32, %arg1: i32) -> (i32, i32) {
    %c0_i32 = arith.constant 0 : i32
    %c0_i32_0 = arith.constant 0 : i32
    %c0_i32_1 = arith.constant 0 : i32
    return %c0_i32, %c0_i32_0 : i32, i32
  }
}

</mosaic_0001>

<llo_original>
// kernel: _lambda_.6
$region0: #{_lambda_.6}
  #allocation0 [shape = 'u32[]', space=smem, size = 0x4, offset = 0x4, fixed_abs, tag = 'smem constant byte address 0x4 - core index']
  #allocation1 [shape = 'u32[144,128]{1,0:T(1,128)}', space=vmem, size = 0x12000, scoped, tag = 'internal scratch']
  %s0 = inlined_call_operand.vmem [shape: f32[32,64], index: 0, kind: input, shape index: {}]
  %s1 = inlined_call_operand.vmem [shape: f32[32,64], index: 1, kind: input, shape index: {}]
  %s2 = inlined_call_operand.vmem [shape: bf16[64,64], index: 2, kind: input, shape index: {}]
  %s3 = inlined_call_operand.vmem [shape: f32[1,64], index: 3, kind: input, shape index: {}]
  %s4 = inlined_call_operand.vmem [shape: f32[32,64], index: 4, kind: output, shape index: {}]
  %s5 = sld [smem:[#allocation0]]
  $region49: #{_lambda_.6} parent=0
    _
  %s7 = ssub.s32 1, %s5
  %s8 = scalar_select 0, %s7, %s5
  loop: start=0, step=1, limit=4
  $region2: #{_lambda_.6} parent=0 // loop_pre_header
    _
  $region3: #{_lambda_.6} parent=0 // loop_header
    %s10 = sphi 0, %s14
    %p11 = scmp.ge.s32.totalorder %s10, 4
    %s20 = sphi 0, %s22
    %s23 = sphi 0, %s20
    %s24 = sphi 0, %s23
    %s40 = sphi 0, %s24
    %s46 = sphi 0, %s48
    %s49 = sphi 0, %s46
    %s50 = sphi 0, %s49
    %s66 = sphi 0, %s50
    %s70 = sphi 0, %s70
    %s72 = sphi 0, %s70
    %s73 = sphi 0, %s72
    %s87 = sphi 0, %s73
    %s91 = sphi 0, %s91
    %s93 = sphi 0, %s91
    %s94 = sphi 0, %s93
    %s108 = sphi 0, %s94
    %s114 = sphi 0, %s116
    %s117 = sphi 0, %s114
    %s118 = sphi 0, %s117
    %s134 = sphi 0, %s118
  $region4: #{_lambda_.6} parent=0 // loop_header_branch
    %13 = sbr.rel (%p11) target = $region8
  $region5: #{_lambda_.6} parent=0 // loop_body
    %s15 = ssub.s32 %s10, 1
    %s16 = ssub.s32 %s10, 2
    %s17 = sadd.s32 %s10, 1
    %s18 = ssub.s32 %s10, %s17
    %p19 = scmp.eq.s32.totalorder %s18, 0
    %s21 = sadd.s32 %s20, 1
    %s22 = scalar_select %p19, %s20, %s21
    %p25 = pneg %p19
    %p26 = scmp.eq.s32.totalorder %s10, 1
    %p27 = por %p25, %p26
    %p28 = scmp.ne.s32.totalorder %s20, %s23
    %p29 = scmp.eq.s32.totalorder %s10, 0
    %p30 = por %p28, %p29
    %p31 = scmp.ne.s32.totalorder %s20, %s23
    %p32 = scmp.eq.s32.totalorder %s15, 1
    %p33 = por %p31, %p32
    %p34 = scmp.ne.s32.totalorder %s23, %s24
    %p35 = scmp.eq.s32.totalorder %s15, 0
    %p36 = por %p34, %p35
    %p37 = scmp.ne.s32.totalorder %s23, %s24
    %p38 = scmp.eq.s32.totalorder %s16, 1
    %p39 = por %p37, %p38
    %p41 = scmp.ne.s32.totalorder %s24, %s40
    %p42 = scmp.eq.s32.totalorder %s16, 0
    %p43 = por %p41, %p42
    %s44 = ssub.s32 %s10, %s17
    %p45 = scmp.eq.s32.totalorder %s44, 0
    %s47 = sadd.s32 %s46, 1
    %s48 = scalar_select %p45, %s46, %s47
    %p51 = pneg %p45
    %p52 = scmp.eq.s32.totalorder %s10, 1
    %p53 = por %p51, %p52
    %p54 = scmp.ne.s32.totalorder %s46, %s49
    %p55 = scmp.eq.s32.totalorder %s10, 0
    %p56 = por %p54, %p55
    %p57 = scmp.ne.s32.totalorder %s46, %s49
    %p58 = scmp.eq.s32.totalorder %s15, 1
    %p59 = por %p57, %p58
    %p60 = scmp.ne.s32.totalorder %s49, %s50
    %p61 = scmp.eq.s32.totalorder %s15, 0
    %p62 = por %p60, %p61
    %p63 = scmp.ne.s32.totalorder %s49, %s50
    %p64 = scmp.eq.s32.totalorder %s16, 1
    %p65 = por %p63, %p64
    %p67 = scmp.ne.s32.totalorder %s50, %s66
    %p68 = scmp.eq.s32.totalorder %s16, 0
    %p69 = por %p67, %p68
    %s71 = sadd.s32 %s70, 1
    %p74 = scmp.eq.s32.totalorder %s10, 1
    %p75 = scmp.ne.s32.totalorder %s70, %s72
    %p76 = scmp.eq.s32.totalorder %s10, 0
    %p77 = por %p75, %p76
    %p78 = scmp.ne.s32.totalorder %s70, %s72
    %p79 = scmp.eq.s32.totalorder %s15, 1
    %p80 = por %p78, %p79
    %p81 = scmp.ne.s32.totalorder %s72, %s73
    %p82 = scmp.eq.s32.totalorder %s15, 0
    %p83 = por %p81, %p82
    %p84 = scmp.ne.s32.totalorder %s72, %s73
    %p85 = scmp.eq.s32.totalorder %s16, 1
    %p86 = por %p84, %p85
    %p88 = scmp.ne.s32.totalorder %s73, %s87
    %p89 = scmp.eq.s32.totalorder %s16, 0
    %p90 = por %p88, %p89
    %s92 = sadd.s32 %s91, 1
    %p95 = scmp.eq.s32.totalorder %s10, 1
    %p96 = scmp.ne.s32.totalorder %s91, %s93
    %p97 = scmp.eq.s32.totalorder %s10, 0
    %p98 = por %p96, %p97
    %p99 = scmp.ne.s32.totalorder %s91, %s93
    %p100 = scmp.eq.s32.totalorder %s15, 1
    %p101 = por %p99, %p100
    %p102 = scmp.ne.s32.totalorder %s93, %s94
    %p103 = scmp.eq.s32.totalorder %s15, 0
    %p104 = por %p102, %p103
    %p105 = scmp.ne.s32.totalorder %s93, %s94
    %p106 = scmp.eq.s32.totalorder %s16, 1
    %p107 = por %p105, %p106
    %p109 = scmp.ne.s32.totalorder %s94, %s108
    %p110 = scmp.eq.s32.totalorder %s16, 0
    %p111 = por %p109, %p110
    %s112 = ssub.s32 %s10, %s17
    %p113 = scmp.eq.s32.totalorder %s112, 0
    %s115 = sadd.s32 %s114, 1
    %s116 = scalar_select %p113, %s114, %s115
    %p119 = pneg %p113
    %p120 = scmp.eq.s32.totalorder %s10, 1
    %p121 = por %p119, %p120
    %p122 = scmp.ne.s32.totalorder %s114, %s117
    %p123 = scmp.eq.s32.totalorder %s10, 0
    %p124 = por %p122, %p123
    %p125 = scmp.ne.s32.totalorder %s114, %s117
    %p126 = scmp.eq.s32.totalorder %s15, 1
    %p127 = por %p125, %p126
    %p128 = scmp.ne.s32.totalorder %s117, %s118
    %p129 = scmp.eq.s32.totalorder %s15, 0
    %p130 = por %p128, %p129
    %p131 = scmp.ne.s32.totalorder %s117, %s118
    %p132 = scmp.eq.s32.totalorder %s16, 1
    %p133 = por %p131, %p132
    %p135 = scmp.ne.s32.totalorder %s118, %s134
    %p136 = scmp.eq.s32.totalorder %s16, 0
    %p137 = por %p135, %p136
    %p138 = scmp.le.s32.totalorder 1, %s10
    %p139 = scmp.lt.s32.totalorder %s10, 3
    %p140 = pnand %p138, %p139
    %p141 = pneg %p140
    // Predicated region
    $region9: #{_lambda_.6} parent=5 // pred_check
      _
    $region10: #{_lambda_.6} parent=5 // pred_check_branch
      %143 = sbr.rel (%p140) target = $region12
    $region11: #{_lambda_.6} parent=5 // pred_region
      %s144 = ssub.s32 %s10, 1
      // Predicated region
      $region13: #{_lambda_.6} parent=11 // pred_check
        %p145 = pneg %p83
      $region14: #{_lambda_.6} parent=11 // pred_check_branch
        %147 = sbr.rel (%p145) target = $region16
      $region15: #{_lambda_.6} parent=11 // pred_region
        _
      $region16: #{_lambda_.6} parent=11 // pred_fallthru
        _
      // Predicated region
      $region17: #{_lambda_.6} parent=11 // pred_check
        %p148 = pneg %p104
      $region18: #{_lambda_.6} parent=11 // pred_check_branch
        %150 = sbr.rel (%p148) target = $region20
      $region19: #{_lambda_.6} parent=11 // pred_region
        _
      $region20: #{_lambda_.6} parent=11 // pred_fallthru
        _
    $region12: #{_lambda_.6} parent=5 // pred_fallthru
      _
    %p151 = scmp.lt.s32.totalorder %s10, 2
    // Predicated region
    $region21: #{_lambda_.6} parent=5 // pred_check
      %p152 = pneg %p151
    $region22: #{_lambda_.6} parent=5 // pred_check_branch
      %154 = sbr.rel (%p152) target = $region24
    $region23: #{_lambda_.6} parent=5 // pred_region
      // Predicated region
      $region25: #{_lambda_.6} parent=23 // pred_check
        %p155 = pneg %p30
      $region26: #{_lambda_.6} parent=23 // pred_check_branch
        %157 = sbr.rel (%p155) target = $region28
      $region27: #{_lambda_.6} parent=23 // pred_region
        %s158 = smul.u32 2, %s10
        %p159 = scmp.lt.s32.totalorder %s158, 3
        %s160 = scalar_select %p159, %s158, 3
        %s161 = smul.addr %s160, 8
        %s162 = scalar_lea.vmem %s0, %s161
        %s163 = smul.u32 2, %s10
      $region28: #{_lambda_.6} parent=23 // pred_fallthru
        _
      // Predicated region
      $region29: #{_lambda_.6} parent=23 // pred_check
        %p164 = pneg %p56
      $region30: #{_lambda_.6} parent=23 // pred_check_branch
        %166 = sbr.rel (%p164) target = $region32
      $region31: #{_lambda_.6} parent=23 // pred_region
        %s167 = smul.u32 2, %s10
        %p168 = scmp.lt.s32.totalorder %s167, 3
        %s169 = scalar_select %p168, %s167, 3
        %s170 = smul.addr %s169, 8
        %s171 = scalar_lea.vmem %s1, %s170
        %s172 = smul.u32 2, %s10
      $region32: #{_lambda_.6} parent=23 // pred_fallthru
        _
    $region24: #{_lambda_.6} parent=5 // pred_fallthru
      _
    %p173 = scmp.le.s32.totalorder 1, %s10
    %p174 = scmp.lt.s32.totalorder %s10, 3
    %p175 = pnand %p173, %p174
    %p176 = pneg %p175
    // Predicated region
    $region33: #{_lambda_.6} parent=5 // pred_check
      _
    $region34: #{_lambda_.6} parent=5 // pred_check_branch
      %178 = sbr.rel (%p175) target = $region36
    $region35: #{_lambda_.6} parent=5 // pred_region
      %s179 = ssub.s32 %s10, 1
      %s180 = smul.u32 2, %s15
      %p181 = scmp.lt.s32.totalorder %s180, 3
      %s182 = scalar_select %p181, %s180, 3
      %s183 = smul.addr %s182, 8
      %s184 = scalar_lea.vmem %s0, %s183
      %p185 = pneg %p36
      %p186 = pneg %p33
      %s187 = smul.u32 2, %s15
      %p188 = scmp.lt.s32.totalorder %s187, 3
      %s189 = scalar_select %p188, %s187, 3
      %s190 = smul.addr %s189, 8
      %s191 = scalar_lea.vmem %s1, %s190
      %p192 = pneg %p62
      %p193 = pneg %p59
      %p194 = pneg %p83
      %p195 = pneg %p80
      %p196 = pneg %p104
      %p197 = pneg %p101
      %p198 = pneg %p130
      %p199 = pneg %p127
      %s200 = smul.u32 2, %s15
      %p201 = scmp.lt.s32.totalorder %s200, 3
      %s202 = scalar_select %p201, %s200, 3
      %s203 = smul.addr %s202, 8
      %s204 = scalar_lea.vmem %s4, %s203
      %s205 = smul.u32 2, %s15
      %p206 = scmp.lt.s32.totalorder %s205, 3
      %s207 = scalar_select %p206, %s205, 3
      %s208 = smul.addr %s207, 8
      %s209 = scalar_lea.vmem %s0, %s208
      %s210 = smul.u32 2, %s15
      %s211 = smul.u32 2, %s15
      %p212 = scmp.lt.s32.totalorder %s211, 3
      %s213 = scalar_select %p212, %s211, 3
      %s214 = smul.addr %s213, 8
      %s215 = scalar_lea.vmem %s1, %s214
      %s216 = smul.u32 2, %s15
      %s217 = smul.u32 2, %s15
      %p218 = scmp.lt.s32.totalorder %s217, 3
      %s219 = scalar_select %p218, %s217, 3
      %s220 = smul.addr %s219, 8
      %s221 = scalar_lea.vmem %s4, %s220
      %s222 = smul.u32 2, %s15
      %v224 = vld [vmem:[%s215] sm:$0xff]
      %v225 = vld [vmem:[%s215 + $0x8] sm:$0xff]
      %v226 = vpack.c.bf16 %v225, %v224
      %v227 = vld [vmem:[%s2] sm:$0xf]
      %v228 = vld [vmem:[%s2 + $0x4] sm:$0xf]
      %v229 = vld [vmem:[%s2 + $0x8] sm:$0xf]
      %v230 = vld [vmem:[%s2 + $0xc] sm:$0xf]
      %v231 = vld [vmem:[%s2 + $0x10] sm:$0xf]
      %v232 = vld [vmem:[%s2 + $0x14] sm:$0xf]
      %v233 = vld [vmem:[%s2 + $0x18] sm:$0xf]
      %v234 = vld [vmem:[%s2 + $0x1c] sm:$0xf]
      %v235 = vld [vmem:[%s3] sm:$0x1]
      %v237 = vlaneseq
      %v238 = vshrl.u32 %v237, 7
      %v239 = vsub.s32 0, %v238
      %v240 = vrot.slane %v235, %v239
      %v250 = vunpack.c.l.b16 %v227
      %v251 = vunpack.c.l.b16 %v228
      %v252 = vunpack.c.l.b16 %v229
      %v253 = vunpack.c.l.b16 %v230
      %v254 = vunpack.c.l.b16 %v231
      %v255 = vunpack.c.l.b16 %v232
      %v256 = vunpack.c.l.b16 %v233
      %v257 = vunpack.c.l.b16 %v234
      %v258 = vpack.c.b16 %v251, %v250
      %v259 = vpack.c.b16 %v253, %v252
      %v260 = vpack.c.b16 %v255, %v254
      %v261 = vpack.c.b16 %v257, %v256
      %vm266 = vcmask 523264
      %v268 = vsel %vm266, %v226, 0
      %270 = vmatprep.subr.bf16.mxu0 0
      %271 = vmatpush1.bf16.msra.mxu0 %v258
      %272 = vmatprep.subr.bf16.mxu0 0
      %273 = vmatpush1.bf16.msra.mxu0 %v259
      %274 = vmatprep.subr.bf16.mxu0 0
      %275 = vmatpush1.bf16.msra.mxu0 %v260
      %276 = vmatprep.subr.bf16.mxu0 0
      %277 = vmatpush1.bf16.msra.mxu0 %v261
      %278 = vmatprep.subr.bf16.mxu0 0
      %279 = vmatpush1.bf16.msra.mxu0 0
      %280 = vmatprep.subr.bf16.mxu0 0
      %281 = vmatpush1.bf16.msra.mxu0 0
      %282 = vmatprep.subr.bf16.mxu0 0
      %283 = vmatpush1.bf16.msra.mxu0 0
      %284 = vmatprep.subr.bf16.mxu0 0
      %285 = vmatpush1.bf16.msra.mxu0 0
      %286 = vmatprep.subr.bf16.mxu0 0
      %287 = vmatpush1.bf16.msra.mxu0 0
      %288 = vmatprep.subr.bf16.mxu0 0
      %289 = vmatpush1.bf16.msra.mxu0 0
      %290 = vmatprep.subr.bf16.mxu0 0
      %291 = vmatpush1.bf16.msra.mxu0 0
      %292 = vmatprep.subr.bf16.mxu0 0
      %293 = vmatpush1.bf16.msra.mxu0 0
      %294 = vmatprep.subr.bf16.mxu0 0
      %295 = vmatpush1.bf16.msra.mxu0 0
      %296 = vmatprep.subr.bf16.mxu0 0
      %297 = vmatpush1.bf16.msra.mxu0 0
      %298 = vmatprep.subr.bf16.mxu0 0
      %299 = vmatpush1.bf16.msra.mxu0 0
      %300 = vmatprep.subr.bf16.mxu0 0
      %301 = vmatpush1.bf16.msra.mxu0 0
      %302 = vmatprep.mubr.bf16.mxu0 0
      %303 = vmatmul.mubr.bf16.gmra.mrb[0].mxu0 %v268
      %v304 = vpop.f32.mrb[0].mxu0
      %v305 = vadd.f32 %v240, %v304
      %v306 = vpop.f32.mrb[0].mxu0
      %v307 = vpop.f32.mrb[0].mxu0
      %v308 = vadd.f32 %v240, %v307
      %v309 = vpop.f32.mrb[0].mxu0
      %310 = vdwg.mxu0
      %v311 = vld [vmem:[%s209] sm:$0xff]
      %v312 = vld [vmem:[%s209 + $0x8] sm:$0xff]
      %v313 = vadd.f32 %v311, %v305
      %v314 = vadd.f32 %v312, %v308
      %315 = vst.msk [vmem:[%s221] sm:$0xff] %vm266, %v313
      %316 = vst.msk [vmem:[%s221 + $0x8] sm:$0xff] %vm266, %v314
      %s317 = smul.u32 2, %s15
      %p318 = scmp.lt.s32.totalorder %s317, 3
      %s319 = scalar_select %p318, %s317, 3
      %s320 = smul.addr %s319, 8
      %s321 = scalar_lea.vmem %s4, %s320
      // Predicated region
      $region37: #{_lambda_.6} parent=35 // pred_check
        %p322 = pneg %p127
      $region38: #{_lambda_.6} parent=35 // pred_check_branch
        %324 = sbr.rel (%p322) target = $region40
      $region39: #{_lambda_.6} parent=35 // pred_region
        %s325 = smul.u32 2, %s15
      $region40: #{_lambda_.6} parent=35 // pred_fallthru
        _
    $region36: #{_lambda_.6} parent=5 // pred_fallthru
      _
    %p326 = scmp.le.s32.totalorder 2, %s10
    // Predicated region
    $region41: #{_lambda_.6} parent=5 // pred_check
      %p327 = pneg %p326
    $region42: #{_lambda_.6} parent=5 // pred_check_branch
      %329 = sbr.rel (%p327) target = $region44
    $region43: #{_lambda_.6} parent=5 // pred_region
      %s330 = ssub.s32 %s10, 2
      // Predicated region
      $region45: #{_lambda_.6} parent=43 // pred_check
        %p331 = pneg %p133
      $region46: #{_lambda_.6} parent=43 // pred_check_branch
        %333 = sbr.rel (%p331) target = $region48
      $region47: #{_lambda_.6} parent=43 // pred_region
        %s334 = smul.u32 2, %s16
        %p335 = scmp.lt.s32.totalorder %s334, 3
        %s336 = scalar_select %p335, %s334, 3
        %s337 = smul.addr %s336, 8
        %s338 = scalar_lea.vmem %s4, %s337
      $region48: #{_lambda_.6} parent=43 // pred_fallthru
        _
    $region44: #{_lambda_.6} parent=5 // pred_fallthru
      _
  $region6: #{_lambda_.6} parent=0 // loop_footer
    %s14 = sadd.s32 1, %s10
  $region7: #{_lambda_.6} parent=0 // loop_footer_branch
    %9 = sbr.rel target = $region3
  $region8: #{_lambda_.6} parent=0 // loop_exit
    _

// kernel: _lambda_.8
$region0: #{_lambda_.8}
  #allocation0 [shape = 'u32[]', space=smem, size = 0x4, offset = 0x4, fixed_abs, tag = 'smem constant byte address 0x4 - core index']
  #allocation1 [shape = 'u32[144,128]{1,0:T(1,128)}', space=vmem, size = 0x12000, scoped, tag = 'internal scratch']
  %s0 = inlined_call_operand.vmem [shape: f32[32,64], index: 0, kind: input, shape index: {}]
  %s1 = inlined_call_operand.vmem [shape: bf16[32,64], index: 1, kind: input, shape index: {}]
  %s2 = inlined_call_operand.vmem [shape: bf16[64,64], index: 2, kind: input, shape index: {}]
  %s3 = inlined_call_operand.vmem [shape: f32[1,64], index: 3, kind: input, shape index: {}]
  %s4 = inlined_call_operand.vmem [shape: f32[1,64], index: 4, kind: input, shape index: {}]
  %s5 = inlined_call_operand.vmem [shape: f32[1,64], index: 5, kind: input, shape index: {}]
  %s6 = inlined_call_operand.vmem [shape: bf16[64,256], index: 6, kind: input, shape index: {}]
  %s7 = inlined_call_operand.vmem [shape: f32[1,256], index: 7, kind: input, shape index: {}]
  %s8 = inlined_call_operand.vmem [shape: bf16[256,64], index: 8, kind: input, shape index: {}]
  %s9 = inlined_call_operand.vmem [shape: f32[1,64], index: 9, kind: input, shape index: {}]
  %s10 = inlined_call_operand.vmem [shape: f32[32,64], index: 10, kind: output, shape index: {}]
  %s11 = sld [smem:[#allocation0]]
  $region73: #{_lambda_.8} parent=0
    _
  %s13 = ssub.s32 1, %s11
  %s14 = scalar_select 0, %s13, %s11
  loop: start=0, step=1, limit=4
  $region2: #{_lambda_.8} parent=0 // loop_pre_header
    _
  $region3: #{_lambda_.8} parent=0 // loop_header
    %s16 = sphi 0, %s20
    %p17 = scmp.ge.s32.totalorder %s16, 4
    %s26 = sphi 0, %s28
    %s29 = sphi 0, %s26
    %s30 = sphi 0, %s29
    %s46 = sphi 0, %s30
    %s52 = sphi 0, %s54
    %s55 = sphi 0, %s52
    %s56 = sphi 0, %s55
    %s72 = sphi 0, %s56
    %s76 = sphi 0, %s76
    %s78 = sphi 0, %s76
    %s79 = sphi 0, %s78
    %s93 = sphi 0, %s79
    %s97 = sphi 0, %s97
    %s99 = sphi 0, %s97
    %s100 = sphi 0, %s99
    %s114 = sphi 0, %s100
    %s118 = sphi 0, %s118
    %s120 = sphi 0, %s118
    %s121 = sphi 0, %s120
    %s135 = sphi 0, %s121
    %s139 = sphi 0, %s139
    %s141 = sphi 0, %s139
    %s142 = sphi 0, %s141
    %s156 = sphi 0, %s142
    %s160 = sphi 0, %s160
    %s162 = sphi 0, %s160
    %s163 = sphi 0, %s162
    %s177 = sphi 0, %s163
    %s181 = sphi 0, %s181
    %s183 = sphi 0, %s181
    %s184 = sphi 0, %s183
    %s198 = sphi 0, %s184
    %s202 = sphi 0, %s202
    %s204 = sphi 0, %s202
    %s205 = sphi 0, %s204
    %s219 = sphi 0, %s205
    %s223 = sphi 0, %s223
    %s225 = sphi 0, %s223
    %s226 = sphi 0, %s225
    %s240 = sphi 0, %s226
    %s246 = sphi 0, %s248
    %s249 = sphi 0, %s246
    %s250 = sphi 0, %s249
    %s266 = sphi 0, %s250
  $region4: #{_lambda_.8} parent=0 // loop_header_branch
    %19 = sbr.rel (%p17) target = $region8
  $region5: #{_lambda_.8} parent=0 // loop_body
    %s21 = ssub.s32 %s16, 1
    %s22 = ssub.s32 %s16, 2
    %s23 = sadd.s32 %s16, 1
    %s24 = ssub.s32 %s16, %s23
    %p25 = scmp.eq.s32.totalorder %s24, 0
    %s27 = sadd.s32 %s26, 1
    %s28 = scalar_select %p25, %s26, %s27
    %p31 = pneg %p25
    %p32 = scmp.eq.s32.totalorder %s16, 1
    %p33 = por %p31, %p32
    %p34 = scmp.ne.s32.totalorder %s26, %s29
    %p35 = scmp.eq.s32.totalorder %s16, 0
    %p36 = por %p34, %p35
    %p37 = scmp.ne.s32.totalorder %s26, %s29
    %p38 = scmp.eq.s32.totalorder %s21, 1
    %p39 = por %p37, %p38
    %p40 = scmp.ne.s32.totalorder %s29, %s30
    %p41 = scmp.eq.s32.totalorder %s21, 0
    %p42 = por %p40, %p41
    %p43 = scmp.ne.s32.totalorder %s29, %s30
    %p44 = scmp.eq.s32.totalorder %s22, 1
    %p45 = por %p43, %p44
    %p47 = scmp.ne.s32.totalorder %s30, %s46
    %p48 = scmp.eq.s32.totalorder %s22, 0
    %p49 = por %p47, %p48
    %s50 = ssub.s32 %s16, %s23
    %p51 = scmp.eq.s32.totalorder %s50, 0
    %s53 = sadd.s32 %s52, 1
    %s54 = scalar_select %p51, %s52, %s53
    %p57 = pneg %p51
    %p58 = scmp.eq.s32.totalorder %s16, 1
    %p59 = por %p57, %p58
    %p60 = scmp.ne.s32.totalorder %s52, %s55
    %p61 = scmp.eq.s32.totalorder %s16, 0
    %p62 = por %p60, %p61
    %p63 = scmp.ne.s32.totalorder %s52, %s55
    %p64 = scmp.eq.s32.totalorder %s21, 1
    %p65 = por %p63, %p64
    %p66 = scmp.ne.s32.totalorder %s55, %s56
    %p67 = scmp.eq.s32.totalorder %s21, 0
    %p68 = por %p66, %p67
    %p69 = scmp.ne.s32.totalorder %s55, %s56
    %p70 = scmp.eq.s32.totalorder %s22, 1
    %p71 = por %p69, %p70
    %p73 = scmp.ne.s32.totalorder %s56, %s72
    %p74 = scmp.eq.s32.totalorder %s22, 0
    %p75 = por %p73, %p74
    %s77 = sadd.s32 %s76, 1
    %p80 = scmp.eq.s32.totalorder %s16, 1
    %p81 = scmp.ne.s32.totalorder %s76, %s78
    %p82 = scmp.eq.s32.totalorder %s16, 0
    %p83 = por %p81, %p82
    %p84 = scmp.ne.s32.totalorder %s76, %s78
    %p85 = scmp.eq.s32.totalorder %s21, 1
    %p86 = por %p84, %p85
    %p87 = scmp.ne.s32.totalorder %s78, %s79
    %p88 = scmp.eq.s32.totalorder %s21, 0
    %p89 = por %p87, %p88
    %p90 = scmp.ne.s32.totalorder %s78, %s79
    %p91 = scmp.eq.s32.totalorder %s22, 1
    %p92 = por %p90, %p91
    %p94 = scmp.ne.s32.totalorder %s79, %s93
    %p95 = scmp.eq.s32.totalorder %s22, 0
    %p96 = por %p94, %p95
    %s98 = sadd.s32 %s97, 1
    %p101 = scmp.eq.s32.totalorder %s16, 1
    %p102 = scmp.ne.s32.totalorder %s97, %s99
    %p103 = scmp.eq.s32.totalorder %s16, 0
    %p104 = por %p102, %p103
    %p105 = scmp.ne.s32.totalorder %s97, %s99
    %p106 = scmp.eq.s32.totalorder %s21, 1
    %p107 = por %p105, %p106
    %p108 = scmp.ne.s32.totalorder %s99, %s100
    %p109 = scmp.eq.s32.totalorder %s21, 0
    %p110 = por %p108, %p109
    %p111 = scmp.ne.s32.totalorder %s99, %s100
    %p112 = scmp.eq.s32.totalorder %s22, 1
    %p113 = por %p111, %p112
    %p115 = scmp.ne.s32.totalorder %s100, %s114
    %p116 = scmp.eq.s32.totalorder %s22, 0
    %p117 = por %p115, %p116
    %s119 = sadd.s32 %s118, 1
    %p122 = scmp.eq.s32.totalorder %s16, 1
    %p123 = scmp.ne.s32.totalorder %s118, %s120
    %p124 = scmp.eq.s32.totalorder %s16, 0
    %p125 = por %p123, %p124
    %p126 = scmp.ne.s32.totalorder %s118, %s120
    %p127 = scmp.eq.s32.totalorder %s21, 1
    %p128 = por %p126, %p127
    %p129 = scmp.ne.s32.totalorder %s120, %s121
    %p130 = scmp.eq.s32.totalorder %s21, 0
    %p131 = por %p129, %p130
    %p132 = scmp.ne.s32.totalorder %s120, %s121
    %p133 = scmp.eq.s32.totalorder %s22, 1
    %p134 = por %p132, %p133
    %p136 = scmp.ne.s32.totalorder %s121, %s135
    %p137 = scmp.eq.s32.totalorder %s22, 0
    %p138 = por %p136, %p137
    %s140 = sadd.s32 %s139, 1
    %p143 = scmp.eq.s32.totalorder %s16, 1
    %p144 = scmp.ne.s32.totalorder %s139, %s141
    %p145 = scmp.eq.s32.totalorder %s16, 0
    %p146 = por %p144, %p145
    %p147 = scmp.ne.s32.totalorder %s139, %s141
    %p148 = scmp.eq.s32.totalorder %s21, 1
    %p149 = por %p147, %p148
    %p150 = scmp.ne.s32.totalorder %s141, %s142
    %p151 = scmp.eq.s32.totalorder %s21, 0
    %p152 = por %p150, %p151
    %p153 = scmp.ne.s32.totalorder %s141, %s142
    %p154 = scmp.eq.s32.totalorder %s22, 1
    %p155 = por %p153, %p154
    %p157 = scmp.ne.s32.totalorder %s142, %s156
    %p158 = scmp.eq.s32.totalorder %s22, 0
    %p159 = por %p157, %p158
    %s161 = sadd.s32 %s160, 1
    %p164 = scmp.eq.s32.totalorder %s16, 1
    %p165 = scmp.ne.s32.totalorder %s160, %s162
    %p166 = scmp.eq.s32.totalorder %s16, 0
    %p167 = por %p165, %p166
    %p168 = scmp.ne.s32.totalorder %s160, %s162
    %p169 = scmp.eq.s32.totalorder %s21, 1
    %p170 = por %p168, %p169
    %p171 = scmp.ne.s32.totalorder %s162, %s163
    %p172 = scmp.eq.s32.totalorder %s21, 0
    %p173 = por %p171, %p172
    %p174 = scmp.ne.s32.totalorder %s162, %s163
    %p175 = scmp.eq.s32.totalorder %s22, 1
    %p176 = por %p174, %p175
    %p178 = scmp.ne.s32.totalorder %s163, %s177
    %p179 = scmp.eq.s32.totalorder %s22, 0
    %p180 = por %p178, %p179
    %s182 = sadd.s32 %s181, 1
    %p185 = scmp.eq.s32.totalorder %s16, 1
    %p186 = scmp.ne.s32.totalorder %s181, %s183
    %p187 = scmp.eq.s32.totalorder %s16, 0
    %p188 = por %p186, %p187
    %p189 = scmp.ne.s32.totalorder %s181, %s183
    %p190 = scmp.eq.s32.totalorder %s21, 1
    %p191 = por %p189, %p190
    %p192 = scmp.ne.s32.totalorder %s183, %s184
    %p193 = scmp.eq.s32.totalorder %s21, 0
    %p194 = por %p192, %p193
    %p195 = scmp.ne.s32.totalorder %s183, %s184
    %p196 = scmp.eq.s32.totalorder %s22, 1
    %p197 = por %p195, %p196
    %p199 = scmp.ne.s32.totalorder %s184, %s198
    %p200 = scmp.eq.s32.totalorder %s22, 0
    %p201 = por %p199, %p200
    %s203 = sadd.s32 %s202, 1
    %p206 = scmp.eq.s32.totalorder %s16, 1
    %p207 = scmp.ne.s32.totalorder %s202, %s204
    %p208 = scmp.eq.s32.totalorder %s16, 0
    %p209 = por %p207, %p208
    %p210 = scmp.ne.s32.totalorder %s202, %s204
    %p211 = scmp.eq.s32.totalorder %s21, 1
    %p212 = por %p210, %p211
    %p213 = scmp.ne.s32.totalorder %s204, %s205
    %p214 = scmp.eq.s32.totalorder %s21, 0
    %p215 = por %p213, %p214
    %p216 = scmp.ne.s32.totalorder %s204, %s205
    %p217 = scmp.eq.s32.totalorder %s22, 1
    %p218 = por %p216, %p217
    %p220 = scmp.ne.s32.totalorder %s205, %s219
    %p221 = scmp.eq.s32.totalorder %s22, 0
    %p222 = por %p220, %p221
    %s224 = sadd.s32 %s223, 1
    %p227 = scmp.eq.s32.totalorder %s16, 1
    %p228 = scmp.ne.s32.totalorder %s223, %s225
    %p229 = scmp.eq.s32.totalorder %s16, 0
    %p230 = por %p228, %p229
    %p231 = scmp.ne.s32.totalorder %s223, %s225
    %p232 = scmp.eq.s32.totalorder %s21, 1
    %p233 = por %p231, %p232
    %p234 = scmp.ne.s32.totalorder %s225, %s226
    %p235 = scmp.eq.s32.totalorder %s21, 0
    %p236 = por %p234, %p235
    %p237 = scmp.ne.s32.totalorder %s225, %s226
    %p238 = scmp.eq.s32.totalorder %s22, 1
    %p239 = por %p237, %p238
    %p241 = scmp.ne.s32.totalorder %s226, %s240
    %p242 = scmp.eq.s32.totalorder %s22, 0
    %p243 = por %p241, %p242
    %s244 = ssub.s32 %s16, %s23
    %p245 = scmp.eq.s32.totalorder %s244, 0
    %s247 = sadd.s32 %s246, 1
    %s248 = scalar_select %p245, %s246, %s247
    %p251 = pneg %p245
    %p252 = scmp.eq.s32.totalorder %s16, 1
    %p253 = por %p251, %p252
    %p254 = scmp.ne.s32.totalorder %s246, %s249
    %p255 = scmp.eq.s32.totalorder %s16, 0
    %p256 = por %p254, %p255
    %p257 = scmp.ne.s32.totalorder %s246, %s249
    %p258 = scmp.eq.s32.totalorder %s21, 1
    %p259 = por %p257, %p258
    %p260 = scmp.ne.s32.totalorder %s249, %s250
    %p261 = scmp.eq.s32.totalorder %s21, 0
    %p262 = por %p260, %p261
    %p263 = scmp.ne.s32.totalorder %s249, %s250
    %p264 = scmp.eq.s32.totalorder %s22, 1
    %p265 = por %p263, %p264
    %p267 = scmp.ne.s32.totalorder %s250, %s266
    %p268 = scmp.eq.s32.totalorder %s22, 0
    %p269 = por %p267, %p268
    %p270 = scmp.le.s32.totalorder 1, %s16
    %p271 = scmp.lt.s32.totalorder %s16, 3
    %p272 = pnand %p270, %p271
    %p273 = pneg %p272
    // Predicated region
    $region9: #{_lambda_.8} parent=5 // pred_check
      _
    $region10: #{_lambda_.8} parent=5 // pred_check_branch
      %275 = sbr.rel (%p272) target = $region12
    $region11: #{_lambda_.8} parent=5 // pred_region
      %s276 = ssub.s32 %s16, 1
      // Predicated region
      $region13: #{_lambda_.8} parent=11 // pred_check
        %p277 = pneg %p89
      $region14: #{_lambda_.8} parent=11 // pred_check_branch
        %279 = sbr.rel (%p277) target = $region16
      $region15: #{_lambda_.8} parent=11 // pred_region
        _
      $region16: #{_lambda_.8} parent=11 // pred_fallthru
        _
      // Predicated region
      $region17: #{_lambda_.8} parent=11 // pred_check
        %p280 = pneg %p110
      $region18: #{_lambda_.8} parent=11 // pred_check_branch
        %282 = sbr.rel (%p280) target = $region20
      $region19: #{_lambda_.8} parent=11 // pred_region
        _
      $region20: #{_lambda_.8} parent=11 // pred_fallthru
        _
      // Predicated region
      $region21: #{_lambda_.8} parent=11 // pred_check
        %p283 = pneg %p131
      $region22: #{_lambda_.8} parent=11 // pred_check_branch
        %285 = sbr.rel (%p283) target = $region24
      $region23: #{_lambda_.8} parent=11 // pred_region
        _
      $region24: #{_lambda_.8} parent=11 // pred_fallthru
        _
      // Predicated region
      $region25: #{_lambda_.8} parent=11 // pred_check
        %p286 = pneg %p152
      $region26: #{_lambda_.8} parent=11 // pred_check_branch
        %288 = sbr.rel (%p286) target = $region28
      $region27: #{_lambda_.8} parent=11 // pred_region
        _
      $region28: #{_lambda_.8} parent=11 // pred_fallthru
        _
      // Predicated region
      $region29: #{_lambda_.8} parent=11 // pred_check
        %p289 = pneg %p173
      $region30: #{_lambda_.8} parent=11 // pred_check_branch
        %291 = sbr.rel (%p289) target = $region32
      $region31: #{_lambda_.8} parent=11 // pred_region
        _
      $region32: #{_lambda_.8} parent=11 // pred_fallthru
        _
      // Predicated region
      $region33: #{_lambda_.8} parent=11 // pred_check
        %p292 = pneg %p194
      $region34: #{_lambda_.8} parent=11 // pred_check_branch
        %294 = sbr.rel (%p292) target = $region36
      $region35: #{_lambda_.8} parent=11 // pred_region
        _
      $region36: #{_lambda_.8} parent=11 // pred_fallthru
        _
      // Predicated region
      $region37: #{_lambda_.8} parent=11 // pred_check
        %p295 = pneg %p215
      $region38: #{_lambda_.8} parent=11 // pred_check_branch
        %297 = sbr.rel (%p295) target = $region40
      $region39: #{_lambda_.8} parent=11 // pred_region
        _
      $region40: #{_lambda_.8} parent=11 // pred_fallthru
        _
      // Predicated region
      $region41: #{_lambda_.8} parent=11 // pred_check
        %p298 = pneg %p236
      $region42: #{_lambda_.8} parent=11 // pred_check_branch
        %300 = sbr.rel (%p298) target = $region44
      $region43: #{_lambda_.8} parent=11 // pred_region
        _
      $region44: #{_lambda_.8} parent=11 // pred_fallthru
        _
    $region12: #{_lambda_.8} parent=5 // pred_fallthru
      _
    %p301 = scmp.lt.s32.totalorder %s16, 2
    // Predicated region
    $region45: #{_lambda_.8} parent=5 // pred_check
      %p302 = pneg %p301
    $region46: #{_lambda_.8} parent=5 // pred_check_branch
      %304 = sbr.rel (%p302) target = $region48
    $region47: #{_lambda_.8} parent=5 // pred_region
      // Predicated region
      $region49: #{_lambda_.8} parent=47 // pred_check
        %p305 = pneg %p36
      $region50: #{_lambda_.8} parent=47 // pred_check_branch
        %307 = sbr.rel (%p305) target = $region52
      $region51: #{_lambda_.8} parent=47 // pred_region
        %s308 = smul.u32 2, %s16
        %p309 = scmp.lt.s32.totalorder %s308, 3
        %s310 = scalar_select %p309, %s308, 3
        %s311 = smul.addr %s310, 8
        %s312 = scalar_lea.vmem %s0, %s311
        %s313 = smul.u32 2, %s16
      $region52: #{_lambda_.8} parent=47 // pred_fallthru
        _
      // Predicated region
      $region53: #{_lambda_.8} parent=47 // pred_check
        %p314 = pneg %p62
      $region54: #{_lambda_.8} parent=47 // pred_check_branch
        %316 = sbr.rel (%p314) target = $region56
      $region55: #{_lambda_.8} parent=47 // pred_region
        %s317 = smul.u32 2, %s16
        %p318 = scmp.lt.s32.totalorder %s317, 3
        %s319 = scalar_select %p318, %s317, 3
        %s320 = smul.addr %s319, 4
        %s321 = scalar_lea.vmem %s1, %s320
        %s322 = smul.u32 2, %s16
      $region56: #{_lambda_.8} parent=47 // pred_fallthru
        _
    $region48: #{_lambda_.8} parent=5 // pred_fallthru
      _
    %p323 = scmp.le.s32.totalorder 1, %s16
    %p324 = scmp.lt.s32.totalorder %s16, 3
    %p325 = pnand %p323, %p324
    %p326 = pneg %p325
    // Predicated region
    $region57: #{_lambda_.8} parent=5 // pred_check
      _
    $region58: #{_lambda_.8} parent=5 // pred_check_branch
      %328 = sbr.rel (%p325) target = $region60
    $region59: #{_lambda_.8} parent=5 // pred_region
      %s329 = ssub.s32 %s16, 1
      %s330 = smul.u32 2, %s21
      %p331 = scmp.lt.s32.totalorder %s330, 3
      %s332 = scalar_select %p331, %s330, 3
      %s333 = smul.addr %s332, 8
      %s334 = scalar_lea.vmem %s0, %s333
      %p335 = pneg %p42
      %p336 = pneg %p39
      %s337 = smul.u32 2, %s21
      %p338 = scmp.lt.s32.totalorder %s337, 3
      %s339 = scalar_select %p338, %s337, 3
      %s340 = smul.addr %s339, 4
      %s341 = scalar_lea.vmem %s1, %s340
      %p342 = pneg %p68
      %p343 = pneg %p65
      %p344 = pneg %p89
      %p345 = pneg %p86
      %p346 = pneg %p110
      %p347 = pneg %p107
      %p348 = pneg %p131
      %p349 = pneg %p128
      %p350 = pneg %p152
      %p351 = pneg %p149
      %p352 = pneg %p173
      %p353 = pneg %p170
      %p354 = pneg %p194
      %p355 = pneg %p191
      %p356 = pneg %p215
      %p357 = pneg %p212
      %p358 = pneg %p236
      %p359 = pneg %p233
      %p360 = pneg %p262
      %p361 = pneg %p259
      %s362 = smul.u32 2, %s21
      %p363 = scmp.lt.s32.totalorder %s362, 3
      %s364 = scalar_select %p363, %s362, 3
      %s365 = smul.addr %s364, 8
      %s366 = scalar_lea.vmem %s10, %s365
      %s367 = smul.u32 2, %s21
      %p368 = scmp.lt.s32.totalorder %s367, 3
      %s369 = scalar_select %p368, %s367, 3
      %s370 = smul.addr %s369, 8
      %s371 = scalar_lea.vmem %s0, %s370
      %s372 = smul.u32 2, %s21
      %s373 = smul.u32 2, %s21
      %p374 = scmp.lt.s32.totalorder %s373, 3
      %s375 = scalar_select %p374, %s373, 3
      %s376 = smul.addr %s375, 4
      %s377 = scalar_lea.vmem %s1, %s376
      %s378 = smul.u32 2, %s21
      %s379 = smul.u32 2, %s21
      %p380 = scmp.lt.s32.totalorder %s379, 3
      %s381 = scalar_select %p380, %s379, 3
      %s382 = smul.addr %s381, 8
      %s383 = scalar_lea.vmem %s10, %s382
      %s384 = smul.u32 2, %s21
      %v386 = vld [vmem:[%s371] sm:$0xff]
      %v387 = vld [vmem:[%s371 + $0x8] sm:$0xff]
      %v388 = vld [vmem:[%s377] sm:$0xf]
      %v389 = vld [vmem:[%s377 + $0x4] sm:$0xf]
      %v390 = vld [vmem:[%s2] sm:$0xf]
      %v391 = vld [vmem:[%s2 + $0x4] sm:$0xf]
      %v392 = vld [vmem:[%s2 + $0x8] sm:$0xf]
      %v393 = vld [vmem:[%s2 + $0xc] sm:$0xf]
      %v394 = vld [vmem:[%s2 + $0x10] sm:$0xf]
      %v395 = vld [vmem:[%s2 + $0x14] sm:$0xf]
      %v396 = vld [vmem:[%s2 + $0x18] sm:$0xf]
      %v397 = vld [vmem:[%s2 + $0x1c] sm:$0xf]
      %v398 = vld [vmem:[%s3] sm:$0x1]
      %v400 = vlaneseq
      %v401 = vshrl.u32 %v400, 7
      %v402 = vsub.s32 0, %v401
      %v403 = vrot.slane %v398, %v402
      %v407 = vunpack.c.l.b16 %v388
      %v408 = vunpack.c.l.b16 %v389
      %v409 = vpack.c.b16 %v408, %v407
      %v418 = vunpack.c.l.b16 %v390
      %v419 = vunpack.c.l.b16 %v391
      %v420 = vunpack.c.l.b16 %v392
      %v421 = vunpack.c.l.b16 %v393
      %v422 = vunpack.c.l.b16 %v394
      %v423 = vunpack.c.l.b16 %v395
      %v424 = vunpack.c.l.b16 %v396
      %v425 = vunpack.c.l.b16 %v397
      %v426 = vpack.c.b16 %v419, %v418
      %v427 = vpack.c.b16 %v421, %v420
      %v428 = vpack.c.b16 %v423, %v422
      %v429 = vpack.c.b16 %v425, %v424
      %vm434 = vcmask 523264
      %v436 = vsel %vm434, %v409, 0
      %438 = vmatprep.subr.bf16.mxu0 0
      %439 = vmatpush1.bf16.msra.mxu0 %v426
      %440 = vmatprep.subr.bf16.mxu0 0
      %441 = vmatpush1.bf16.msra.mxu0 %v427
      %442 = vmatprep.subr.bf16.mxu0 0
      %443 = vmatpush1.bf16.msra.mxu0 %v428
      %444 = vmatprep.subr.bf16.mxu0 0
      %445 = vmatpush1.bf16.msra.mxu0 %v429
      %446 = vmatprep.subr.bf16.mxu0 0
      %447 = vmatpush1.bf16.msra.mxu0 0
      %448 = vmatprep.subr.bf16.mxu0 0
      %449 = vmatpush1.bf16.msra.mxu0 0
      %450 = vmatprep.subr.bf16.mxu0 0
      %451 = vmatpush1.bf16.msra.mxu0 0
      %452 = vmatprep.subr.bf16.mxu0 0
      %453 = vmatpush1.bf16.msra.mxu0 0
      %454 = vmatprep.subr.bf16.mxu0 0
      %455 = vmatpush1.bf16.msra.mxu0 0
      %456 = vmatprep.subr.bf16.mxu0 0
      %457 = vmatpush1.bf16.msra.mxu0 0
      %458 = vmatprep.subr.bf16.mxu0 0
      %459 = vmatpush1.bf16.msra.mxu0 0
      %460 = vmatprep.subr.bf16.mxu0 0
      %461 = vmatpush1.bf16.msra.mxu0 0
      %462 = vmatprep.subr.bf16.mxu0 0
      %463 = vmatpush1.bf16.msra.mxu0 0
      %464 = vmatprep.subr.bf16.mxu0 0
      %465 = vmatpush1.bf16.msra.mxu0 0
      %466 = vmatprep.subr.bf16.mxu0 0
      %467 = vmatpush1.bf16.msra.mxu0 0
      %468 = vmatprep.subr.bf16.mxu0 0
      %469 = vmatpush1.bf16.msra.mxu0 0
      %470 = vmatprep.mubr.bf16.mxu0 0
      %471 = vmatmul.mubr.bf16.gmra.mrb[0].mxu0 %v436
      %v472 = vpop.f32.mrb[0].mxu0
      %v473 = vadd.f32 %v403, %v472
      %v474 = vpop.f32.mrb[0].mxu0
      %v475 = vpop.f32.mrb[0].mxu0
      %v476 = vadd.f32 %v403, %v475
      %v477 = vpop.f32.mrb[0].mxu0
      %478 = vdwg.mxu0
      %v479 = vld [vmem:[%s4] sm:$0x1]
      %v480 = vld [vmem:[%s5] sm:$0x1]
      %v481 = vsel %vm434, %v386, 0.0
      %482 = vadd.xlane.f32.xlu0 %v481
      %v483 = vpop.xlane.xlu0 %482
      %v484 = vsel %vm434, %v387, 0.0
      %485 = vadd.xlane.f32.xlu0 %v484
      %v486 = vpop.xlane.xlu0 %485
      %v487 = vrcp.pop 64.0
      %v488 = vmul.f32 %v483, %v487
      %v489 = vmul.f32 %v486, %v487
      %v490 = vsub.f32 %v386, %v488
      %v491 = vsub.f32 %v387, %v489
      %v492 = vmul.f32 %v490, %v490
      %v493 = vmul.f32 %v491, %v491
      %v494 = vsel %vm434, %v492, 0.0
      %495 = vadd.xlane.f32.xlu0 %v494
      %v496 = vpop.xlane.xlu0 %495
      %v497 = vsel %vm434, %v493, 0.0
      %498 = vadd.xlane.f32.xlu0 %v497
      %v499 = vpop.xlane.xlu0 %498
      %v500 = vmul.f32 %v496, %v487
      %v501 = vmul.f32 %v499, %v487
      %v502 = vadd.f32 %v500, 1e-05
      %v503 = vadd.f32 %v501, 1e-05
      %v504 = vrsqrt.pop %v502
      %v505 = vrsqrt.pop %v503
      %v506 = vmul.f32 %v490, %v504
      %v507 = vmul.f32 %v491, %v505
      %v509 = vlaneseq
      %v510 = vshrl.u32 %v509, 7
      %v511 = vsub.s32 0, %v510
      %v512 = vrot.slane %v479, %v511
      %v514 = vmul.f32 %v506, %v512
      %v515 = vmul.f32 %v507, %v512
      %v517 = vlaneseq
      %v518 = vshrl.u32 %v517, 7
      %v519 = vsub.s32 0, %v518
      %v520 = vrot.slane %v480, %v519
      %v522 = vadd.f32 %v514, %v520
      %v523 = vadd.f32 %v515, %v520
      %v524 = vpack.c.bf16 %v523, %v522
      %v525 = vld [vmem:[%s6] sm:$0xff]
      %v526 = vld [vmem:[%s6 + $0x8] sm:$0xff]
      %v527 = vld [vmem:[%s6 + $0x10] sm:$0xff]
      %v528 = vld [vmem:[%s6 + $0x18] sm:$0xff]
      %v529 = vld [vmem:[%s6 + $0x20] sm:$0xff]
      %v530 = vld [vmem:[%s6 + $0x28] sm:$0xff]
      %v531 = vld [vmem:[%s6 + $0x30] sm:$0xff]
      %v532 = vld [vmem:[%s6 + $0x38] sm:$0xff]
      %v533 = vld [vmem:[%s7] sm:$0x3]
      %v535 = vlaneseq
      %v536 = vshrl.u32 %v535, 7
      %v537 = vsub.s32 0, %v536
      %v538 = vrot.slane %v533, %v537
      %v539 = vlaneseq
      %v540 = vshrl.u32 %v539, 7
      %v541 = vsub.s32 1, %v540
      %v542 = vrot.slane %v533, %v541
      %v553 = vunpack.c.l.b16 %v525
      %v554 = vunpack.c.h.b16 %v525
      %v555 = vunpack.c.l.b16 %v526
      %v556 = vunpack.c.h.b16 %v526
      %v557 = vunpack.c.l.b16 %v527
      %v558 = vunpack.c.h.b16 %v527
      %v559 = vunpack.c.l.b16 %v528
      %v560 = vunpack.c.h.b16 %v528
      %v561 = vunpack.c.l.b16 %v529
      %v562 = vunpack.c.h.b16 %v529
      %v563 = vunpack.c.l.b16 %v530
      %v564 = vunpack.c.h.b16 %v530
      %v565 = vunpack.c.l.b16 %v531
      %v566 = vunpack.c.h.b16 %v531
      %v567 = vunpack.c.l.b16 %v532
      %v568 = vunpack.c.h.b16 %v532
      %v569 = vpack.c.b16 %v555, %v553
      %v570 = vpack.c.b16 %v556, %v554
      %v571 = vpack.c.b16 %v559, %v557
      %v572 = vpack.c.b16 %v560, %v558
      %v573 = vpack.c.b16 %v563, %v561
      %v574 = vpack.c.b16 %v564, %v562
      %v575 = vpack.c.b16 %v567, %v565
      %v576 = vpack.c.b16 %v568, %v566
      %v586 = vsel %vm434, %v524, 0
      %588 = vmatprep.subr.bf16.mxu0 %v570
      %589 = vmatpush1.bf16.msra.mxu0 %v569
      %590 = vmatprep.subr.bf16.mxu0 %v572
      %591 = vmatpush1.bf16.msra.mxu0 %v571
      %592 = vmatprep.subr.bf16.mxu0 %v574
      %593 = vmatpush1.bf16.msra.mxu0 %v573
      %594 = vmatprep.subr.bf16.mxu0 %v576
      %595 = vmatpush1.bf16.msra.mxu0 %v575
      %596 = vmatprep.subr.bf16.mxu0 0
      %597 = vmatpush1.bf16.msra.mxu0 0
      %598 = vmatprep.subr.bf16.mxu0 0
      %599 = vmatpush1.bf16.msra.mxu0 0
      %600 = vmatprep.subr.bf16.mxu0 0
      %601 = vmatpush1.bf16.msra.mxu0 0
      %602 = vmatprep.subr.bf16.mxu0 0
      %603 = vmatpush1.bf16.msra.mxu0 0
      %604 = vmatprep.subr.bf16.mxu0 0
      %605 = vmatpush1.bf16.msra.mxu0 0
      %606 = vmatprep.subr.bf16.mxu0 0
      %607 = vmatpush1.bf16.msra.mxu0 0
      %608 = vmatprep.subr.bf16.mxu0 0
      %609 = vmatpush1.bf16.msra.mxu0 0
      %610 = vmatprep.subr.bf16.mxu0 0
      %611 = vmatpush1.bf16.msra.mxu0 0
      %612 = vmatprep.subr.bf16.mxu0 0
      %613 = vmatpush1.bf16.msra.mxu0 0
      %614 = vmatprep.subr.bf16.mxu0 0
      %615 = vmatpush1.bf16.msra.mxu0 0
      %616 = vmatprep.subr.bf16.mxu0 0
      %617 = vmatpush1.bf16.msra.mxu0 0
      %618 = vmatprep.subr.bf16.mxu0 0
      %619 = vmatpush1.bf16.msra.mxu0 0
      %620 = vmatprep.mubr.bf16.mxu0 0
      %621 = vmatmul.mubr.bf16.gmra.mrb[0].mxu0 %v586
      %v622 = vpop.f32.mrb[0].mxu0
      %v623 = vadd.f32 %v538, %v622
      %v624 = vpop.f32.mrb[0].mxu0
      %v625 = vadd.f32 %v542, %v624
      %v626 = vpop.f32.mrb[0].mxu0
      %v627 = vadd.f32 %v538, %v626
      %v628 = vpop.f32.mrb[0].mxu0
      %v629 = vadd.f32 %v542, %v628
      %630 = vdwg.mxu0
      %v631 = vmul.f32 %v623, 0.5
      %v632 = vmul.f32 %v625, 0.5
      %v633 = vmul.f32 %v627, 0.5
      %v634 = vmul.f32 %v629, 0.5
      %v635 = vmul.f32 %v623, 0.70710677
      %v636 = vmul.f32 %v625, 0.70710677
      %v637 = vmul.f32 %v627, 0.70710677
      %v638 = vmul.f32 %v629, 0.70710677
      %v639 = vand.u32 2147483647, %v635
      %v640 = vand.u32 2147483647, %v636
      %v641 = vand.u32 2147483647, %v637
      %v642 = vand.u32 2147483647, %v638
      %v643 = vmul.f32 %v639, 0.3275911
      %v644 = vmul.f32 %v640, 0.3275911
      %v645 = vmul.f32 %v641, 0.3275911
      %v646 = vmul.f32 %v642, 0.3275911
      %v647 = vadd.f32 %v643, 1.0
      %v648 = vadd.f32 %v644, 1.0
      %v649 = vadd.f32 %v645, 1.0
      %v650 = vadd.f32 %v646, 1.0
      %v651 = vrcp.pop %v647
      %v652 = vrcp.pop %v648
      %v653 = vrcp.pop %v649
      %v654 = vrcp.pop %v650
      %v655 = vmul.f32 %v651, 1.0614054
      %v656 = vmul.f32 %v652, 1.0614054
      %v657 = vmul.f32 %v653, 1.0614054
      %v658 = vmul.f32 %v654, 1.0614054
      %v659 = vadd.f32 %v655, -1.4531521
      %v660 = vadd.f32 %v656, -1.4531521
      %v661 = vadd.f32 %v657, -1.4531521
      %v662 = vadd.f32 %v658, -1.4531521
      %v663 = vmul.f32 %v659, %v651
      %v664 = vmul.f32 %v660, %v652
      %v665 = vmul.f32 %v661, %v653
      %v666 = vmul.f32 %v662, %v654
      %v667 = vadd.f32 %v663, 1.4214138
      %v668 = vadd.f32 %v664, 1.4214138
      %v669 = vadd.f32 %v665, 1.4214138
      %v670 = vadd.f32 %v666, 1.4214138
      %v671 = vmul.f32 %v667, %v651
      %v672 = vmul.f32 %v668, %v652
      %v673 = vmul.f32 %v669, %v653
      %v674 = vmul.f32 %v670, %v654
      %v675 = vadd.f32 %v671, -0.28449672
      %v676 = vadd.f32 %v672, -0.28449672
      %v677 = vadd.f32 %v673, -0.28449672
      %v678 = vadd.f32 %v674, -0.28449672
      %v679 = vmul.f32 %v675, %v651
      %v680 = vmul.f32 %v676, %v652
      %v681 = vmul.f32 %v677, %v653
      %v682 = vmul.f32 %v678, %v654
      %v683 = vadd.f32 %v679, 0.2548296
      %v684 = vadd.f32 %v680, 0.2548296
      %v685 = vadd.f32 %v681, 0.2548296
      %v686 = vadd.f32 %v682, 0.2548296
      %v687 = vmul.f32 %v683, %v651
      %v688 = vmul.f32 %v684, %v652
      %v689 = vmul.f32 %v685, %v653
      %v690 = vmul.f32 %v686, %v654
      %v691 = vsub.f32 0.0, %v639
      %v692 = vsub.f32 0.0, %v640
      %v693 = vsub.f32 0.0, %v641
      %v694 = vsub.f32 0.0, %v642
      %v695 = vmul.f32 %v691, %v639
      %v696 = vmul.f32 %v692, %v640
      %v697 = vmul.f32 %v693, %v641
      %v698 = vmul.f32 %v694, %v642
      %v699 = vmul.f32 %v695, 1.442695
      %v700 = vpow.pop %v699
      %v701 = vmul.f32 %v696, 1.442695
      %v702 = vpow.pop %v701
      %v703 = vmul.f32 %v697, 1.442695
      %v704 = vpow.pop %v703
      %v705 = vmul.f32 %v698, 1.442695
      %v706 = vpow.pop %v705
      %v707 = vmul.f32 %v687, %v700
      %v708 = vmul.f32 %v688, %v702
      %v709 = vmul.f32 %v689, %v704
      %v710 = vmul.f32 %v690, %v706
      %v711 = vsub.f32 1.0, %v707
      %v712 = vsub.f32 1.0, %v708
      %v713 = vsub.f32 1.0, %v709
      %v714 = vsub.f32 1.0, %v710
      %vm715 = vcmp.lt.f32.partialorder %v635, 0.0
      %vm716 = vcmp.lt.f32.partialorder %v636, 0.0
      %vm717 = vcmp.lt.f32.partialorder %v637, 0.0
      %vm718 = vcmp.lt.f32.partialorder %v638, 0.0
      %v719 = vsub.f32 0.0, %v711
      %v720 = vsub.f32 0.0, %v712
      %v721 = vsub.f32 0.0, %v713
      %v722 = vsub.f32 0.0, %v714
      %v723 = vsel %vm715, %v719, %v711
      %v724 = vsel %vm716, %v720, %v712
      %v725 = vsel %vm717, %v721, %v713
      %v726 = vsel %vm718, %v722, %v714
      %v727 = vadd.f32 %v723, 1.0
      %v728 = vadd.f32 %v724, 1.0
      %v729 = vadd.f32 %v725, 1.0
      %v730 = vadd.f32 %v726, 1.0
      %v731 = vmul.f32 %v631, %v727
      %v732 = vmul.f32 %v632, %v728
      %v733 = vmul.f32 %v633, %v729
      %v734 = vmul.f32 %v634, %v730
      %v735 = vpack.c.bf16 %v733, %v731
      %v736 = vpack.c.bf16 %v734, %v732
      %v737 = vld [vmem:[%s8] sm:$0xf]
      %v738 = vld [vmem:[%s8 + $0x4] sm:$0xf]
      %v739 = vld [vmem:[%s8 + $0x8] sm:$0xf]
      %v740 = vld [vmem:[%s8 + $0xc] sm:$0xf]
      %v741 = vld [vmem:[%s8 + $0x10] sm:$0xf]
      %v742 = vld [vmem:[%s8 + $0x14] sm:$0xf]
      %v743 = vld [vmem:[%s8 + $0x18] sm:$0xf]
      %v744 = vld [vmem:[%s8 + $0x1c] sm:$0xf]
      %v745 = vld [vmem:[%s8 + $0x20] sm:$0xf]
      %v746 = vld [vmem:[%s8 + $0x24] sm:$0xf]
      %v747 = vld [vmem:[%s8 + $0x28] sm:$0xf]
      %v748 = vld [vmem:[%s8 + $0x2c] sm:$0xf]
      %v749 = vld [vmem:[%s8 + $0x30] sm:$0xf]
      %v750 = vld [vmem:[%s8 + $0x34] sm:$0xf]
      %v751 = vld [vmem:[%s8 + $0x38] sm:$0xf]
      %v752 = vld [vmem:[%s8 + $0x3c] sm:$0xf]
      %v753 = vld [vmem:[%s8 + $0x40] sm:$0xf]
      %v754 = vld [vmem:[%s8 + $0x44] sm:$0xf]
      %v755 = vld [vmem:[%s8 + $0x48] sm:$0xf]
      %v756 = vld [vmem:[%s8 + $0x4c] sm:$0xf]
      %v757 = vld [vmem:[%s8 + $0x50] sm:$0xf]
      %v758 = vld [vmem:[%s8 + $0x54] sm:$0xf]
      %v759 = vld [vmem:[%s8 + $0x58] sm:$0xf]
      %v760 = vld [vmem:[%s8 + $0x5c] sm:$0xf]
      %v761 = vld [vmem:[%s8 + $0x60] sm:$0xf]
      %v762 = vld [vmem:[%s8 + $0x64] sm:$0xf]
      %v763 = vld [vmem:[%s8 + $0x68] sm:$0xf]
      %v764 = vld [vmem:[%s8 + $0x6c] sm:$0xf]
      %v765 = vld [vmem:[%s8 + $0x70] sm:$0xf]
      %v766 = vld [vmem:[%s8 + $0x74] sm:$0xf]
      %v767 = vld [vmem:[%s8 + $0x78] sm:$0xf]
      %v768 = vld [vmem:[%s8 + $0x7c] sm:$0xf]
      %v769 = vld [vmem:[%s9] sm:$0x1]
      %v771 = vlaneseq
      %v772 = vshrl.u32 %v771, 7
      %v773 = vsub.s32 0, %v772
      %v774 = vrot.slane %v769, %v773
      %v808 = vunpack.c.l.b16 %v737
      %v809 = vunpack.c.l.b16 %v738
      %v810 = vunpack.c.l.b16 %v739
      %v811 = vunpack.c.l.b16 %v740
      %v812 = vunpack.c.l.b16 %v741
      %v813 = vunpack.c.l.b16 %v742
      %v814 = vunpack.c.l.b16 %v743
      %v815 = vunpack.c.l.b16 %v744
      %v816 = vunpack.c.l.b16 %v745
      %v817 = vunpack.c.l.b16 %v746
      %v818 = vunpack.c.l.b16 %v747
      %v819 = vunpack.c.l.b16 %v748
      %v820 = vunpack.c.l.b16 %v749
      %v821 = vunpack.c.l.b16 %v750
      %v822 = vunpack.c.l.b16 %v751
      %v823 = vunpack.c.l.b16 %v752
      %v824 = vunpack.c.l.b16 %v753
      %v825 = vunpack.c.l.b16 %v754
      %v826 = vunpack.c.l.b16 %v755
      %v827 = vunpack.c.l.b16 %v756
      %v828 = vunpack.c.l.b16 %v757
      %v829 = vunpack.c.l.b16 %v758
      %v830 = vunpack.c.l.b16 %v759
      %v831 = vunpack.c.l.b16 %v760
      %v832 = vunpack.c.l.b16 %v761
      %v833 = vunpack.c.l.b16 %v762
      %v834 = vunpack.c.l.b16 %v763
      %v835 = vunpack.c.l.b16 %v764
      %v836 = vunpack.c.l.b16 %v765
      %v837 = vunpack.c.l.b16 %v766
      %v838 = vunpack.c.l.b16 %v767
      %v839 = vunpack.c.l.b16 %v768
      %v840 = vpack.c.b16 %v809, %v808
      %v841 = vpack.c.b16 %v811, %v810
      %v842 = vpack.c.b16 %v813, %v812
      %v843 = vpack.c.b16 %v815, %v814
      %v844 = vpack.c.b16 %v817, %v816
      %v845 = vpack.c.b16 %v819, %v818
      %v846 = vpack.c.b16 %v821, %v820
      %v847 = vpack.c.b16 %v823, %v822
      %v848 = vpack.c.b16 %v825, %v824
      %v849 = vpack.c.b16 %v827, %v826
      %v850 = vpack.c.b16 %v829, %v828
      %v851 = vpack.c.b16 %v831, %v830
      %v852 = vpack.c.b16 %v833, %v832
      %v853 = vpack.c.b16 %v835, %v834
      %v854 = vpack.c.b16 %v837, %v836
      %v855 = vpack.c.b16 %v839, %v838
      %872 = vmatprep.subr.bf16.mxu0 0
      %873 = vmatpush1.bf16.msra.mxu0 %v840
      %874 = vmatprep.subr.bf16.mxu0 0
      %875 = vmatpush1.bf16.msra.mxu0 %v841
      %876 = vmatprep.subr.bf16.mxu0 0
      %877 = vmatpush1.bf16.msra.mxu0 %v842
      %878 = vmatprep.subr.bf16.mxu0 0
      %879 = vmatpush1.bf16.msra.mxu0 %v843
      %880 = vmatprep.subr.bf16.mxu0 0
      %881 = vmatpush1.bf16.msra.mxu0 %v844
      %882 = vmatprep.subr.bf16.mxu0 0
      %883 = vmatpush1.bf16.msra.mxu0 %v845
      %884 = vmatprep.subr.bf16.mxu0 0
      %885 = vmatpush1.bf16.msra.mxu0 %v846
      %886 = vmatprep.subr.bf16.mxu0 0
      %887 = vmatpush1.bf16.msra.mxu0 %v847
      %888 = vmatprep.subr.bf16.mxu0 0
      %889 = vmatpush1.bf16.msra.mxu0 %v848
      %890 = vmatprep.subr.bf16.mxu0 0
      %891 = vmatpush1.bf16.msra.mxu0 %v849
      %892 = vmatprep.subr.bf16.mxu0 0
      %893 = vmatpush1.bf16.msra.mxu0 %v850
      %894 = vmatprep.subr.bf16.mxu0 0
      %895 = vmatpush1.bf16.msra.mxu0 %v851
      %896 = vmatprep.subr.bf16.mxu0 0
      %897 = vmatpush1.bf16.msra.mxu0 %v852
      %898 = vmatprep.subr.bf16.mxu0 0
      %899 = vmatpush1.bf16.msra.mxu0 %v853
      %900 = vmatprep.subr.bf16.mxu0 0
      %901 = vmatpush1.bf16.msra.mxu0 %v854
      %902 = vmatprep.subr.bf16.mxu0 0
      %903 = vmatpush1.bf16.msra.mxu0 %v855
      %904 = vmatprep.mubr.bf16.mxu0 %v736
      %905 = vmatmul.mubr.bf16.gmra.mrb[0].mxu0 %v735
      %v906 = vpop.f32.mrb[0].mxu0
      %v907 = vadd.f32 %v774, %v906
      %v908 = vpop.f32.mrb[0].mxu0
      %v909 = vpop.f32.mrb[0].mxu0
      %v910 = vadd.f32 %v774, %v909
      %v911 = vpop.f32.mrb[0].mxu0
      %912 = vdwg.mxu0
      %v913 = vadd.f32 %v386, %v473
      %v914 = vadd.f32 %v387, %v476
      %v915 = vadd.f32 %v913, %v907
      %v916 = vadd.f32 %v914, %v910
      %917 = vst.msk [vmem:[%s383] sm:$0xff] %vm434, %v915
      %918 = vst.msk [vmem:[%s383 + $0x8] sm:$0xff] %vm434, %v916
      %s919 = smul.u32 2, %s21
      %p920 = scmp.lt.s32.totalorder %s919, 3
      %s921 = scalar_select %p920, %s919, 3
      %s922 = smul.addr %s921, 8
      %s923 = scalar_lea.vmem %s10, %s922
      // Predicated region
      $region61: #{_lambda_.8} parent=59 // pred_check
        %p924 = pneg %p259
      $region62: #{_lambda_.8} parent=59 // pred_check_branch
        %926 = sbr.rel (%p924) target = $region64
      $region63: #{_lambda_.8} parent=59 // pred_region
        %s927 = smul.u32 2, %s21
      $region64: #{_lambda_.8} parent=59 // pred_fallthru
        _
    $region60: #{_lambda_.8} parent=5 // pred_fallthru
      _
    %p928 = scmp.le.s32.totalorder 2, %s16
    // Predicated region
    $region65: #{_lambda_.8} parent=5 // pred_check
      %p929 = pneg %p928
    $region66: #{_lambda_.8} parent=5 // pred_check_branch
      %931 = sbr.rel (%p929) target = $region68
    $region67: #{_lambda_.8} parent=5 // pred_region
      %s932 = ssub.s32 %s16, 2
      // Predicated region
      $region69: #{_lambda_.8} parent=67 // pred_check
        %p933 = pneg %p265
      $region70: #{_lambda_.8} parent=67 // pred_check_branch
        %935 = sbr.rel (%p933) target = $region72
      $region71: #{_lambda_.8} parent=67 // pred_region
        %s936 = smul.u32 2, %s22
        %p937 = scmp.lt.s32.totalorder %s936, 3
        %s938 = scalar_select %p937, %s936, 3
        %s939 = smul.addr %s938, 8
        %s940 = scalar_lea.vmem %s10, %s939
      $region72: #{_lambda_.8} parent=67 // pred_fallthru
        _
    $region68: #{_lambda_.8} parent=5 // pred_fallthru
      _
  $region6: #{_lambda_.8} parent=0 // loop_footer
    %s20 = sadd.s32 1, %s16
  $region7: #{_lambda_.8} parent=0 // loop_footer_branch
    %15 = sbr.rel target = $region3
  $region8: #{_lambda_.8} parent=0 // loop_exit
    _

// kernel: _lambda_.7
$region0: #{_lambda_.7}
  #allocation0 [shape = 'u32[]', space=smem, size = 0x4, offset = 0x4, fixed_abs, tag = 'smem constant byte address 0x4 - core index']
  #allocation1 [shape = 'u32[144,128]{1,0:T(1,128)}', space=vmem, size = 0x12000, scoped, tag = 'internal scratch']
  %s0 = inlined_call_operand.vmem [shape: f32[2,16,64], index: 0, kind: input, shape index: {}]
  %s1 = inlined_call_operand.vmem [shape: f32[1,64], index: 1, kind: input, shape index: {}]
  %s2 = inlined_call_operand.vmem [shape: f32[1,64], index: 2, kind: input, shape index: {}]
  %s3 = inlined_call_operand.vmem [shape: bf16[64,192], index: 3, kind: input, shape index: {}]
  %s4 = inlined_call_operand.vmem [shape: f32[1,192], index: 4, kind: input, shape index: {}]
  %s5 = inlined_call_operand.vmem [shape: f32[16,16], index: 5, kind: input, shape index: {}]
  %s6 = inlined_call_operand.vmem [shape: f32[16,16], index: 6, kind: input, shape index: {}]
  %s7 = inlined_call_operand.vmem [shape: bf16[2,16,64], index: 7, kind: output, shape index: {}]
  %s8 = sld [smem:[#allocation0]]
  $region61: #{_lambda_.7} parent=0
    _
  %s10 = ssub.s32 1, %s8
  %s11 = scalar_select 0, %s10, %s8
  loop: start=0, step=1, limit=4
  $region2: #{_lambda_.7} parent=0 // loop_pre_header
    _
  $region3: #{_lambda_.7} parent=0 // loop_header
    %s13 = sphi 0, %s17
    %p14 = scmp.ge.s32.totalorder %s13, 4
    %s23 = sphi 0, %s25
    %s26 = sphi 0, %s23
    %s27 = sphi 0, %s26
    %s43 = sphi 0, %s27
    %s47 = sphi 0, %s47
    %s49 = sphi 0, %s47
    %s50 = sphi 0, %s49
    %s64 = sphi 0, %s50
    %s68 = sphi 0, %s68
    %s70 = sphi 0, %s68
    %s71 = sphi 0, %s70
    %s85 = sphi 0, %s71
    %s89 = sphi 0, %s89
    %s91 = sphi 0, %s89
    %s92 = sphi 0, %s91
    %s106 = sphi 0, %s92
    %s110 = sphi 0, %s110
    %s112 = sphi 0, %s110
    %s113 = sphi 0, %s112
    %s127 = sphi 0, %s113
    %s131 = sphi 0, %s131
    %s133 = sphi 0, %s131
    %s134 = sphi 0, %s133
    %s148 = sphi 0, %s134
    %s152 = sphi 0, %s152
    %s154 = sphi 0, %s152
    %s155 = sphi 0, %s154
    %s169 = sphi 0, %s155
    %s175 = sphi 0, %s177
    %s178 = sphi 0, %s175
    %s179 = sphi 0, %s178
    %s195 = sphi 0, %s179
  $region4: #{_lambda_.7} parent=0 // loop_header_branch
    %16 = sbr.rel (%p14) target = $region8
  $region5: #{_lambda_.7} parent=0 // loop_body
    %s18 = ssub.s32 %s13, 1
    %s19 = ssub.s32 %s13, 2
    %s20 = sadd.s32 %s13, 1
    %s21 = ssub.s32 %s13, %s20
    %p22 = scmp.eq.s32.totalorder %s21, 0
    %s24 = sadd.s32 %s23, 1
    %s25 = scalar_select %p22, %s23, %s24
    %p28 = pneg %p22
    %p29 = scmp.eq.s32.totalorder %s13, 1
    %p30 = por %p28, %p29
    %p31 = scmp.ne.s32.totalorder %s23, %s26
    %p32 = scmp.eq.s32.totalorder %s13, 0
    %p33 = por %p31, %p32
    %p34 = scmp.ne.s32.totalorder %s23, %s26
    %p35 = scmp.eq.s32.totalorder %s18, 1
    %p36 = por %p34, %p35
    %p37 = scmp.ne.s32.totalorder %s26, %s27
    %p38 = scmp.eq.s32.totalorder %s18, 0
    %p39 = por %p37, %p38
    %p40 = scmp.ne.s32.totalorder %s26, %s27
    %p41 = scmp.eq.s32.totalorder %s19, 1
    %p42 = por %p40, %p41
    %p44 = scmp.ne.s32.totalorder %s27, %s43
    %p45 = scmp.eq.s32.totalorder %s19, 0
    %p46 = por %p44, %p45
    %s48 = sadd.s32 %s47, 1
    %p51 = scmp.eq.s32.totalorder %s13, 1
    %p52 = scmp.ne.s32.totalorder %s47, %s49
    %p53 = scmp.eq.s32.totalorder %s13, 0
    %p54 = por %p52, %p53
    %p55 = scmp.ne.s32.totalorder %s47, %s49
    %p56 = scmp.eq.s32.totalorder %s18, 1
    %p57 = por %p55, %p56
    %p58 = scmp.ne.s32.totalorder %s49, %s50
    %p59 = scmp.eq.s32.totalorder %s18, 0
    %p60 = por %p58, %p59
    %p61 = scmp.ne.s32.totalorder %s49, %s50
    %p62 = scmp.eq.s32.totalorder %s19, 1
    %p63 = por %p61, %p62
    %p65 = scmp.ne.s32.totalorder %s50, %s64
    %p66 = scmp.eq.s32.totalorder %s19, 0
    %p67 = por %p65, %p66
    %s69 = sadd.s32 %s68, 1
    %p72 = scmp.eq.s32.totalorder %s13, 1
    %p73 = scmp.ne.s32.totalorder %s68, %s70
    %p74 = scmp.eq.s32.totalorder %s13, 0
    %p75 = por %p73, %p74
    %p76 = scmp.ne.s32.totalorder %s68, %s70
    %p77 = scmp.eq.s32.totalorder %s18, 1
    %p78 = por %p76, %p77
    %p79 = scmp.ne.s32.totalorder %s70, %s71
    %p80 = scmp.eq.s32.totalorder %s18, 0
    %p81 = por %p79, %p80
    %p82 = scmp.ne.s32.totalorder %s70, %s71
    %p83 = scmp.eq.s32.totalorder %s19, 1
    %p84 = por %p82, %p83
    %p86 = scmp.ne.s32.totalorder %s71, %s85
    %p87 = scmp.eq.s32.totalorder %s19, 0
    %p88 = por %p86, %p87
    %s90 = sadd.s32 %s89, 1
    %p93 = scmp.eq.s32.totalorder %s13, 1
    %p94 = scmp.ne.s32.totalorder %s89, %s91
    %p95 = scmp.eq.s32.totalorder %s13, 0
    %p96 = por %p94, %p95
    %p97 = scmp.ne.s32.totalorder %s89, %s91
    %p98 = scmp.eq.s32.totalorder %s18, 1
    %p99 = por %p97, %p98
    %p100 = scmp.ne.s32.totalorder %s91, %s92
    %p101 = scmp.eq.s32.totalorder %s18, 0
    %p102 = por %p100, %p101
    %p103 = scmp.ne.s32.totalorder %s91, %s92
    %p104 = scmp.eq.s32.totalorder %s19, 1
    %p105 = por %p103, %p104
    %p107 = scmp.ne.s32.totalorder %s92, %s106
    %p108 = scmp.eq.s32.totalorder %s19, 0
    %p109 = por %p107, %p108
    %s111 = sadd.s32 %s110, 1
    %p114 = scmp.eq.s32.totalorder %s13, 1
    %p115 = scmp.ne.s32.totalorder %s110, %s112
    %p116 = scmp.eq.s32.totalorder %s13, 0
    %p117 = por %p115, %p116
    %p118 = scmp.ne.s32.totalorder %s110, %s112
    %p119 = scmp.eq.s32.totalorder %s18, 1
    %p120 = por %p118, %p119
    %p121 = scmp.ne.s32.totalorder %s112, %s113
    %p122 = scmp.eq.s32.totalorder %s18, 0
    %p123 = por %p121, %p122
    %p124 = scmp.ne.s32.totalorder %s112, %s113
    %p125 = scmp.eq.s32.totalorder %s19, 1
    %p126 = por %p124, %p125
    %p128 = scmp.ne.s32.totalorder %s113, %s127
    %p129 = scmp.eq.s32.totalorder %s19, 0
    %p130 = por %p128, %p129
    %s132 = sadd.s32 %s131, 1
    %p135 = scmp.eq.s32.totalorder %s13, 1
    %p136 = scmp.ne.s32.totalorder %s131, %s133
    %p137 = scmp.eq.s32.totalorder %s13, 0
    %p138 = por %p136, %p137
    %p139 = scmp.ne.s32.totalorder %s131, %s133
    %p140 = scmp.eq.s32.totalorder %s18, 1
    %p141 = por %p139, %p140
    %p142 = scmp.ne.s32.totalorder %s133, %s134
    %p143 = scmp.eq.s32.totalorder %s18, 0
    %p144 = por %p142, %p143
    %p145 = scmp.ne.s32.totalorder %s133, %s134
    %p146 = scmp.eq.s32.totalorder %s19, 1
    %p147 = por %p145, %p146
    %p149 = scmp.ne.s32.totalorder %s134, %s148
    %p150 = scmp.eq.s32.totalorder %s19, 0
    %p151 = por %p149, %p150
    %s153 = sadd.s32 %s152, 1
    %p156 = scmp.eq.s32.totalorder %s13, 1
    %p157 = scmp.ne.s32.totalorder %s152, %s154
    %p158 = scmp.eq.s32.totalorder %s13, 0
    %p159 = por %p157, %p158
    %p160 = scmp.ne.s32.totalorder %s152, %s154
    %p161 = scmp.eq.s32.totalorder %s18, 1
    %p162 = por %p160, %p161
    %p163 = scmp.ne.s32.totalorder %s154, %s155
    %p164 = scmp.eq.s32.totalorder %s18, 0
    %p165 = por %p163, %p164
    %p166 = scmp.ne.s32.totalorder %s154, %s155
    %p167 = scmp.eq.s32.totalorder %s19, 1
    %p168 = por %p166, %p167
    %p170 = scmp.ne.s32.totalorder %s155, %s169
    %p171 = scmp.eq.s32.totalorder %s19, 0
    %p172 = por %p170, %p171
    %s173 = ssub.s32 %s13, %s20
    %p174 = scmp.eq.s32.totalorder %s173, 0
    %s176 = sadd.s32 %s175, 1
    %s177 = scalar_select %p174, %s175, %s176
    %p180 = pneg %p174
    %p181 = scmp.eq.s32.totalorder %s13, 1
    %p182 = por %p180, %p181
    %p183 = scmp.ne.s32.totalorder %s175, %s178
    %p184 = scmp.eq.s32.totalorder %s13, 0
    %p185 = por %p183, %p184
    %p186 = scmp.ne.s32.totalorder %s175, %s178
    %p187 = scmp.eq.s32.totalorder %s18, 1
    %p188 = por %p186, %p187
    %p189 = scmp.ne.s32.totalorder %s178, %s179
    %p190 = scmp.eq.s32.totalorder %s18, 0
    %p191 = por %p189, %p190
    %p192 = scmp.ne.s32.totalorder %s178, %s179
    %p193 = scmp.eq.s32.totalorder %s19, 1
    %p194 = por %p192, %p193
    %p196 = scmp.ne.s32.totalorder %s179, %s195
    %p197 = scmp.eq.s32.totalorder %s19, 0
    %p198 = por %p196, %p197
    %p199 = scmp.le.s32.totalorder 1, %s13
    %p200 = scmp.lt.s32.totalorder %s13, 3
    %p201 = pnand %p199, %p200
    %p202 = pneg %p201
    // Predicated region
    $region9: #{_lambda_.7} parent=5 // pred_check
      _
    $region10: #{_lambda_.7} parent=5 // pred_check_branch
      %204 = sbr.rel (%p201) target = $region12
    $region11: #{_lambda_.7} parent=5 // pred_region
      %s205 = ssub.s32 %s13, 1
      // Predicated region
      $region13: #{_lambda_.7} parent=11 // pred_check
        %p206 = pneg %p60
      $region14: #{_lambda_.7} parent=11 // pred_check_branch
        %208 = sbr.rel (%p206) target = $region16
      $region15: #{_lambda_.7} parent=11 // pred_region
        _
      $region16: #{_lambda_.7} parent=11 // pred_fallthru
        _
      // Predicated region
      $region17: #{_lambda_.7} parent=11 // pred_check
        %p209 = pneg %p81
      $region18: #{_lambda_.7} parent=11 // pred_check_branch
        %211 = sbr.rel (%p209) target = $region20
      $region19: #{_lambda_.7} parent=11 // pred_region
        _
      $region20: #{_lambda_.7} parent=11 // pred_fallthru
        _
      // Predicated region
      $region21: #{_lambda_.7} parent=11 // pred_check
        %p212 = pneg %p102
      $region22: #{_lambda_.7} parent=11 // pred_check_branch
        %214 = sbr.rel (%p212) target = $region24
      $region23: #{_lambda_.7} parent=11 // pred_region
        _
      $region24: #{_lambda_.7} parent=11 // pred_fallthru
        _
      // Predicated region
      $region25: #{_lambda_.7} parent=11 // pred_check
        %p215 = pneg %p123
      $region26: #{_lambda_.7} parent=11 // pred_check_branch
        %217 = sbr.rel (%p215) target = $region28
      $region27: #{_lambda_.7} parent=11 // pred_region
        _
      $region28: #{_lambda_.7} parent=11 // pred_fallthru
        _
      // Predicated region
      $region29: #{_lambda_.7} parent=11 // pred_check
        %p218 = pneg %p144
      $region30: #{_lambda_.7} parent=11 // pred_check_branch
        %220 = sbr.rel (%p218) target = $region32
      $region31: #{_lambda_.7} parent=11 // pred_region
        _
      $region32: #{_lambda_.7} parent=11 // pred_fallthru
        _
      // Predicated region
      $region33: #{_lambda_.7} parent=11 // pred_check
        %p221 = pneg %p165
      $region34: #{_lambda_.7} parent=11 // pred_check_branch
        %223 = sbr.rel (%p221) target = $region36
      $region35: #{_lambda_.7} parent=11 // pred_region
        _
      $region36: #{_lambda_.7} parent=11 // pred_fallthru
        _
    $region12: #{_lambda_.7} parent=5 // pred_fallthru
      _
    %p224 = scmp.lt.s32.totalorder %s13, 2
    // Predicated region
    $region37: #{_lambda_.7} parent=5 // pred_check
      %p225 = pneg %p224
    $region38: #{_lambda_.7} parent=5 // pred_check_branch
      %227 = sbr.rel (%p225) target = $region40
    $region39: #{_lambda_.7} parent=5 // pred_region
      // Predicated region
      $region41: #{_lambda_.7} parent=39 // pred_check
        %p228 = pneg %p33
      $region42: #{_lambda_.7} parent=39 // pred_check_branch
        %230 = sbr.rel (%p228) target = $region44
      $region43: #{_lambda_.7} parent=39 // pred_region
        %p231 = scmp.lt.s32.totalorder %s13, 1
        %s232 = scalar_select %p231, %s13, 1
        %s233 = smul.addr %s232, 2
        %s234 = smul.addr %s233, 8
        %s235 = scalar_lea.vmem %s0, %s234
      $region44: #{_lambda_.7} parent=39 // pred_fallthru
        _
    $region40: #{_lambda_.7} parent=5 // pred_fallthru
      _
    %p236 = scmp.le.s32.totalorder 1, %s13
    %p237 = scmp.lt.s32.totalorder %s13, 3
    %p238 = pnand %p236, %p237
    %p239 = pneg %p238
    // Predicated region
    $region45: #{_lambda_.7} parent=5 // pred_check
      _
    $region46: #{_lambda_.7} parent=5 // pred_check_branch
      %241 = sbr.rel (%p238) target = $region48
    $region47: #{_lambda_.7} parent=5 // pred_region
      %s242 = ssub.s32 %s13, 1
      %p243 = scmp.lt.s32.totalorder %s18, 1
      %s244 = scalar_select %p243, %s18, 1
      %s245 = smul.addr %s244, 2
      %s246 = smul.addr %s245, 8
      %s247 = scalar_lea.vmem %s0, %s246
      %p248 = pneg %p39
      %p249 = pneg %p36
      %p250 = pneg %p60
      %p251 = pneg %p57
      %p252 = pneg %p81
      %p253 = pneg %p78
      %p254 = pneg %p102
      %p255 = pneg %p99
      %p256 = pneg %p123
      %p257 = pneg %p120
      %p258 = pneg %p144
      %p259 = pneg %p141
      %p260 = pneg %p165
      %p261 = pneg %p162
      %p262 = pneg %p191
      %p263 = pneg %p188
      %p264 = scmp.lt.s32.totalorder %s18, 1
      %s265 = scalar_select %p264, %s18, 1
      %s266 = smul.addr %s265, 2
      %s267 = smul.addr %s266, 4
      %s268 = scalar_lea.vmem %s7, %s267
      %p269 = scmp.lt.s32.totalorder %s18, 1
      %s270 = scalar_select %p269, %s18, 1
      %s271 = smul.addr %s270, 2
      %s272 = smul.addr %s271, 8
      %s273 = scalar_lea.vmem %s0, %s272
      %p274 = scmp.lt.s32.totalorder %s18, 1
      %s275 = scalar_select %p274, %s18, 1
      %s276 = smul.addr %s275, 2
      %s277 = smul.addr %s276, 4
      %s278 = scalar_lea.vmem %s7, %s277
      %v280 = vld [vmem:[%s273] sm:$0xff]
      %v281 = vld [vmem:[%s273 + $0x8] sm:$0xff]
      %v282 = vld [vmem:[%s1] sm:$0x1]
      %v283 = vld [vmem:[%s2] sm:$0x1]
      %vm284 = vcmask 523264
      %v285 = vsel %vm284, %v280, 0.0
      %286 = vadd.xlane.f32.xlu0 %v285
      %v287 = vpop.xlane.xlu0 %286
      %v288 = vsel %vm284, %v281, 0.0
      %289 = vadd.xlane.f32.xlu0 %v288
      %v290 = vpop.xlane.xlu0 %289
      %v291 = vrcp.pop 64.0
      %v292 = vmul.f32 %v287, %v291
      %v293 = vmul.f32 %v290, %v291
      %v294 = vsub.f32 %v280, %v292
      %v295 = vsub.f32 %v281, %v293
      %v296 = vmul.f32 %v294, %v294
      %v297 = vmul.f32 %v295, %v295
      %v298 = vsel %vm284, %v296, 0.0
      %299 = vadd.xlane.f32.xlu0 %v298
      %v300 = vpop.xlane.xlu0 %299
      %v301 = vsel %vm284, %v297, 0.0
      %302 = vadd.xlane.f32.xlu0 %v301
      %v303 = vpop.xlane.xlu0 %302
      %v304 = vmul.f32 %v300, %v291
      %v305 = vmul.f32 %v303, %v291
      %v306 = vadd.f32 %v304, 1e-05
      %v307 = vadd.f32 %v305, 1e-05
      %v308 = vrsqrt.pop %v306
      %v309 = vrsqrt.pop %v307
      %v310 = vmul.f32 %v294, %v308
      %v311 = vmul.f32 %v295, %v309
      %v313 = vlaneseq
      %v314 = vshrl.u32 %v313, 7
      %v315 = vsub.s32 0, %v314
      %v316 = vrot.slane %v282, %v315
      %v318 = vmul.f32 %v310, %v316
      %v319 = vmul.f32 %v311, %v316
      %v321 = vlaneseq
      %v322 = vshrl.u32 %v321, 7
      %v323 = vsub.s32 0, %v322
      %v324 = vrot.slane %v283, %v323
      %v326 = vadd.f32 %v318, %v324
      %v327 = vadd.f32 %v319, %v324
      %v328 = vpack.c.bf16 %v327, %v326
      %v329 = vld [vmem:[%s3] sm:$0xff]
      %v330 = vld [vmem:[%s3 + $0x8] sm:$0xff]
      %v331 = vld [vmem:[%s3 + $0x10] sm:$0xff]
      %v332 = vld [vmem:[%s3 + $0x18] sm:$0xff]
      %v333 = vld [vmem:[%s3 + $0x20] sm:$0xff]
      %v334 = vld [vmem:[%s3 + $0x28] sm:$0xff]
      %v335 = vld [vmem:[%s3 + $0x30] sm:$0xff]
      %v336 = vld [vmem:[%s3 + $0x38] sm:$0xff]
      %v337 = vld [vmem:[%s4] sm:$0x3]
      %v339 = vlaneseq
      %v340 = vshrl.u32 %v339, 7
      %v341 = vsub.s32 0, %v340
      %v342 = vrot.slane %v337, %v341
      %v343 = vlaneseq
      %v344 = vshrl.u32 %v343, 7
      %v345 = vsub.s32 1, %v344
      %v346 = vrot.slane %v337, %v345
      %v357 = vunpack.c.l.b16 %v329
      %v358 = vunpack.c.h.b16 %v329
      %v359 = vunpack.c.l.b16 %v330
      %v360 = vunpack.c.h.b16 %v330
      %v361 = vunpack.c.l.b16 %v331
      %v362 = vunpack.c.h.b16 %v331
      %v363 = vunpack.c.l.b16 %v332
      %v364 = vunpack.c.h.b16 %v332
      %v365 = vunpack.c.l.b16 %v333
      %v366 = vunpack.c.h.b16 %v333
      %v367 = vunpack.c.l.b16 %v334
      %v368 = vunpack.c.h.b16 %v334
      %v369 = vunpack.c.l.b16 %v335
      %v370 = vunpack.c.h.b16 %v335
      %v371 = vunpack.c.l.b16 %v336
      %v372 = vunpack.c.h.b16 %v336
      %v373 = vpack.c.b16 %v359, %v357
      %v374 = vpack.c.b16 %v360, %v358
      %v375 = vpack.c.b16 %v363, %v361
      %v376 = vpack.c.b16 %v364, %v362
      %v377 = vpack.c.b16 %v367, %v365
      %v378 = vpack.c.b16 %v368, %v366
      %v379 = vpack.c.b16 %v371, %v369
      %v380 = vpack.c.b16 %v372, %v370
      %v390 = vsel %vm284, %v328, 0
      %392 = vmatprep.subr.bf16.mxu0 %v374
      %393 = vmatpush1.bf16.msra.mxu0 %v373
      %394 = vmatprep.subr.bf16.mxu0 %v376
      %395 = vmatpush1.bf16.msra.mxu0 %v375
      %396 = vmatprep.subr.bf16.mxu0 %v378
      %397 = vmatpush1.bf16.msra.mxu0 %v377
      %398 = vmatprep.subr.bf16.mxu0 %v380
      %399 = vmatpush1.bf16.msra.mxu0 %v379
      %400 = vmatprep.subr.bf16.mxu0 0
      %401 = vmatpush1.bf16.msra.mxu0 0
      %402 = vmatprep.subr.bf16.mxu0 0
      %403 = vmatpush1.bf16.msra.mxu0 0
      %404 = vmatprep.subr.bf16.mxu0 0
      %405 = vmatpush1.bf16.msra.mxu0 0
      %406 = vmatprep.subr.bf16.mxu0 0
      %407 = vmatpush1.bf16.msra.mxu0 0
      %408 = vmatprep.subr.bf16.mxu0 0
      %409 = vmatpush1.bf16.msra.mxu0 0
      %410 = vmatprep.subr.bf16.mxu0 0
      %411 = vmatpush1.bf16.msra.mxu0 0
      %412 = vmatprep.subr.bf16.mxu0 0
      %413 = vmatpush1.bf16.msra.mxu0 0
      %414 = vmatprep.subr.bf16.mxu0 0
      %415 = vmatpush1.bf16.msra.mxu0 0
      %416 = vmatprep.subr.bf16.mxu0 0
      %417 = vmatpush1.bf16.msra.mxu0 0
      %418 = vmatprep.subr.bf16.mxu0 0
      %419 = vmatpush1.bf16.msra.mxu0 0
      %420 = vmatprep.subr.bf16.mxu0 0
      %421 = vmatpush1.bf16.msra.mxu0 0
      %422 = vmatprep.subr.bf16.mxu0 0
      %423 = vmatpush1.bf16.msra.mxu0 0
      %424 = vmatprep.mubr.bf16.mxu0 0
      %425 = vmatmul.mubr.bf16.gmra.mrb[0].mxu0 %v390
      %v426 = vpop.f32.mrb[0].mxu0
      %v427 = vadd.f32 %v342, %v426
      %v428 = vpop.f32.mrb[0].mxu0
      %v429 = vadd.f32 %v346, %v428
      %v430 = vpop.f32.mrb[0].mxu0
      %v431 = vadd.f32 %v342, %v430
      %v432 = vpop.f32.mrb[0].mxu0
      %v433 = vadd.f32 %v346, %v432
      %434 = vdwg.mxu0
      %437 = vrot.lane.b32.xlu0 %v427, 112
      %v438 = vpop.permute.xlu0 %437
      %439 = vrot.lane.b32.xlu0 %v431, 112
      %v440 = vpop.permute.xlu0 %439
      %443 = vrot.lane.b32.xlu0 %v427, 96
      %v444 = vpop.permute.xlu0 %443
      %445 = vrot.lane.b32.xlu0 %v431, 96
      %v446 = vpop.permute.xlu0 %445
      %449 = vrot.lane.b32.xlu0 %v427, 80
      %v450 = vpop.permute.xlu0 %449
      %451 = vrot.lane.b32.xlu0 %v431, 80
      %v452 = vpop.permute.xlu0 %451
      %457 = vrot.lane.b32.xlu0 %v429, 112
      %v458 = vpop.permute.xlu0 %457
      %459 = vrot.lane.b32.xlu0 %v433, 112
      %v460 = vpop.permute.xlu0 %459
      %463 = vrot.lane.b32.xlu0 %v429, 96
      %v464 = vpop.permute.xlu0 %463
      %465 = vrot.lane.b32.xlu0 %v433, 96
      %v466 = vpop.permute.xlu0 %465
      %469 = vrot.lane.b32.xlu0 %v429, 80
      %v470 = vpop.permute.xlu0 %469
      %471 = vrot.lane.b32.xlu0 %v433, 80
      %v472 = vpop.permute.xlu0 %471
      %v475 = vld [vmem:[%s5] sm:$0xff]
      %v476 = vld [vmem:[%s5 + $0x8] sm:$0xff]
      %v477 = vld [vmem:[%s6] sm:$0xff]
      %v478 = vld [vmem:[%s6 + $0x8] sm:$0xff]
      %v479 = vsub.f32 0.0, %v427
      %v480 = vsub.f32 0.0, %v431
      %v481 = vsub.f32 0.0, %v438
      %v482 = vsub.f32 0.0, %v440
      %v483 = vsub.f32 0.0, %v444
      %v484 = vsub.f32 0.0, %v446
      %v485 = vsub.f32 0.0, %v450
      %v486 = vsub.f32 0.0, %v452
      %495 = vrot.lane.b32.xlu0 %v479, 126
      %v496 = vpop.permute.xlu0 %495
      %497 = vrot.lane.b32.xlu0 %v480, 126
      %v498 = vpop.permute.xlu0 %497
      %499 = vrot.lane.b32.xlu0 %v481, 126
      %v500 = vpop.permute.xlu0 %499
      %501 = vrot.lane.b32.xlu0 %v482, 126
      %v502 = vpop.permute.xlu0 %501
      %503 = vrot.lane.b32.xlu0 %v483, 126
      %v504 = vpop.permute.xlu0 %503
      %505 = vrot.lane.b32.xlu0 %v484, 126
      %v506 = vpop.permute.xlu0 %505
      %507 = vrot.lane.b32.xlu0 %v485, 126
      %v508 = vpop.permute.xlu0 %507
      %509 = vrot.lane.b32.xlu0 %v486, 126
      %v510 = vpop.permute.xlu0 %509
      %519 = vrot.lane.b32.xlu0 %v427, 2
      %v520 = vpop.permute.xlu0 %519
      %521 = vrot.lane.b32.xlu0 %v431, 2
      %v522 = vpop.permute.xlu0 %521
      %523 = vrot.lane.b32.xlu0 %v438, 2
      %v524 = vpop.permute.xlu0 %523
      %525 = vrot.lane.b32.xlu0 %v440, 2
      %v526 = vpop.permute.xlu0 %525
      %527 = vrot.lane.b32.xlu0 %v444, 2
      %v528 = vpop.permute.xlu0 %527
      %529 = vrot.lane.b32.xlu0 %v446, 2
      %v530 = vpop.permute.xlu0 %529
      %531 = vrot.lane.b32.xlu0 %v450, 2
      %v532 = vpop.permute.xlu0 %531
      %533 = vrot.lane.b32.xlu0 %v452, 2
      %v534 = vpop.permute.xlu0 %533
      %vm543 = vcmask 15360
      %v544 = vsel %vm543, %v496, %v520
      %v545 = vsel %vm543, %v498, %v522
      %v546 = vsel %vm543, %v500, %v524
      %v547 = vsel %vm543, %v502, %v526
      %v548 = vsel %vm543, %v504, %v528
      %v549 = vsel %vm543, %v506, %v530
      %v550 = vsel %vm543, %v508, %v532
      %v551 = vsel %vm543, %v510, %v534
      %vm552 = vcmask 31744
      %v553 = vsel %vm552, %v544, 0.0
      %v554 = vsel %vm552, %v545, 0.0
      %v555 = vsel %vm552, %v546, 0.0
      %v556 = vsel %vm552, %v547, 0.0
      %v557 = vsel %vm552, %v548, 0.0
      %v558 = vsel %vm552, %v549, 0.0
      %v559 = vsel %vm552, %v550, 0.0
      %v560 = vsel %vm552, %v551, 0.0
      %v561 = vmul.f32 %v427, %v475
      %v562 = vmul.f32 %v431, %v476
      %v563 = vmul.f32 %v438, %v475
      %v564 = vmul.f32 %v440, %v476
      %v565 = vmul.f32 %v444, %v475
      %v566 = vmul.f32 %v446, %v476
      %v567 = vmul.f32 %v450, %v475
      %v568 = vmul.f32 %v452, %v476
      %v569 = vmul.f32 %v553, %v477
      %v570 = vmul.f32 %v554, %v478
      %v571 = vmul.f32 %v555, %v477
      %v572 = vmul.f32 %v556, %v478
      %v573 = vmul.f32 %v557, %v477
      %v574 = vmul.f32 %v558, %v478
      %v575 = vmul.f32 %v559, %v477
      %v576 = vmul.f32 %v560, %v478
      %v577 = vadd.f32 %v561, %v569
      %v578 = vadd.f32 %v562, %v570
      %v579 = vadd.f32 %v563, %v571
      %v580 = vadd.f32 %v564, %v572
      %v581 = vadd.f32 %v565, %v573
      %v582 = vadd.f32 %v566, %v574
      %v583 = vadd.f32 %v567, %v575
      %v584 = vadd.f32 %v568, %v576
      %v585 = vmul.f32 %v577, 0.25
      %v586 = vmul.f32 %v578, 0.25
      %v587 = vmul.f32 %v579, 0.25
      %v588 = vmul.f32 %v580, 0.25
      %v589 = vmul.f32 %v581, 0.25
      %v590 = vmul.f32 %v582, 0.25
      %v591 = vmul.f32 %v583, 0.25
      %v592 = vmul.f32 %v584, 0.25
      %593 = vrot.lane.b32.xlu0 %v479, 62
      %v594 = vpop.permute.xlu0 %593
      %595 = vrot.lane.b32.xlu0 %v480, 62
      %v596 = vpop.permute.xlu0 %595
      %597 = vrot.lane.b32.xlu0 %v481, 62
      %v598 = vpop.permute.xlu0 %597
      %599 = vrot.lane.b32.xlu0 %v482, 62
      %v600 = vpop.permute.xlu0 %599
      %601 = vrot.lane.b32.xlu0 %v483, 62
      %v602 = vpop.permute.xlu0 %601
      %603 = vrot.lane.b32.xlu0 %v484, 62
      %v604 = vpop.permute.xlu0 %603
      %605 = vrot.lane.b32.xlu0 %v485, 62
      %v606 = vpop.permute.xlu0 %605
      %607 = vrot.lane.b32.xlu0 %v486, 62
      %v608 = vpop.permute.xlu0 %607
      %617 = vrot.lane.b32.xlu0 %v427, 66
      %v618 = vpop.permute.xlu0 %617
      %619 = vrot.lane.b32.xlu0 %v431, 66
      %v620 = vpop.permute.xlu0 %619
      %621 = vrot.lane.b32.xlu0 %v438, 66
      %v622 = vpop.permute.xlu0 %621
      %623 = vrot.lane.b32.xlu0 %v440, 66
      %v624 = vpop.permute.xlu0 %623
      %625 = vrot.lane.b32.xlu0 %v444, 66
      %v626 = vpop.permute.xlu0 %625
      %627 = vrot.lane.b32.xlu0 %v446, 66
      %v628 = vpop.permute.xlu0 %627
      %629 = vrot.lane.b32.xlu0 %v450, 66
      %v630 = vpop.permute.xlu0 %629
      %631 = vrot.lane.b32.xlu0 %v452, 66
      %v632 = vpop.permute.xlu0 %631
      %v641 = vsel %vm543, %v594, %v618
      %v642 = vsel %vm543, %v596, %v620
      %v643 = vsel %vm543, %v598, %v622
      %v644 = vsel %vm543, %v600, %v624
      %v645 = vsel %vm543, %v602, %v626
      %v646 = vsel %vm543, %v604, %v628
      %v647 = vsel %vm543, %v606, %v630
      %v648 = vsel %vm543, %v608, %v632
      %v649 = vsel %vm552, %v641, 0.0
      %v650 = vsel %vm552, %v642, 0.0
      %v651 = vsel %vm552, %v643, 0.0
      %v652 = vsel %vm552, %v644, 0.0
      %v653 = vsel %vm552, %v645, 0.0
      %v654 = vsel %vm552, %v646, 0.0
      %v655 = vsel %vm552, %v647, 0.0
      %v656 = vsel %vm552, %v648, 0.0
      %659 = vrot.lane.b32.xlu0 %v475, 64
      %v660 = vpop.permute.xlu0 %659
      %661 = vrot.lane.b32.xlu0 %v476, 64
      %v662 = vpop.permute.xlu0 %661
      %v665 = vmul.f32 %v427, %v660
      %v666 = vmul.f32 %v431, %v662
      %v667 = vmul.f32 %v438, %v660
      %v668 = vmul.f32 %v440, %v662
      %v669 = vmul.f32 %v444, %v660
      %v670 = vmul.f32 %v446, %v662
      %v671 = vmul.f32 %v450, %v660
      %v672 = vmul.f32 %v452, %v662
      %v673 = vmul.f32 %v649, %v477
      %v674 = vmul.f32 %v650, %v478
      %v675 = vmul.f32 %v651, %v477
      %v676 = vmul.f32 %v652, %v478
      %v677 = vmul.f32 %v653, %v477
      %v678 = vmul.f32 %v654, %v478
      %v679 = vmul.f32 %v655, %v477
      %v680 = vmul.f32 %v656, %v478
      %689 = vrot.lane.b32.xlu0 %v673, 64
      %v690 = vpop.permute.xlu0 %689
      %691 = vrot.lane.b32.xlu0 %v674, 64
      %v692 = vpop.permute.xlu0 %691
      %693 = vrot.lane.b32.xlu0 %v675, 64
      %v694 = vpop.permute.xlu0 %693
      %695 = vrot.lane.b32.xlu0 %v676, 64
      %v696 = vpop.permute.xlu0 %695
      %697 = vrot.lane.b32.xlu0 %v677, 64
      %v698 = vpop.permute.xlu0 %697
      %699 = vrot.lane.b32.xlu0 %v678, 64
      %v700 = vpop.permute.xlu0 %699
      %701 = vrot.lane.b32.xlu0 %v679, 64
      %v702 = vpop.permute.xlu0 %701
      %703 = vrot.lane.b32.xlu0 %v680, 64
      %v704 = vpop.permute.xlu0 %703
      %v713 = vadd.f32 %v665, %v690
      %v714 = vadd.f32 %v666, %v692
      %v715 = vadd.f32 %v667, %v694
      %v716 = vadd.f32 %v668, %v696
      %v717 = vadd.f32 %v669, %v698
      %v718 = vadd.f32 %v670, %v700
      %v719 = vadd.f32 %v671, %v702
      %v720 = vadd.f32 %v672, %v704
      %v721 = vlaneseq
      %v722 = vshrl.u32 %v721, 7
      %v723 = vadd.s32 %v722, 8
      %v724 = vlaneseq
      %v725 = vand.u32 %v724, 127
      %vm726 = vcmp.le.s32.totalorder %v725, %v722
      %vm727 = vcmp.le.s32.totalorder %v725, %v723
      %v728 = vpack.c.bf16 %v586, %v585
      %v729 = vpack.c.bf16 %v588, %v587
      %v730 = vpack.c.bf16 %v590, %v589
      %v731 = vpack.c.bf16 %v592, %v591
      %v732 = vpack.c.bf16 %v714, %v713
      %v733 = vpack.c.bf16 %v716, %v715
      %v734 = vpack.c.bf16 %v718, %v717
      %v735 = vpack.c.bf16 %v720, %v719
      %737 = vrot.lane.b32.xlu0 %v732, 64
      %v738 = vpop.permute.xlu0 %737
      %vm739 = vcmask 130048
      %v741 = vsel %vm739, %v728, 0
      %v744 = vsel %vm739, %v738, 0
      %746 = vmatprep.subr.bf16.mxu0 0
      %747 = vmatpush1.bf16.xpose.msra.mxu0 %v744
      %748 = vmatprep.subr.bf16.mxu0 0
      %749 = vmatpush1.bf16.xpose.msra.mxu0 0
      %750 = vmatprep.subr.bf16.mxu0 0
      %751 = vmatpush1.bf16.xpose.msra.mxu0 0
      %752 = vmatprep.subr.bf16.mxu0 0
      %753 = vmatpush1.bf16.xpose.msra.mxu0 0
      %754 = vmatprep.subr.bf16.mxu0 0
      %755 = vmatpush1.bf16.xpose.msra.mxu0 0
      %756 = vmatprep.subr.bf16.mxu0 0
      %757 = vmatpush1.bf16.xpose.msra.mxu0 0
      %758 = vmatprep.subr.bf16.mxu0 0
      %759 = vmatpush1.bf16.xpose.msra.mxu0 0
      %760 = vmatprep.subr.bf16.mxu0 0
      %761 = vmatpush1.bf16.xpose.msra.mxu0 0
      %762 = vmatprep.subr.bf16.mxu0 0
      %763 = vmatpush1.bf16.xpose.msra.mxu0 0
      %764 = vmatprep.subr.bf16.mxu0 0
      %765 = vmatpush1.bf16.xpose.msra.mxu0 0
      %766 = vmatprep.subr.bf16.mxu0 0
      %767 = vmatpush1.bf16.xpose.msra.mxu0 0
      %768 = vmatprep.subr.bf16.mxu0 0
      %769 = vmatpush1.bf16.xpose.msra.mxu0 0
      %770 = vmatprep.subr.bf16.mxu0 0
      %771 = vmatpush1.bf16.xpose.msra.mxu0 0
      %772 = vmatprep.subr.bf16.mxu0 0
      %773 = vmatpush1.bf16.xpose.msra.mxu0 0
      %774 = vmatprep.subr.bf16.mxu0 0
      %775 = vmatpush1.bf16.xpose.msra.mxu0 0
      %776 = vmatprep.subr.bf16.mxu0 0
      %777 = vmatpush1.bf16.xpose.msra.mxu0 0
      %778 = vmatprep.mubr.bf16.mxu0 0
      %779 = vmatmul.mubr.bf16.gmra.mrb[0].mxu0 %v741
      %v780 = vpop.f32.mrb[0].mxu0
      %v781 = vadd.f32 0.0, %v780
      %v782 = vpop.f32.mrb[0].mxu0
      %v783 = vpop.f32.mrb[0].mxu0
      %v784 = vadd.f32 0.0, %v783
      %v785 = vpop.f32.mrb[0].mxu0
      %786 = vdwg.mxu0
      %788 = vrot.lane.b32.xlu0 %v733, 64
      %v789 = vpop.permute.xlu0 %788
      %v791 = vsel %vm739, %v729, 0
      %v794 = vsel %vm739, %v789, 0
      %796 = vmatprep.subr.bf16.mxu0 0
      %797 = vmatpush1.bf16.xpose.msra.mxu0 %v794
      %798 = vmatprep.subr.bf16.mxu0 0
      %799 = vmatpush1.bf16.xpose.msra.mxu0 0
      %800 = vmatprep.subr.bf16.mxu0 0
      %801 = vmatpush1.bf16.xpose.msra.mxu0 0
      %802 = vmatprep.subr.bf16.mxu0 0
      %803 = vmatpush1.bf16.xpose.msra.mxu0 0
      %804 = vmatprep.subr.bf16.mxu0 0
      %805 = vmatpush1.bf16.xpose.msra.mxu0 0
      %806 = vmatprep.subr.bf16.mxu0 0
      %807 = vmatpush1.bf16.xpose.msra.mxu0 0
      %808 = vmatprep.subr.bf16.mxu0 0
      %809 = vmatpush1.bf16.xpose.msra.mxu0 0
      %810 = vmatprep.subr.bf16.mxu0 0
      %811 = vmatpush1.bf16.xpose.msra.mxu0 0
      %812 = vmatprep.subr.bf16.mxu0 0
      %813 = vmatpush1.bf16.xpose.msra.mxu0 0
      %814 = vmatprep.subr.bf16.mxu0 0
      %815 = vmatpush1.bf16.xpose.msra.mxu0 0
      %816 = vmatprep.subr.bf16.mxu0 0
      %817 = vmatpush1.bf16.xpose.msra.mxu0 0
      %818 = vmatprep.subr.bf16.mxu0 0
      %819 = vmatpush1.bf16.xpose.msra.mxu0 0
      %820 = vmatprep.subr.bf16.mxu0 0
      %821 = vmatpush1.bf16.xpose.msra.mxu0 0
      %822 = vmatprep.subr.bf16.mxu0 0
      %823 = vmatpush1.bf16.xpose.msra.mxu0 0
      %824 = vmatprep.subr.bf16.mxu0 0
      %825 = vmatpush1.bf16.xpose.msra.mxu0 0
      %826 = vmatprep.subr.bf16.mxu0 0
      %827 = vmatpush1.bf16.xpose.msra.mxu0 0
      %828 = vmatprep.mubr.bf16.mxu0 0
      %829 = vmatmul.mubr.bf16.gmra.mrb[0].mxu0 %v791
      %v830 = vpop.f32.mrb[0].mxu0
      %v831 = vadd.f32 0.0, %v830
      %v832 = vpop.f32.mrb[0].mxu0
      %v833 = vpop.f32.mrb[0].mxu0
      %v834 = vadd.f32 0.0, %v833
      %v835 = vpop.f32.mrb[0].mxu0
      %836 = vdwg.mxu0
      %838 = vrot.lane.b32.xlu0 %v734, 64
      %v839 = vpop.permute.xlu0 %838
      %v841 = vsel %vm739, %v730, 0
      %v844 = vsel %vm739, %v839, 0
      %846 = vmatprep.subr.bf16.mxu0 0
      %847 = vmatpush1.bf16.xpose.msra.mxu0 %v844
      %848 = vmatprep.subr.bf16.mxu0 0
      %849 = vmatpush1.bf16.xpose.msra.mxu0 0
      %850 = vmatprep.subr.bf16.mxu0 0
      %851 = vmatpush1.bf16.xpose.msra.mxu0 0
      %852 = vmatprep.subr.bf16.mxu0 0
      %853 = vmatpush1.bf16.xpose.msra.mxu0 0
      %854 = vmatprep.subr.bf16.mxu0 0
      %855 = vmatpush1.bf16.xpose.msra.mxu0 0
      %856 = vmatprep.subr.bf16.mxu0 0
      %857 = vmatpush1.bf16.xpose.msra.mxu0 0
      %858 = vmatprep.subr.bf16.mxu0 0
      %859 = vmatpush1.bf16.xpose.msra.mxu0 0
      %860 = vmatprep.subr.bf16.mxu0 0
      %861 = vmatpush1.bf16.xpose.msra.mxu0 0
      %862 = vmatprep.subr.bf16.mxu0 0
      %863 = vmatpush1.bf16.xpose.msra.mxu0 0
      %864 = vmatprep.subr.bf16.mxu0 0
      %865 = vmatpush1.bf16.xpose.msra.mxu0 0
      %866 = vmatprep.subr.bf16.mxu0 0
      %867 = vmatpush1.bf16.xpose.msra.mxu0 0
      %868 = vmatprep.subr.bf16.mxu0 0
      %869 = vmatpush1.bf16.xpose.msra.mxu0 0
      %870 = vmatprep.subr.bf16.mxu0 0
      %871 = vmatpush1.bf16.xpose.msra.mxu0 0
      %872 = vmatprep.subr.bf16.mxu0 0
      %873 = vmatpush1.bf16.xpose.msra.mxu0 0
      %874 = vmatprep.subr.bf16.mxu0 0
      %875 = vmatpush1.bf16.xpose.msra.mxu0 0
      %876 = vmatprep.subr.bf16.mxu0 0
      %877 = vmatpush1.bf16.xpose.msra.mxu0 0
      %878 = vmatprep.mubr.bf16.mxu0 0
      %879 = vmatmul.mubr.bf16.gmra.mrb[0].mxu0 %v841
      %v880 = vpop.f32.mrb[0].mxu0
      %v881 = vadd.f32 0.0, %v880
      %v882 = vpop.f32.mrb[0].mxu0
      %v883 = vpop.f32.mrb[0].mxu0
      %v884 = vadd.f32 0.0, %v883
      %v885 = vpop.f32.mrb[0].mxu0
      %886 = vdwg.mxu0
      %888 = vrot.lane.b32.xlu0 %v735, 64
      %v889 = vpop.permute.xlu0 %888
      %v891 = vsel %vm739, %v731, 0
      %v894 = vsel %vm739, %v889, 0
      %896 = vmatprep.subr.bf16.mxu0 0
      %897 = vmatpush1.bf16.xpose.msra.mxu0 %v894
      %898 = vmatprep.subr.bf16.mxu0 0
      %899 = vmatpush1.bf16.xpose.msra.mxu0 0
      %900 = vmatprep.subr.bf16.mxu0 0
      %901 = vmatpush1.bf16.xpose.msra.mxu0 0
      %902 = vmatprep.subr.bf16.mxu0 0
      %903 = vmatpush1.bf16.xpose.msra.mxu0 0
      %904 = vmatprep.subr.bf16.mxu0 0
      %905 = vmatpush1.bf16.xpose.msra.mxu0 0
      %906 = vmatprep.subr.bf16.mxu0 0
      %907 = vmatpush1.bf16.xpose.msra.mxu0 0
      %908 = vmatprep.subr.bf16.mxu0 0
      %909 = vmatpush1.bf16.xpose.msra.mxu0 0
      %910 = vmatprep.subr.bf16.mxu0 0
      %911 = vmatpush1.bf16.xpose.msra.mxu0 0
      %912 = vmatprep.subr.bf16.mxu0 0
      %913 = vmatpush1.bf16.xpose.msra.mxu0 0
      %914 = vmatprep.subr.bf16.mxu0 0
      %915 = vmatpush1.bf16.xpose.msra.mxu0 0
      %916 = vmatprep.subr.bf16.mxu0 0
      %917 = vmatpush1.bf16.xpose.msra.mxu0 0
      %918 = vmatprep.subr.bf16.mxu0 0
      %919 = vmatpush1.bf16.xpose.msra.mxu0 0
      %920 = vmatprep.subr.bf16.mxu0 0
      %921 = vmatpush1.bf16.xpose.msra.mxu0 0
      %922 = vmatprep.subr.bf16.mxu0 0
      %923 = vmatpush1.bf16.xpose.msra.mxu0 0
      %924 = vmatprep.subr.bf16.mxu0 0
      %925 = vmatpush1.bf16.xpose.msra.mxu0 0
      %926 = vmatprep.subr.bf16.mxu0 0
      %927 = vmatpush1.bf16.xpose.msra.mxu0 0
      %928 = vmatprep.mubr.bf16.mxu0 0
      %929 = vmatmul.mubr.bf16.gmra.mrb[0].mxu0 %v891
      %v930 = vpop.f32.mrb[0].mxu0
      %v931 = vadd.f32 0.0, %v930
      %v932 = vpop.f32.mrb[0].mxu0
      %v933 = vpop.f32.mrb[0].mxu0
      %v934 = vadd.f32 0.0, %v933
      %v935 = vpop.f32.mrb[0].mxu0
      %936 = vdwg.mxu0
      %v937 = vsel %vm726, 1, 0
      %v938 = vsel %vm727, 1, 0
      %vm939 = vcmp.eq.s32.totalorder %v937, 1
      %vm940 = vcmp.eq.s32.totalorder %v938, 1
      %v941 = vsel %vm939, %v781, -1e+30
      %v942 = vsel %vm940, %v784, -1e+30
      %v943 = vsel %vm939, %v831, -1e+30
      %v944 = vsel %vm940, %v834, -1e+30
      %v945 = vsel %vm939, %v881, -1e+30
      %v946 = vsel %vm940, %v884, -1e+30
      %v947 = vsel %vm939, %v931, -1e+30
      %v948 = vsel %vm940, %v934, -1e+30
      %v949 = vsel %vm739, %v941, -inf
      %950 = vmax.xlane.f32.xlu0 %v949
      %v951 = vpop.xlane.xlu0 %950
      %v952 = vsel %vm739, %v942, -inf
      %953 = vmax.xlane.f32.xlu0 %v952
      %v954 = vpop.xlane.xlu0 %953
      %v955 = vsel %vm739, %v943, -inf
      %956 = vmax.xlane.f32.xlu0 %v955
      %v957 = vpop.xlane.xlu0 %956
      %v958 = vsel %vm739, %v944, -inf
      %959 = vmax.xlane.f32.xlu0 %v958
      %v960 = vpop.xlane.xlu0 %959
      %v961 = vsel %vm739, %v945, -inf
      %962 = vmax.xlane.f32.xlu0 %v961
      %v963 = vpop.xlane.xlu0 %962
      %v964 = vsel %vm739, %v946, -inf
      %965 = vmax.xlane.f32.xlu0 %v964
      %v966 = vpop.xlane.xlu0 %965
      %v967 = vsel %vm739, %v947, -inf
      %968 = vmax.xlane.f32.xlu0 %v967
      %v969 = vpop.xlane.xlu0 %968
      %v970 = vsel %vm739, %v948, -inf
      %971 = vmax.xlane.f32.xlu0 %v970
      %v972 = vpop.xlane.xlu0 %971
      %v973 = vsub.f32 %v941, %v951
      %v974 = vsub.f32 %v942, %v954
      %v975 = vsub.f32 %v943, %v957
      %v976 = vsub.f32 %v944, %v960
      %v977 = vsub.f32 %v945, %v963
      %v978 = vsub.f32 %v946, %v966
      %v979 = vsub.f32 %v947, %v969
      %v980 = vsub.f32 %v948, %v972
      %v981 = vmul.f32 %v973, 1.442695
      %v982 = vpow.pop %v981
      %v983 = vmul.f32 %v974, 1.442695
      %v984 = vpow.pop %v983
      %v985 = vmul.f32 %v975, 1.442695
      %v986 = vpow.pop %v985
      %v987 = vmul.f32 %v976, 1.442695
      %v988 = vpow.pop %v987
      %v989 = vmul.f32 %v977, 1.442695
      %v990 = vpow.pop %v989
      %v991 = vmul.f32 %v978, 1.442695
      %v992 = vpow.pop %v991
      %v993 = vmul.f32 %v979, 1.442695
      %v994 = vpow.pop %v993
      %v995 = vmul.f32 %v980, 1.442695
      %v996 = vpow.pop %v995
      %v997 = vsel %vm739, %v982, 0.0
      %998 = vadd.xlane.f32.xlu0 %v997
      %v999 = vpop.xlane.xlu0 %998
      %v1000 = vsel %vm739, %v984, 0.0
      %1001 = vadd.xlane.f32.xlu0 %v1000
      %v1002 = vpop.xlane.xlu0 %1001
      %v1003 = vsel %vm739, %v986, 0.0
      %1004 = vadd.xlane.f32.xlu0 %v1003
      %v1005 = vpop.xlane.xlu0 %1004
      %v1006 = vsel %vm739, %v988, 0.0
      %1007 = vadd.xlane.f32.xlu0 %v1006
      %v1008 = vpop.xlane.xlu0 %1007
      %v1009 = vsel %vm739, %v990, 0.0
      %1010 = vadd.xlane.f32.xlu0 %v1009
      %v1011 = vpop.xlane.xlu0 %1010
      %v1012 = vsel %vm739, %v992, 0.0
      %1013 = vadd.xlane.f32.xlu0 %v1012
      %v1014 = vpop.xlane.xlu0 %1013
      %v1015 = vsel %vm739, %v994, 0.0
      %1016 = vadd.xlane.f32.xlu0 %v1015
      %v1017 = vpop.xlane.xlu0 %1016
      %v1018 = vsel %vm739, %v996, 0.0
      %1019 = vadd.xlane.f32.xlu0 %v1018
      %v1020 = vpop.xlane.xlu0 %1019
      %v1021 = vrcp.pop %v999
      %v1022 = vrcp.pop %v1002
      %v1023 = vrcp.pop %v1005
      %v1024 = vrcp.pop %v1008
      %v1025 = vrcp.pop %v1011
      %v1026 = vrcp.pop %v1014
      %v1027 = vrcp.pop %v1017
      %v1028 = vrcp.pop %v1020
      %v1029 = vmul.f32 %v982, %v1021
      %v1030 = vmul.f32 %v984, %v1022
      %v1031 = vmul.f32 %v986, %v1023
      %v1032 = vmul.f32 %v988, %v1024
      %v1033 = vmul.f32 %v990, %v1025
      %v1034 = vmul.f32 %v992, %v1026
      %v1035 = vmul.f32 %v994, %v1027
      %v1036 = vmul.f32 %v996, %v1028
      %v1037 = vpack.c.bf16 %v1030, %v1029
      %v1038 = vpack.c.bf16 %v1032, %v1031
      %v1039 = vpack.c.bf16 %v1034, %v1033
      %v1040 = vpack.c.bf16 %v1036, %v1035
      %v1041 = vpack.c.bf16 %v433, %v429
      %v1042 = vpack.c.bf16 %v460, %v458
      %v1043 = vpack.c.bf16 %v466, %v464
      %v1044 = vpack.c.bf16 %v472, %v470
      %v1046 = vsel %vm739, %v1037, 0
      %1048 = vmatprep.subr.bf16.mxu0 0
      %1049 = vmatpush1.bf16.msra.mxu0 %v1041
      %1050 = vmatprep.subr.bf16.mxu0 0
      %1051 = vmatpush1.bf16.msra.mxu0 0
      %1052 = vmatprep.subr.bf16.mxu0 0
      %1053 = vmatpush1.bf16.msra.mxu0 0
      %1054 = vmatprep.subr.bf16.mxu0 0
      %1055 = vmatpush1.bf16.msra.mxu0 0
      %1056 = vmatprep.subr.bf16.mxu0 0
      %1057 = vmatpush1.bf16.msra.mxu0 0
      %1058 = vmatprep.subr.bf16.mxu0 0
      %1059 = vmatpush1.bf16.msra.mxu0 0
      %1060 = vmatprep.subr.bf16.mxu0 0
      %1061 = vmatpush1.bf16.msra.mxu0 0
      %1062 = vmatprep.subr.bf16.mxu0 0
      %1063 = vmatpush1.bf16.msra.mxu0 0
      %1064 = vmatprep.subr.bf16.mxu0 0
      %1065 = vmatpush1.bf16.msra.mxu0 0
      %1066 = vmatprep.subr.bf16.mxu0 0
      %1067 = vmatpush1.bf16.msra.mxu0 0
      %1068 = vmatprep.subr.bf16.mxu0 0
      %1069 = vmatpush1.bf16.msra.mxu0 0
      %1070 = vmatprep.subr.bf16.mxu0 0
      %1071 = vmatpush1.bf16.msra.mxu0 0
      %1072 = vmatprep.subr.bf16.mxu0 0
      %1073 = vmatpush1.bf16.msra.mxu0 0
      %1074 = vmatprep.subr.bf16.mxu0 0
      %1075 = vmatpush1.bf16.msra.mxu0 0
      %1076 = vmatprep.subr.bf16.mxu0 0
      %1077 = vmatpush1.bf16.msra.mxu0 0
      %1078 = vmatprep.subr.bf16.mxu0 0
      %1079 = vmatpush1.bf16.msra.mxu0 0
      %1080 = vmatprep.mubr.bf16.mxu0 0
      %1081 = vmatmul.mubr.bf16.gmra.mrb[0].mxu0 %v1046
      %v1082 = vpop.f32.mrb[0].mxu0
      %v1083 = vadd.f32 0.0, %v1082
      %v1084 = vpop.f32.mrb[0].mxu0
      %v1085 = vpop.f32.mrb[0].mxu0
      %v1086 = vadd.f32 0.0, %v1085
      %v1087 = vpop.f32.mrb[0].mxu0
      %1088 = vdwg.mxu0
      %v1090 = vsel %vm739, %v1038, 0
      %1092 = vmatprep.subr.bf16.mxu0 0
      %1093 = vmatpush1.bf16.msra.mxu0 %v1042
      %1094 = vmatprep.subr.bf16.mxu0 0
      %1095 = vmatpush1.bf16.msra.mxu0 0
      %1096 = vmatprep.subr.bf16.mxu0 0
      %1097 = vmatpush1.bf16.msra.mxu0 0
      %1098 = vmatprep.subr.bf16.mxu0 0
      %1099 = vmatpush1.bf16.msra.mxu0 0
      %1100 = vmatprep.subr.bf16.mxu0 0
      %1101 = vmatpush1.bf16.msra.mxu0 0
      %1102 = vmatprep.subr.bf16.mxu0 0
      %1103 = vmatpush1.bf16.msra.mxu0 0
      %1104 = vmatprep.subr.bf16.mxu0 0
      %1105 = vmatpush1.bf16.msra.mxu0 0
      %1106 = vmatprep.subr.bf16.mxu0 0
      %1107 = vmatpush1.bf16.msra.mxu0 0
      %1108 = vmatprep.subr.bf16.mxu0 0
      %1109 = vmatpush1.bf16.msra.mxu0 0
      %1110 = vmatprep.subr.bf16.mxu0 0
      %1111 = vmatpush1.bf16.msra.mxu0 0
      %1112 = vmatprep.subr.bf16.mxu0 0
      %1113 = vmatpush1.bf16.msra.mxu0 0
      %1114 = vmatprep.subr.bf16.mxu0 0
      %1115 = vmatpush1.bf16.msra.mxu0 0
      %1116 = vmatprep.subr.bf16.mxu0 0
      %1117 = vmatpush1.bf16.msra.mxu0 0
      %1118 = vmatprep.subr.bf16.mxu0 0
      %1119 = vmatpush1.bf16.msra.mxu0 0
      %1120 = vmatprep.subr.bf16.mxu0 0
      %1121 = vmatpush1.bf16.msra.mxu0 0
      %1122 = vmatprep.subr.bf16.mxu0 0
      %1123 = vmatpush1.bf16.msra.mxu0 0
      %1124 = vmatprep.mubr.bf16.mxu0 0
      %1125 = vmatmul.mubr.bf16.gmra.mrb[0].mxu0 %v1090
      %v1126 = vpop.f32.mrb[0].mxu0
      %v1127 = vadd.f32 0.0, %v1126
      %v1128 = vpop.f32.mrb[0].mxu0
      %v1129 = vpop.f32.mrb[0].mxu0
      %v1130 = vadd.f32 0.0, %v1129
      %v1131 = vpop.f32.mrb[0].mxu0
      %1132 = vdwg.mxu0
      %v1134 = vsel %vm739, %v1039, 0
      %1136 = vmatprep.subr.bf16.mxu0 0
      %1137 = vmatpush1.bf16.msra.mxu0 %v1043
      %1138 = vmatprep.subr.bf16.mxu0 0
      %1139 = vmatpush1.bf16.msra.mxu0 0
      %1140 = vmatprep.subr.bf16.mxu0 0
      %1141 = vmatpush1.bf16.msra.mxu0 0
      %1142 = vmatprep.subr.bf16.mxu0 0
      %1143 = vmatpush1.bf16.msra.mxu0 0
      %1144 = vmatprep.subr.bf16.mxu0 0
      %1145 = vmatpush1.bf16.msra.mxu0 0
      %1146 = vmatprep.subr.bf16.mxu0 0
      %1147 = vmatpush1.bf16.msra.mxu0 0
      %1148 = vmatprep.subr.bf16.mxu0 0
      %1149 = vmatpush1.bf16.msra.mxu0 0
      %1150 = vmatprep.subr.bf16.mxu0 0
      %1151 = vmatpush1.bf16.msra.mxu0 0
      %1152 = vmatprep.subr.bf16.mxu0 0
      %1153 = vmatpush1.bf16.msra.mxu0 0
      %1154 = vmatprep.subr.bf16.mxu0 0
      %1155 = vmatpush1.bf16.msra.mxu0 0
      %1156 = vmatprep.subr.bf16.mxu0 0
      %1157 = vmatpush1.bf16.msra.mxu0 0
      %1158 = vmatprep.subr.bf16.mxu0 0
      %1159 = vmatpush1.bf16.msra.mxu0 0
      %1160 = vmatprep.subr.bf16.mxu0 0
      %1161 = vmatpush1.bf16.msra.mxu0 0
      %1162 = vmatprep.subr.bf16.mxu0 0
      %1163 = vmatpush1.bf16.msra.mxu0 0
      %1164 = vmatprep.subr.bf16.mxu0 0
      %1165 = vmatpush1.bf16.msra.mxu0 0
      %1166 = vmatprep.subr.bf16.mxu0 0
      %1167 = vmatpush1.bf16.msra.mxu0 0
      %1168 = vmatprep.mubr.bf16.mxu0 0
      %1169 = vmatmul.mubr.bf16.gmra.mrb[0].mxu0 %v1134
      %v1170 = vpop.f32.mrb[0].mxu0
      %v1171 = vadd.f32 0.0, %v1170
      %v1172 = vpop.f32.mrb[0].mxu0
      %v1173 = vpop.f32.mrb[0].mxu0
      %v1174 = vadd.f32 0.0, %v1173
      %v1175 = vpop.f32.mrb[0].mxu0
      %1176 = vdwg.mxu0
      %v1178 = vsel %vm739, %v1040, 0
      %1180 = vmatprep.subr.bf16.mxu0 0
      %1181 = vmatpush1.bf16.msra.mxu0 %v1044
      %1182 = vmatprep.subr.bf16.mxu0 0
      %1183 = vmatpush1.bf16.msra.mxu0 0
      %1184 = vmatprep.subr.bf16.mxu0 0
      %1185 = vmatpush1.bf16.msra.mxu0 0
      %1186 = vmatprep.subr.bf16.mxu0 0
      %1187 = vmatpush1.bf16.msra.mxu0 0
      %1188 = vmatprep.subr.bf16.mxu0 0
      %1189 = vmatpush1.bf16.msra.mxu0 0
      %1190 = vmatprep.subr.bf16.mxu0 0
      %1191 = vmatpush1.bf16.msra.mxu0 0
      %1192 = vmatprep.subr.bf16.mxu0 0
      %1193 = vmatpush1.bf16.msra.mxu0 0
      %1194 = vmatprep.subr.bf16.mxu0 0
      %1195 = vmatpush1.bf16.msra.mxu0 0
      %1196 = vmatprep.subr.bf16.mxu0 0
      %1197 = vmatpush1.bf16.msra.mxu0 0
      %1198 = vmatprep.subr.bf16.mxu0 0
      %1199 = vmatpush1.bf16.msra.mxu0 0
      %1200 = vmatprep.subr.bf16.mxu0 0
      %1201 = vmatpush1.bf16.msra.mxu0 0
      %1202 = vmatprep.subr.bf16.mxu0 0
      %1203 = vmatpush1.bf16.msra.mxu0 0
      %1204 = vmatprep.subr.bf16.mxu0 0
      %1205 = vmatpush1.bf16.msra.mxu0 0
      %1206 = vmatprep.subr.bf16.mxu0 0
      %1207 = vmatpush1.bf16.msra.mxu0 0
      %1208 = vmatprep.subr.bf16.mxu0 0
      %1209 = vmatpush1.bf16.msra.mxu0 0
      %1210 = vmatprep.subr.bf16.mxu0 0
      %1211 = vmatpush1.bf16.msra.mxu0 0
      %1212 = vmatprep.mubr.bf16.mxu0 0
      %1213 = vmatmul.mubr.bf16.gmra.mrb[0].mxu0 %v1178
      %v1214 = vpop.f32.mrb[0].mxu0
      %v1215 = vadd.f32 0.0, %v1214
      %v1216 = vpop.f32.mrb[0].mxu0
      %v1217 = vpop.f32.mrb[0].mxu0
      %v1218 = vadd.f32 0.0, %v1217
      %v1219 = vpop.f32.mrb[0].mxu0
      %1220 = vdwg.mxu0
      %1223 = vrot.lane.b32.xlu0 %v1127, 16
      %v1224 = vpop.permute.xlu0 %1223
      %1225 = vrot.lane.b32.xlu0 %v1130, 16
      %v1226 = vpop.permute.xlu0 %1225
      %1231 = vrot.lane.b32.xlu0 %v1171, 32
      %v1232 = vpop.permute.xlu0 %1231
      %1233 = vrot.lane.b32.xlu0 %v1174, 32
      %v1234 = vpop.permute.xlu0 %1233
      %1239 = vrot.lane.b32.xlu0 %v1215, 48
      %v1240 = vpop.permute.xlu0 %1239
      %1241 = vrot.lane.b32.xlu0 %v1218, 48
      %v1242 = vpop.permute.xlu0 %1241
      %v1245 = vsel %vm739, %v1083, %v1224
      %v1246 = vsel %vm739, %v1086, %v1226
      %vm1247 = vcmask 261120
      %v1248 = vsel %vm1247, %v1245, %v1232
      %v1249 = vsel %vm1247, %v1246, %v1234
      %vm1250 = vcmask 392192
      %v1251 = vsel %vm1250, %v1248, %v1240
      %v1252 = vsel %vm1250, %v1249, %v1242
      %v1253 = vpack.c.bf16 %v1252, %v1251
      %v1255 = vunpack.c.l.b16 %v1253
      %v1256 = vunpack.c.h.b16 %v1253
      %v1257 = vpack.c.b16 %v1255, %v1255
      %v1258 = vpack.c.b16 %v1256, %v1256
      %vm1261 = vcmask 519168
      %1262 = vst.msk [vmem:[%s278] sm:$0xf] %vm1261, %v1257
      %1263 = vst.msk [vmem:[%s278 + $0x4] sm:$0xf] %vm1261, %v1258
      %p1264 = scmp.lt.s32.totalorder %s18, 1
      %s1265 = scalar_select %p1264, %s18, 1
      %s1266 = smul.addr %s1265, 2
      %s1267 = smul.addr %s1266, 4
      %s1268 = scalar_lea.vmem %s7, %s1267
      // Predicated region
      $region49: #{_lambda_.7} parent=47 // pred_check
        %p1269 = pneg %p188
      $region50: #{_lambda_.7} parent=47 // pred_check_branch
        %1271 = sbr.rel (%p1269) target = $region52
      $region51: #{_lambda_.7} parent=47 // pred_region
        _
      $region52: #{_lambda_.7} parent=47 // pred_fallthru
        _
    $region48: #{_lambda_.7} parent=5 // pred_fallthru
      _
    %p1272 = scmp.le.s32.totalorder 2, %s13
    // Predicated region
    $region53: #{_lambda_.7} parent=5 // pred_check
      %p1273 = pneg %p1272
    $region54: #{_lambda_.7} parent=5 // pred_check_branch
      %1275 = sbr.rel (%p1273) target = $region56
    $region55: #{_lambda_.7} parent=5 // pred_region
      %s1276 = ssub.s32 %s13, 2
      // Predicated region
      $region57: #{_lambda_.7} parent=55 // pred_check
        %p1277 = pneg %p194
      $region58: #{_lambda_.7} parent=55 // pred_check_branch
        %1279 = sbr.rel (%p1277) target = $region60
      $region59: #{_lambda_.7} parent=55 // pred_region
        %p1280 = scmp.lt.s32.totalorder %s19, 1
        %s1281 = scalar_select %p1280, %s19, 1
        %s1282 = smul.addr %s1281, 2
        %s1283 = smul.addr %s1282, 4
        %s1284 = scalar_lea.vmem %s7, %s1283
      $region60: #{_lambda_.7} parent=55 // pred_fallthru
        _
    $region56: #{_lambda_.7} parent=5 // pred_fallthru
      _
  $region6: #{_lambda_.7} parent=0 // loop_footer
    %s17 = sadd.s32 1, %s13
  $region7: #{_lambda_.7} parent=0 // loop_footer_branch
    %12 = sbr.rel target = $region3
  $region8: #{_lambda_.7} parent=0 // loop_exit
    _

// kernel: _lambda_.11
$region0: #{_lambda_.11}
  #allocation0 [shape = 'u32[]', space=smem, size = 0x4, offset = 0x4, fixed_abs, tag = 'smem constant byte address 0x4 - core index']
  #allocation1 [shape = 'u32[144,128]{1,0:T(1,128)}', space=vmem, size = 0x12000, scoped, tag = 'internal scratch']
  #allocation2 [shape = 'bf16[16,64]{1,0:T(16,128)(2,1)}', space=vmem, size = 0x1000, scoped, tag = 'scratch operand']
  #allocation3 [shape = 'bf16[16,64]{1,0:T(16,128)(2,1)}', space=vmem, size = 0x1000, scoped, tag = 'scratch operand']
  #allocation4 [shape = 'f32[16,1]{1,0:T(8,128)}', space=vmem, size = 0x2000, scoped, tag = 'scratch operand']
  #allocation5 [shape = 'f32[16,1]{1,0:T(8,128)}', space=vmem, size = 0x2000, scoped, tag = 'scratch operand']
  #allocation6 [shape = 'f32[16,1]{1,0:T(8,128)}', space=vmem, size = 0x2000, scoped, tag = 'scratch operand']
  #allocation7 [shape = 'f32[16,1]{1,0:T(8,128)}', space=vmem, size = 0x2000, scoped, tag = 'scratch operand']
  #allocation8 [shape = 'f32[16,1]{1,0:T(8,128)}', space=vmem, size = 0x2000, scoped, tag = 'scratch operand']
  #allocation9 [shape = 'f32[16,1]{1,0:T(8,128)}', space=vmem, size = 0x2000, scoped, tag = 'scratch operand']
  %s0 = inlined_call_operand.vmem [shape: f32[32,64], index: 0, kind: input, shape index: {}]
  %s1 = inlined_call_operand.vmem [shape: f32[1,64], index: 1, kind: input, shape index: {}]
  %s2 = inlined_call_operand.vmem [shape: f32[1,64], index: 2, kind: input, shape index: {}]
  %s3 = inlined_call_operand.vmem [shape: bf16[64,64], index: 3, kind: input, shape index: {}]
  %s4 = inlined_call_operand.vmem [shape: f32[1,64], index: 4, kind: input, shape index: {}]
  %s5 = inlined_call_operand.vmem [shape: bf16[64,128], index: 5, kind: input, shape index: {}]
  %s6 = inlined_call_operand.vmem [shape: s32[32,1], index: 6, kind: input, shape index: {}]
  %s7 = inlined_call_operand.vmem [shape: s32[32,1], index: 7, kind: input, shape index: {}]
  %s8 = inlined_call_operand.vmem [shape: f32[32,1], index: 8, kind: input, shape index: {}]
  %s9 = inlined_call_operand.vmem [shape: f32[32,1], index: 9, kind: input, shape index: {}]
  %s10 = inlined_call_operand.hbm [shape: f32[1,1], index: 10, kind: output, shape index: {0}]
  %s11 = inlined_call_operand.hbm [shape: f32[1,1], index: 11, kind: output, shape index: {1}]
  %12 = xla_tuple %s10, %s11
  %s13 = sld [smem:[#allocation0]]
  $region93: #{_lambda_.11} parent=0
    _
  %s15 = ssub.s32 1, %s13
  %s16 = scalar_select 0, %s15, %s13
  $region1: #{_lambda_.11} parent=0
    #allocation10 [shape = 'u8[512]{0}', space=vmem, size = 0x400, scoped, tag = 'output window, operand 0, single buffered']
    #allocation11 [shape = 's32[2]{0}', space=sflag, size = 0x8, scoped, tag = 'scoped memory for _lambda_.11']
    #allocation12 [shape = 'u8[512]{0}', space=vmem, size = 0x400, scoped, tag = 'output window, operand 1, single buffered']
    #allocation13 [shape = 's32[1]{0}', space=sflag, size = 0x4, scoped, tag = 'scoped memory for _lambda_.11']
    %17 = vsyncpa [#allocation11], 0
    %18 = vsyncpa [#allocation13], 0
    loop: start=0, step=1, limit=4
    $region2: #{_lambda_.11} parent=1 // loop_pre_header
      _
    $region3: #{_lambda_.11} parent=1 // loop_header
      %s20 = sphi 0, %s24
      %p21 = scmp.ge.s32.totalorder %s20, 4
      %s27 = sphi 0, %s39
      %s28 = sphi 0, %s35
      %s29 = sphi 0, %s27
      %s30 = sphi 0, %s28
      %s31 = sphi 0, %s29
      %s32 = sphi 0, %s30
      %s42 = sphi 0, %s44
      %s45 = sphi 0, %s42
      %s46 = sphi 0, %s45
      %s62 = sphi 0, %s46
      %s66 = sphi 0, %s66
      %s68 = sphi 0, %s66
      %s69 = sphi 0, %s68
      %s83 = sphi 0, %s69
      %s87 = sphi 0, %s87
      %s89 = sphi 0, %s87
      %s90 = sphi 0, %s89
      %s104 = sphi 0, %s90
      %s108 = sphi 0, %s108
      %s110 = sphi 0, %s108
      %s111 = sphi 0, %s110
      %s125 = sphi 0, %s111
      %s129 = sphi 0, %s129
      %s131 = sphi 0, %s129
      %s132 = sphi 0, %s131
      %s146 = sphi 0, %s132
      %s152 = sphi 0, %s154
      %s155 = sphi 0, %s152
      %s156 = sphi 0, %s155
      %s172 = sphi 0, %s156
      %s178 = sphi 0, %s180
      %s181 = sphi 0, %s178
      %s182 = sphi 0, %s181
      %s198 = sphi 0, %s182
      %s204 = sphi 0, %s206
      %s207 = sphi 0, %s204
      %s208 = sphi 0, %s207
      %s224 = sphi 0, %s208
      %s230 = sphi 0, %s232
      %s233 = sphi 0, %s230
      %s234 = sphi 0, %s233
      %s250 = sphi 0, %s234
      %s256 = sphi 0, %s258
      %s259 = sphi 0, %s256
      %s260 = sphi 0, %s259
      %s276 = sphi 0, %s260
      %s280 = sphi 0, %s280
      %s282 = sphi 0, %s280
      %s283 = sphi 0, %s282
      %s297 = sphi 0, %s283
      %s301 = sphi 0, %s301
      %s303 = sphi 0, %s301
      %s304 = sphi 0, %s303
      %s318 = sphi 0, %s304
    $region4: #{_lambda_.11} parent=1 // loop_header_branch
      %23 = sbr.rel (%p21) target = $region8
    $region5: #{_lambda_.11} parent=1 // loop_body
      %s25 = ssub.s32 %s20, 1
      %s26 = ssub.s32 %s20, 2
      %s33 = sadd.s32 1, %s28
      %p34 = scmp.ge.s32.totalorder %s33, 1
      %s35 = scalar_select %p34, 0, %s33
      %s36 = sadd.s32 1, %s27
      %s37 = scalar_select %p34, %s36, %s27
      %p38 = scmp.ge.s32.totalorder %s37, 2
      %s39 = scalar_select %p38, 0, %s37
      %s40 = ssub.s32 %s27, %s39
      %p41 = scmp.eq.s32.totalorder %s40, 0
      %s43 = sadd.s32 %s42, 1
      %s44 = scalar_select %p41, %s42, %s43
      %p47 = pneg %p41
      %p48 = scmp.eq.s32.totalorder %s20, 1
      %p49 = por %p47, %p48
      %p50 = scmp.ne.s32.totalorder %s42, %s45
      %p51 = scmp.eq.s32.totalorder %s20, 0
      %p52 = por %p50, %p51
      %p53 = scmp.ne.s32.totalorder %s42, %s45
      %p54 = scmp.eq.s32.totalorder %s25, 1
      %p55 = por %p53, %p54
      %p56 = scmp.ne.s32.totalorder %s45, %s46
      %p57 = scmp.eq.s32.totalorder %s25, 0
      %p58 = por %p56, %p57
      %p59 = scmp.ne.s32.totalorder %s45, %s46
      %p60 = scmp.eq.s32.totalorder %s26, 1
      %p61 = por %p59, %p60
      %p63 = scmp.ne.s32.totalorder %s46, %s62
      %p64 = scmp.eq.s32.totalorder %s26, 0
      %p65 = por %p63, %p64
      %s67 = sadd.s32 %s66, 1
      %p70 = scmp.eq.s32.totalorder %s20, 1
      %p71 = scmp.ne.s32.totalorder %s66, %s68
      %p72 = scmp.eq.s32.totalorder %s20, 0
      %p73 = por %p71, %p72
      %p74 = scmp.ne.s32.totalorder %s66, %s68
      %p75 = scmp.eq.s32.totalorder %s25, 1
      %p76 = por %p74, %p75
      %p77 = scmp.ne.s32.totalorder %s68, %s69
      %p78 = scmp.eq.s32.totalorder %s25, 0
      %p79 = por %p77, %p78
      %p80 = scmp.ne.s32.totalorder %s68, %s69
      %p81 = scmp.eq.s32.totalorder %s26, 1
      %p82 = por %p80, %p81
      %p84 = scmp.ne.s32.totalorder %s69, %s83
      %p85 = scmp.eq.s32.totalorder %s26, 0
      %p86 = por %p84, %p85
      %s88 = sadd.s32 %s87, 1
      %p91 = scmp.eq.s32.totalorder %s20, 1
      %p92 = scmp.ne.s32.totalorder %s87, %s89
      %p93 = scmp.eq.s32.totalorder %s20, 0
      %p94 = por %p92, %p93
      %p95 = scmp.ne.s32.totalorder %s87, %s89
      %p96 = scmp.eq.s32.totalorder %s25, 1
      %p97 = por %p95, %p96
      %p98 = scmp.ne.s32.totalorder %s89, %s90
      %p99 = scmp.eq.s32.totalorder %s25, 0
      %p100 = por %p98, %p99
      %p101 = scmp.ne.s32.totalorder %s89, %s90
      %p102 = scmp.eq.s32.totalorder %s26, 1
      %p103 = por %p101, %p102
      %p105 = scmp.ne.s32.totalorder %s90, %s104
      %p106 = scmp.eq.s32.totalorder %s26, 0
      %p107 = por %p105, %p106
      %s109 = sadd.s32 %s108, 1
      %p112 = scmp.eq.s32.totalorder %s20, 1
      %p113 = scmp.ne.s32.totalorder %s108, %s110
      %p114 = scmp.eq.s32.totalorder %s20, 0
      %p115 = por %p113, %p114
      %p116 = scmp.ne.s32.totalorder %s108, %s110
      %p117 = scmp.eq.s32.totalorder %s25, 1
      %p118 = por %p116, %p117
      %p119 = scmp.ne.s32.totalorder %s110, %s111
      %p120 = scmp.eq.s32.totalorder %s25, 0
      %p121 = por %p119, %p120
      %p122 = scmp.ne.s32.totalorder %s110, %s111
      %p123 = scmp.eq.s32.totalorder %s26, 1
      %p124 = por %p122, %p123
      %p126 = scmp.ne.s32.totalorder %s111, %s125
      %p127 = scmp.eq.s32.totalorder %s26, 0
      %p128 = por %p126, %p127
      %s130 = sadd.s32 %s129, 1
      %p133 = scmp.eq.s32.totalorder %s20, 1
      %p134 = scmp.ne.s32.totalorder %s129, %s131
      %p135 = scmp.eq.s32.totalorder %s20, 0
      %p136 = por %p134, %p135
      %p137 = scmp.ne.s32.totalorder %s129, %s131
      %p138 = scmp.eq.s32.totalorder %s25, 1
      %p139 = por %p137, %p138
      %p140 = scmp.ne.s32.totalorder %s131, %s132
      %p141 = scmp.eq.s32.totalorder %s25, 0
      %p142 = por %p140, %p141
      %p143 = scmp.ne.s32.totalorder %s131, %s132
      %p144 = scmp.eq.s32.totalorder %s26, 1
      %p145 = por %p143, %p144
      %p147 = scmp.ne.s32.totalorder %s132, %s146
      %p148 = scmp.eq.s32.totalorder %s26, 0
      %p149 = por %p147, %p148
      %s150 = ssub.s32 %s28, %s35
      %p151 = scmp.eq.s32.totalorder %s150, 0
      %s153 = sadd.s32 %s152, 1
      %s154 = scalar_select %p151, %s152, %s153
      %p157 = pneg %p151
      %p158 = scmp.eq.s32.totalorder %s20, 1
      %p159 = por %p157, %p158
      %p160 = scmp.ne.s32.totalorder %s152, %s155
      %p161 = scmp.eq.s32.totalorder %s20, 0
      %p162 = por %p160, %p161
      %p163 = scmp.ne.s32.totalorder %s152, %s155
      %p164 = scmp.eq.s32.totalorder %s25, 1
      %p165 = por %p163, %p164
      %p166 = scmp.ne.s32.totalorder %s155, %s156
      %p167 = scmp.eq.s32.totalorder %s25, 0
      %p168 = por %p166, %p167
      %p169 = scmp.ne.s32.totalorder %s155, %s156
      %p170 = scmp.eq.s32.totalorder %s26, 1
      %p171 = por %p169, %p170
      %p173 = scmp.ne.s32.totalorder %s156, %s172
      %p174 = scmp.eq.s32.totalorder %s26, 0
      %p175 = por %p173, %p174
      %s176 = ssub.s32 %s27, %s39
      %p177 = scmp.eq.s32.totalorder %s176, 0
      %s179 = sadd.s32 %s178, 1
      %s180 = scalar_select %p177, %s178, %s179
      %p183 = pneg %p177
      %p184 = scmp.eq.s32.totalorder %s20, 1
      %p185 = por %p183, %p184
      %p186 = scmp.ne.s32.totalorder %s178, %s181
      %p187 = scmp.eq.s32.totalorder %s20, 0
      %p188 = por %p186, %p187
      %p189 = scmp.ne.s32.totalorder %s178, %s181
      %p190 = scmp.eq.s32.totalorder %s25, 1
      %p191 = por %p189, %p190
      %p192 = scmp.ne.s32.totalorder %s181, %s182
      %p193 = scmp.eq.s32.totalorder %s25, 0
      %p194 = por %p192, %p193
      %p195 = scmp.ne.s32.totalorder %s181, %s182
      %p196 = scmp.eq.s32.totalorder %s26, 1
      %p197 = por %p195, %p196
      %p199 = scmp.ne.s32.totalorder %s182, %s198
      %p200 = scmp.eq.s32.totalorder %s26, 0
      %p201 = por %p199, %p200
      %s202 = ssub.s32 %s27, %s39
      %p203 = scmp.eq.s32.totalorder %s202, 0
      %s205 = sadd.s32 %s204, 1
      %s206 = scalar_select %p203, %s204, %s205
      %p209 = pneg %p203
      %p210 = scmp.eq.s32.totalorder %s20, 1
      %p211 = por %p209, %p210
      %p212 = scmp.ne.s32.totalorder %s204, %s207
      %p213 = scmp.eq.s32.totalorder %s20, 0
      %p214 = por %p212, %p213
      %p215 = scmp.ne.s32.totalorder %s204, %s207
      %p216 = scmp.eq.s32.totalorder %s25, 1
      %p217 = por %p215, %p216
      %p218 = scmp.ne.s32.totalorder %s207, %s208
      %p219 = scmp.eq.s32.totalorder %s25, 0
      %p220 = por %p218, %p219
      %p221 = scmp.ne.s32.totalorder %s207, %s208
      %p222 = scmp.eq.s32.totalorder %s26, 1
      %p223 = por %p221, %p222
      %p225 = scmp.ne.s32.totalorder %s208, %s224
      %p226 = scmp.eq.s32.totalorder %s26, 0
      %p227 = por %p225, %p226
      %s228 = ssub.s32 %s27, %s39
      %p229 = scmp.eq.s32.totalorder %s228, 0
      %s231 = sadd.s32 %s230, 1
      %s232 = scalar_select %p229, %s230, %s231
      %p235 = pneg %p229
      %p236 = scmp.eq.s32.totalorder %s20, 1
      %p237 = por %p235, %p236
      %p238 = scmp.ne.s32.totalorder %s230, %s233
      %p239 = scmp.eq.s32.totalorder %s20, 0
      %p240 = por %p238, %p239
      %p241 = scmp.ne.s32.totalorder %s230, %s233
      %p242 = scmp.eq.s32.totalorder %s25, 1
      %p243 = por %p241, %p242
      %p244 = scmp.ne.s32.totalorder %s233, %s234
      %p245 = scmp.eq.s32.totalorder %s25, 0
      %p246 = por %p244, %p245
      %p247 = scmp.ne.s32.totalorder %s233, %s234
      %p248 = scmp.eq.s32.totalorder %s26, 1
      %p249 = por %p247, %p248
      %p251 = scmp.ne.s32.totalorder %s234, %s250
      %p252 = scmp.eq.s32.totalorder %s26, 0
      %p253 = por %p251, %p252
      %s254 = ssub.s32 %s27, %s39
      %p255 = scmp.eq.s32.totalorder %s254, 0
      %s257 = sadd.s32 %s256, 1
      %s258 = scalar_select %p255, %s256, %s257
      %p261 = pneg %p255
      %p262 = scmp.eq.s32.totalorder %s20, 1
      %p263 = por %p261, %p262
      %p264 = scmp.ne.s32.totalorder %s256, %s259
      %p265 = scmp.eq.s32.totalorder %s20, 0
      %p266 = por %p264, %p265
      %p267 = scmp.ne.s32.totalorder %s256, %s259
      %p268 = scmp.eq.s32.totalorder %s25, 1
      %p269 = por %p267, %p268
      %p270 = scmp.ne.s32.totalorder %s259, %s260
      %p271 = scmp.eq.s32.totalorder %s25, 0
      %p272 = por %p270, %p271
      %p273 = scmp.ne.s32.totalorder %s259, %s260
      %p274 = scmp.eq.s32.totalorder %s26, 1
      %p275 = por %p273, %p274
      %p277 = scmp.ne.s32.totalorder %s260, %s276
      %p278 = scmp.eq.s32.totalorder %s26, 0
      %p279 = por %p277, %p278
      %s281 = sadd.s32 %s280, 1
      %p284 = scmp.eq.s32.totalorder %s20, 1
      %p285 = scmp.ne.s32.totalorder %s280, %s282
      %p286 = scmp.eq.s32.totalorder %s20, 0
      %p287 = por %p285, %p286
      %p288 = scmp.ne.s32.totalorder %s280, %s282
      %p289 = scmp.eq.s32.totalorder %s25, 1
      %p290 = por %p288, %p289
      %p291 = scmp.ne.s32.totalorder %s282, %s283
      %p292 = scmp.eq.s32.totalorder %s25, 0
      %p293 = por %p291, %p292
      %p294 = scmp.ne.s32.totalorder %s282, %s283
      %p295 = scmp.eq.s32.totalorder %s26, 1
      %p296 = por %p294, %p295
      %p298 = scmp.ne.s32.totalorder %s283, %s297
      %p299 = scmp.eq.s32.totalorder %s26, 0
      %p300 = por %p298, %p299
      %s302 = sadd.s32 %s301, 1
      %p305 = scmp.eq.s32.totalorder %s20, 1
      %p306 = scmp.ne.s32.totalorder %s301, %s303
      %p307 = scmp.eq.s32.totalorder %s20, 0
      %p308 = por %p306, %p307
      %p309 = scmp.ne.s32.totalorder %s301, %s303
      %p310 = scmp.eq.s32.totalorder %s25, 1
      %p311 = por %p309, %p310
      %p312 = scmp.ne.s32.totalorder %s303, %s304
      %p313 = scmp.eq.s32.totalorder %s25, 0
      %p314 = por %p312, %p313
      %p315 = scmp.ne.s32.totalorder %s303, %s304
      %p316 = scmp.eq.s32.totalorder %s26, 1
      %p317 = por %p315, %p316
      %p319 = scmp.ne.s32.totalorder %s304, %s318
      %p320 = scmp.eq.s32.totalorder %s26, 0
      %p321 = por %p319, %p320
      %p322 = scmp.le.s32.totalorder 1, %s20
      %p323 = scmp.lt.s32.totalorder %s20, 3
      %p324 = pnand %p322, %p323
      %p325 = pneg %p324
      // Predicated region
      $region9: #{_lambda_.11} parent=5 // pred_check
        _
      $region10: #{_lambda_.11} parent=5 // pred_check_branch
        %327 = sbr.rel (%p324) target = $region12
      $region11: #{_lambda_.11} parent=5 // pred_region
        %s328 = ssub.s32 %s20, 1
        // Predicated region
        $region13: #{_lambda_.11} parent=11 // pred_check
          %p329 = pneg %p79
        $region14: #{_lambda_.11} parent=11 // pred_check_branch
          %331 = sbr.rel (%p329) target = $region16
        $region15: #{_lambda_.11} parent=11 // pred_region
          _
        $region16: #{_lambda_.11} parent=11 // pred_fallthru
          _
        // Predicated region
        $region17: #{_lambda_.11} parent=11 // pred_check
          %p332 = pneg %p100
        $region18: #{_lambda_.11} parent=11 // pred_check_branch
          %334 = sbr.rel (%p332) target = $region20
        $region19: #{_lambda_.11} parent=11 // pred_region
          _
        $region20: #{_lambda_.11} parent=11 // pred_fallthru
          _
        // Predicated region
        $region21: #{_lambda_.11} parent=11 // pred_check
          %p335 = pneg %p121
        $region22: #{_lambda_.11} parent=11 // pred_check_branch
          %337 = sbr.rel (%p335) target = $region24
        $region23: #{_lambda_.11} parent=11 // pred_region
          _
        $region24: #{_lambda_.11} parent=11 // pred_fallthru
          _
        // Predicated region
        $region25: #{_lambda_.11} parent=11 // pred_check
          %p338 = pneg %p142
        $region26: #{_lambda_.11} parent=11 // pred_check_branch
          %340 = sbr.rel (%p338) target = $region28
        $region27: #{_lambda_.11} parent=11 // pred_region
          _
        $region28: #{_lambda_.11} parent=11 // pred_fallthru
          _
        // Predicated region
        $region29: #{_lambda_.11} parent=11 // pred_check
          %p341 = pneg %p168
        $region30: #{_lambda_.11} parent=11 // pred_check_branch
          %343 = sbr.rel (%p341) target = $region32
        $region31: #{_lambda_.11} parent=11 // pred_region
          %p344 = scmp.lt.s32.totalorder %s30, 0
          %s345 = scalar_select %p344, %s30, 0
          %s346 = smul.addr %s345, 4
          %s347 = scalar_lea.vmem %s5, %s346
        $region32: #{_lambda_.11} parent=11 // pred_fallthru
          _
      $region12: #{_lambda_.11} parent=5 // pred_fallthru
        _
      %p348 = scmp.lt.s32.totalorder %s20, 2
      // Predicated region
      $region33: #{_lambda_.11} parent=5 // pred_check
        %p349 = pneg %p348
      $region34: #{_lambda_.11} parent=5 // pred_check_branch
        %351 = sbr.rel (%p349) target = $region36
      $region35: #{_lambda_.11} parent=5 // pred_region
        // Predicated region
        $region37: #{_lambda_.11} parent=35 // pred_check
          %p352 = pneg %p52
        $region38: #{_lambda_.11} parent=35 // pred_check_branch
          %354 = sbr.rel (%p352) target = $region40
        $region39: #{_lambda_.11} parent=35 // pred_region
          %s355 = smul.u32 2, %s27
          %p356 = scmp.lt.s32.totalorder %s355, 3
          %s357 = scalar_select %p356, %s355, 3
          %s358 = smul.addr %s357, 8
          %s359 = scalar_lea.vmem %s0, %s358
          %s360 = smul.u32 2, %s27
        $region40: #{_lambda_.11} parent=35 // pred_fallthru
          _
        // Predicated region
        $region41: #{_lambda_.11} parent=35 // pred_check
          %p361 = pneg %p188
        $region42: #{_lambda_.11} parent=35 // pred_check_branch
          %363 = sbr.rel (%p361) target = $region44
        $region43: #{_lambda_.11} parent=35 // pred_region
          %s364 = smul.u32 2, %s27
          %p365 = scmp.lt.s32.totalorder %s364, 3
          %s366 = scalar_select %p365, %s364, 3
          %s367 = smul.addr %s366, 8
          %s368 = scalar_lea.vmem %s6, %s367
          %s369 = smul.u32 2, %s27
        $region44: #{_lambda_.11} parent=35 // pred_fallthru
          _
        // Predicated region
        $region45: #{_lambda_.11} parent=35 // pred_check
          %p370 = pneg %p214
        $region46: #{_lambda_.11} parent=35 // pred_check_branch
          %372 = sbr.rel (%p370) target = $region48
        $region47: #{_lambda_.11} parent=35 // pred_region
          %s373 = smul.u32 2, %s27
          %p374 = scmp.lt.s32.totalorder %s373, 3
          %s375 = scalar_select %p374, %s373, 3
          %s376 = smul.addr %s375, 8
          %s377 = scalar_lea.vmem %s7, %s376
          %s378 = smul.u32 2, %s27
        $region48: #{_lambda_.11} parent=35 // pred_fallthru
          _
        // Predicated region
        $region49: #{_lambda_.11} parent=35 // pred_check
          %p379 = pneg %p240
        $region50: #{_lambda_.11} parent=35 // pred_check_branch
          %381 = sbr.rel (%p379) target = $region52
        $region51: #{_lambda_.11} parent=35 // pred_region
          %s382 = smul.u32 2, %s27
          %p383 = scmp.lt.s32.totalorder %s382, 3
          %s384 = scalar_select %p383, %s382, 3
          %s385 = smul.addr %s384, 8
          %s386 = scalar_lea.vmem %s8, %s385
          %s387 = smul.u32 2, %s27
        $region52: #{_lambda_.11} parent=35 // pred_fallthru
          _
        // Predicated region
        $region53: #{_lambda_.11} parent=35 // pred_check
          %p388 = pneg %p266
        $region54: #{_lambda_.11} parent=35 // pred_check_branch
          %390 = sbr.rel (%p388) target = $region56
        $region55: #{_lambda_.11} parent=35 // pred_region
          %s391 = smul.u32 2, %s27
          %p392 = scmp.lt.s32.totalorder %s391, 3
          %s393 = scalar_select %p392, %s391, 3
          %s394 = smul.addr %s393, 8
          %s395 = scalar_lea.vmem %s9, %s394
          %s396 = smul.u32 2, %s27
        $region56: #{_lambda_.11} parent=35 // pred_fallthru
          _
      $region36: #{_lambda_.11} parent=5 // pred_fallthru
        _
      %p397 = scmp.le.s32.totalorder 1, %s20
      %p398 = scmp.lt.s32.totalorder %s20, 3
      %p399 = pnand %p397, %p398
      %p400 = pneg %p399
      // Predicated region
      $region57: #{_lambda_.11} parent=5 // pred_check
        _
      $region58: #{_lambda_.11} parent=5 // pred_check_branch
        %402 = sbr.rel (%p399) target = $region60
      $region59: #{_lambda_.11} parent=5 // pred_region
        %s403 = ssub.s32 %s20, 1
        %s404 = smul.u32 2, %s29
        %p405 = scmp.lt.s32.totalorder %s404, 3
        %s406 = scalar_select %p405, %s404, 3
        %s407 = smul.addr %s406, 8
        %s408 = scalar_lea.vmem %s0, %s407
        %p409 = pneg %p58
        %p410 = pneg %p55
        %p411 = pneg %p79
        %p412 = pneg %p76
        %p413 = pneg %p100
        %p414 = pneg %p97
        %p415 = pneg %p121
        %p416 = pneg %p118
        %p417 = pneg %p142
        %p418 = pneg %p139
        %p419 = scmp.lt.s32.totalorder %s30, 0
        %s420 = scalar_select %p419, %s30, 0
        %s421 = smul.addr %s420, 4
        %s422 = scalar_lea.vmem %s5, %s421
        %p423 = pneg %p168
        %p424 = pneg %p165
        %s425 = smul.u32 2, %s29
        %p426 = scmp.lt.s32.totalorder %s425, 3
        %s427 = scalar_select %p426, %s425, 3
        %s428 = smul.addr %s427, 8
        %s429 = scalar_lea.vmem %s6, %s428
        %p430 = pneg %p194
        %p431 = pneg %p191
        %s432 = smul.u32 2, %s29
        %p433 = scmp.lt.s32.totalorder %s432, 3
        %s434 = scalar_select %p433, %s432, 3
        %s435 = smul.addr %s434, 8
        %s436 = scalar_lea.vmem %s7, %s435
        %p437 = pneg %p220
        %p438 = pneg %p217
        %s439 = smul.u32 2, %s29
        %p440 = scmp.lt.s32.totalorder %s439, 3
        %s441 = scalar_select %p440, %s439, 3
        %s442 = smul.addr %s441, 8
        %s443 = scalar_lea.vmem %s8, %s442
        %p444 = pneg %p246
        %p445 = pneg %p243
        %s446 = smul.u32 2, %s29
        %p447 = scmp.lt.s32.totalorder %s446, 3
        %s448 = scalar_select %p447, %s446, 3
        %s449 = smul.addr %s448, 8
        %s450 = scalar_lea.vmem %s9, %s449
        %p451 = pneg %p272
        %p452 = pneg %p269
        %p453 = pneg %p293
        %p454 = pneg %p290
        %p455 = pneg %p314
        %p456 = pneg %p311
        %s457 = smul.u32 2, %s29
        %p458 = scmp.lt.s32.totalorder %s457, 3
        %s459 = scalar_select %p458, %s457, 3
        %s460 = smul.addr %s459, 8
        %s461 = scalar_lea.vmem %s0, %s460
        %s462 = smul.u32 2, %s29
        %p463 = scmp.lt.s32.totalorder %s30, 0
        %s464 = scalar_select %p463, %s30, 0
        %s465 = smul.addr %s464, 4
        %s466 = scalar_lea.vmem %s5, %s465
        %s467 = smul.u32 2, %s29
        %p468 = scmp.lt.s32.totalorder %s467, 3
        %s469 = scalar_select %p468, %s467, 3
        %s470 = smul.addr %s469, 8
        %s471 = scalar_lea.vmem %s6, %s470
        %s472 = smul.u32 2, %s29
        %s473 = smul.u32 2, %s29
        %p474 = scmp.lt.s32.totalorder %s473, 3
        %s475 = scalar_select %p474, %s473, 3
        %s476 = smul.addr %s475, 8
        %s477 = scalar_lea.vmem %s7, %s476
        %s478 = smul.u32 2, %s29
        %s479 = smul.u32 2, %s29
        %p480 = scmp.lt.s32.totalorder %s479, 3
        %s481 = scalar_select %p480, %s479, 3
        %s482 = smul.addr %s481, 8
        %s483 = scalar_lea.vmem %s8, %s482
        %s484 = smul.u32 2, %s29
        %s485 = smul.u32 2, %s29
        %p486 = scmp.lt.s32.totalorder %s485, 3
        %s487 = scalar_select %p486, %s485, 3
        %s488 = smul.addr %s487, 8
        %s489 = scalar_lea.vmem %s9, %s488
        %s490 = smul.u32 2, %s29
        %p492 = scmp.eq.s32.totalorder %s29, 0
        %p493 = scmp.eq.s32.totalorder %s30, 0
        %p494 = pnand %p492, %p493
        %p495 = pneg %p494
        // Predicated region
        $region61: #{_lambda_.11} parent=59 // pred_check
          _
        $region62: #{_lambda_.11} parent=59 // pred_check_branch
          %497 = sbr.rel (%p494) target = $region64
        $region63: #{_lambda_.11} parent=59 // pred_region
          %vm498 = vcmask 0
          %499 = vst.msk [vmem:[#allocation10] sm:$0x1] %vm498, 0.0
          %500 = vst.msk [vmem:[#allocation12] sm:$0x1] %vm498, 0.0
        $region64: #{_lambda_.11} parent=59 // pred_fallthru
          _
        // Predicated region
        $region65: #{_lambda_.11} parent=59 // pred_check
          %p501 = pneg %p493
        $region66: #{_lambda_.11} parent=59 // pred_check_branch
          %503 = sbr.rel (%p501) target = $region68
        $region67: #{_lambda_.11} parent=59 // pred_region
          %v504 = vld [vmem:[%s461] sm:$0xff]
          %v505 = vld [vmem:[%s461 + $0x8] sm:$0xff]
          %v506 = vld [vmem:[%s1] sm:$0x1]
          %v507 = vld [vmem:[%s2] sm:$0x1]
          %vm508 = vcmask 523264
          %v509 = vsel %vm508, %v504, 0.0
          %510 = vadd.xlane.f32.xlu0 %v509
          %v511 = vpop.xlane.xlu0 %510
          %v512 = vsel %vm508, %v505, 0.0
          %513 = vadd.xlane.f32.xlu0 %v512
          %v514 = vpop.xlane.xlu0 %513
          %v515 = vrcp.pop 64.0
          %v516 = vmul.f32 %v511, %v515
          %v517 = vmul.f32 %v514, %v515
          %v518 = vsub.f32 %v504, %v516
          %v519 = vsub.f32 %v505, %v517
          %v520 = vmul.f32 %v518, %v518
          %v521 = vmul.f32 %v519, %v519
          %v522 = vsel %vm508, %v520, 0.0
          %523 = vadd.xlane.f32.xlu0 %v522
          %v524 = vpop.xlane.xlu0 %523
          %v525 = vsel %vm508, %v521, 0.0
          %526 = vadd.xlane.f32.xlu0 %v525
          %v527 = vpop.xlane.xlu0 %526
          %v528 = vmul.f32 %v524, %v515
          %v529 = vmul.f32 %v527, %v515
          %v530 = vadd.f32 %v528, 1e-05
          %v531 = vadd.f32 %v529, 1e-05
          %v532 = vrsqrt.pop %v530
          %v533 = vrsqrt.pop %v531
          %v534 = vmul.f32 %v518, %v532
          %v535 = vmul.f32 %v519, %v533
          %v537 = vlaneseq
          %v538 = vshrl.u32 %v537, 7
          %v539 = vsub.s32 0, %v538
          %v540 = vrot.slane %v506, %v539
          %v542 = vmul.f32 %v534, %v540
          %v543 = vmul.f32 %v535, %v540
          %v545 = vlaneseq
          %v546 = vshrl.u32 %v545, 7
          %v547 = vsub.s32 0, %v546
          %v548 = vrot.slane %v507, %v547
          %v550 = vadd.f32 %v542, %v548
          %v551 = vadd.f32 %v543, %v548
          %v552 = vpack.c.bf16 %v551, %v550
          %v553 = vld [vmem:[%s3] sm:$0xf]
          %v554 = vld [vmem:[%s3 + $0x4] sm:$0xf]
          %v555 = vld [vmem:[%s3 + $0x8] sm:$0xf]
          %v556 = vld [vmem:[%s3 + $0xc] sm:$0xf]
          %v557 = vld [vmem:[%s3 + $0x10] sm:$0xf]
          %v558 = vld [vmem:[%s3 + $0x14] sm:$0xf]
          %v559 = vld [vmem:[%s3 + $0x18] sm:$0xf]
          %v560 = vld [vmem:[%s3 + $0x1c] sm:$0xf]
          %v561 = vld [vmem:[%s4] sm:$0x1]
          %v563 = vlaneseq
          %v564 = vshrl.u32 %v563, 7
          %v565 = vsub.s32 0, %v564
          %v566 = vrot.slane %v561, %v565
          %v576 = vunpack.c.l.b16 %v553
          %v577 = vunpack.c.l.b16 %v554
          %v578 = vunpack.c.l.b16 %v555
          %v579 = vunpack.c.l.b16 %v556
          %v580 = vunpack.c.l.b16 %v557
          %v581 = vunpack.c.l.b16 %v558
          %v582 = vunpack.c.l.b16 %v559
          %v583 = vunpack.c.l.b16 %v560
          %v584 = vpack.c.b16 %v577, %v576
          %v585 = vpack.c.b16 %v579, %v578
          %v586 = vpack.c.b16 %v581, %v580
          %v587 = vpack.c.b16 %v583, %v582
          %v593 = vsel %vm508, %v552, 0
          %595 = vmatprep.subr.bf16.mxu0 0
          %596 = vmatpush1.bf16.msra.mxu0 %v584
          %597 = vmatprep.subr.bf16.mxu0 0
          %598 = vmatpush1.bf16.msra.mxu0 %v585
          %599 = vmatprep.subr.bf16.mxu0 0
          %600 = vmatpush1.bf16.msra.mxu0 %v586
          %601 = vmatprep.subr.bf16.mxu0 0
          %602 = vmatpush1.bf16.msra.mxu0 %v587
          %603 = vmatprep.subr.bf16.mxu0 0
          %604 = vmatpush1.bf16.msra.mxu0 0
          %605 = vmatprep.subr.bf16.mxu0 0
          %606 = vmatpush1.bf16.msra.mxu0 0
          %607 = vmatprep.subr.bf16.mxu0 0
          %608 = vmatpush1.bf16.msra.mxu0 0
          %609 = vmatprep.subr.bf16.mxu0 0
          %610 = vmatpush1.bf16.msra.mxu0 0
          %611 = vmatprep.subr.bf16.mxu0 0
          %612 = vmatpush1.bf16.msra.mxu0 0
          %613 = vmatprep.subr.bf16.mxu0 0
          %614 = vmatpush1.bf16.msra.mxu0 0
          %615 = vmatprep.subr.bf16.mxu0 0
          %616 = vmatpush1.bf16.msra.mxu0 0
          %617 = vmatprep.subr.bf16.mxu0 0
          %618 = vmatpush1.bf16.msra.mxu0 0
          %619 = vmatprep.subr.bf16.mxu0 0
          %620 = vmatpush1.bf16.msra.mxu0 0
          %621 = vmatprep.subr.bf16.mxu0 0
          %622 = vmatpush1.bf16.msra.mxu0 0
          %623 = vmatprep.subr.bf16.mxu0 0
          %624 = vmatpush1.bf16.msra.mxu0 0
          %625 = vmatprep.subr.bf16.mxu0 0
          %626 = vmatpush1.bf16.msra.mxu0 0
          %627 = vmatprep.mubr.bf16.mxu0 0
          %628 = vmatmul.mubr.bf16.gmra.mrb[0].mxu0 %v593
          %v629 = vpop.f32.mrb[0].mxu0
          %v630 = vadd.f32 %v566, %v629
          %v631 = vpop.f32.mrb[0].mxu0
          %v632 = vpop.f32.mrb[0].mxu0
          %v633 = vadd.f32 %v566, %v632
          %v634 = vpop.f32.mrb[0].mxu0
          %635 = vdwg.mxu0
          %636 = vst.msk [vmem:[#allocation2] sm:$0xff] %vm508, %v552
          %v637 = vpack.c.bf16 %v633, %v630
          %638 = vst.msk [vmem:[#allocation3] sm:$0xff] %vm508, %v637
          %vm639 = vcmask 7168
          %640 = vst.msk [vmem:[#allocation4] sm:$0xff] %vm639, -1e+30
          %641 = vst.msk [vmem:[#allocation4 + $0x8] sm:$0xff] %vm639, -1e+30
          %642 = vst.msk [vmem:[#allocation7] sm:$0xff] %vm639, -1e+30
          %643 = vst.msk [vmem:[#allocation7 + $0x8] sm:$0xff] %vm639, -1e+30
          %644 = vst.msk [vmem:[#allocation5] sm:$0xff] %vm639, 0.0
          %645 = vst.msk [vmem:[#allocation5 + $0x8] sm:$0xff] %vm639, 0.0
          %646 = vst.msk [vmem:[#allocation8] sm:$0xff] %vm639, 0.0
          %647 = vst.msk [vmem:[#allocation8 + $0x8] sm:$0xff] %vm639, 0.0
          %648 = vst.msk [vmem:[#allocation6] sm:$0xff] %vm639, 0.0
          %649 = vst.msk [vmem:[#allocation6 + $0x8] sm:$0xff] %vm639, 0.0
          %650 = vst.msk [vmem:[#allocation9] sm:$0xff] %vm639, 0.0
          %651 = vst.msk [vmem:[#allocation9 + $0x8] sm:$0xff] %vm639, 0.0
        $region68: #{_lambda_.11} parent=59 // pred_fallthru
          _
        %v652 = vld [vmem:[%s466] sm:$0xf]
        %v653 = vld [vmem:[%s466 + $0x4] sm:$0xf]
        %v654 = vld [vmem:[%s466 + $0x8] sm:$0xf]
        %v655 = vld [vmem:[%s466 + $0xc] sm:$0xf]
        %v656 = vld [vmem:[%s466 + $0x10] sm:$0xf]
        %v657 = vld [vmem:[%s466 + $0x14] sm:$0xf]
        %v658 = vld [vmem:[%s466 + $0x18] sm:$0xf]
        %v659 = vld [vmem:[%s466 + $0x1c] sm:$0xf]
        %v660 = vlaneseq
        %v661 = vand.u32 %v660, 127
        %s662 = smul.u32 %s30, 128
        %v663 = vstv %s662
        %v664 = vadd.s32 %v661, %v663
        %v665 = vld [vmem:[#allocation2] sm:$0xff]
        %v666 = vld [vmem:[%s471] sm:$0xff]
        %v667 = vld [vmem:[%s471 + $0x8] sm:$0xff]
        %v676 = vunpack.c.l.b16 %v652
        %v677 = vunpack.c.l.b16 %v653
        %v678 = vunpack.c.l.b16 %v654
        %v679 = vunpack.c.l.b16 %v655
        %v680 = vunpack.c.l.b16 %v656
        %v681 = vunpack.c.l.b16 %v657
        %v682 = vunpack.c.l.b16 %v658
        %v683 = vunpack.c.l.b16 %v659
        %v684 = vpack.c.b16 %v677, %v676
        %v685 = vpack.c.b16 %v679, %v678
        %v686 = vpack.c.b16 %v681, %v680
        %v687 = vpack.c.b16 %v683, %v682
        %vm692 = vcmask 523264
        %v694 = vsel %vm692, %v665, 0
        %696 = vmatprep.subr.bf16.mxu0 0
        %697 = vmatpush1.bf16.msra.mxu0 %v684
        %698 = vmatprep.subr.bf16.mxu0 0
        %699 = vmatpush1.bf16.msra.mxu0 %v685
        %700 = vmatprep.subr.bf16.mxu0 0
        %701 = vmatpush1.bf16.msra.mxu0 %v686
        %702 = vmatprep.subr.bf16.mxu0 0
        %703 = vmatpush1.bf16.msra.mxu0 %v687
        %704 = vmatprep.subr.bf16.mxu0 0
        %705 = vmatpush1.bf16.msra.mxu0 0
        %706 = vmatprep.subr.bf16.mxu0 0
        %707 = vmatpush1.bf16.msra.mxu0 0
        %708 = vmatprep.subr.bf16.mxu0 0
        %709 = vmatpush1.bf16.msra.mxu0 0
        %710 = vmatprep.subr.bf16.mxu0 0
        %711 = vmatpush1.bf16.msra.mxu0 0
        %712 = vmatprep.subr.bf16.mxu0 0
        %713 = vmatpush1.bf16.msra.mxu0 0
        %714 = vmatprep.subr.bf16.mxu0 0
        %715 = vmatpush1.bf16.msra.mxu0 0
        %716 = vmatprep.subr.bf16.mxu0 0
        %717 = vmatpush1.bf16.msra.mxu0 0
        %718 = vmatprep.subr.bf16.mxu0 0
        %719 = vmatpush1.bf16.msra.mxu0 0
        %720 = vmatprep.subr.bf16.mxu0 0
        %721 = vmatpush1.bf16.msra.mxu0 0
        %722 = vmatprep.subr.bf16.mxu0 0
        %723 = vmatpush1.bf16.msra.mxu0 0
        %724 = vmatprep.subr.bf16.mxu0 0
        %725 = vmatpush1.bf16.msra.mxu0 0
        %726 = vmatprep.subr.bf16.mxu0 0
        %727 = vmatpush1.bf16.msra.mxu0 0
        %728 = vmatprep.mubr.bf16.mxu0 0
        %729 = vmatmul.mubr.bf16.gmra.mrb[0].mxu0 %v694
        %v730 = vpop.f32.mrb[0].mxu0
        %v731 = vadd.f32 0.0, %v730
        %v732 = vpop.f32.mrb[0].mxu0
        %v733 = vpop.f32.mrb[0].mxu0
        %v734 = vadd.f32 0.0, %v733
        %v735 = vpop.f32.mrb[0].mxu0
        %736 = vdwg.mxu0
        %v737 = vld [vmem:[#allocation4] sm:$0xff]
        %v738 = vld [vmem:[#allocation4 + $0x8] sm:$0xff]
        %739 = vmax.xlane.f32.xlu0 %v731
        %v740 = vpop.xlane.xlu0 %739
        %741 = vmax.xlane.f32.xlu0 %v734
        %v742 = vpop.xlane.xlu0 %741
        %v743 = vmax.f32 %v737, %v740
        %v744 = vmax.f32 %v738, %v742
        %v745 = vld [vmem:[#allocation5] sm:$0xff]
        %v746 = vld [vmem:[#allocation5 + $0x8] sm:$0xff]
        %v747 = vsub.f32 %v737, %v743
        %v748 = vsub.f32 %v738, %v744
        %v749 = vmul.f32 %v747, 1.442695
        %v750 = vpow.pop %v749
        %v751 = vmul.f32 %v748, 1.442695
        %v752 = vpow.pop %v751
        %v753 = vmul.f32 %v745, %v750
        %v754 = vmul.f32 %v746, %v752
        %756 = vset.pattern.permute.xlu0 0
        %757 = vperm.xlu0 %756, %v743
        %v758 = vpop.permute.xlu0 %757
        %761 = vset.pattern.permute.xlu0 0
        %762 = vperm.xlu0 %761, %v744
        %v763 = vpop.permute.xlu0 %762
        %v765 = vsub.f32 %v731, %v758
        %v766 = vsub.f32 %v734, %v763
        %v767 = vmul.f32 %v765, 1.442695
        %v768 = vpow.pop %v767
        %v769 = vmul.f32 %v766, 1.442695
        %v770 = vpow.pop %v769
        %771 = vadd.xlane.f32.xlu0 %v768
        %v772 = vpop.xlane.xlu0 %771
        %773 = vadd.xlane.f32.xlu0 %v770
        %v774 = vpop.xlane.xlu0 %773
        %v775 = vadd.f32 %v753, %v772
        %v776 = vadd.f32 %v754, %v774
        %vm777 = vcmask 7168
        %778 = vst.msk [vmem:[#allocation5] sm:$0xff] %vm777, %v775
        %779 = vst.msk [vmem:[#allocation5 + $0x8] sm:$0xff] %vm777, %v776
        %780 = vst.msk [vmem:[#allocation4] sm:$0xff] %vm777, %v743
        %781 = vst.msk [vmem:[#allocation4 + $0x8] sm:$0xff] %vm777, %v744
        %v782 = vld [vmem:[#allocation6] sm:$0xff]
        %v783 = vld [vmem:[#allocation6 + $0x8] sm:$0xff]
        %784 = vset.pattern.permute.xlu0 0
        %785 = vperm.xlu0 %784, %v666
        %v786 = vpop.permute.xlu0 %785
        %787 = vset.pattern.permute.xlu0 0
        %788 = vperm.xlu0 %787, %v667
        %v789 = vpop.permute.xlu0 %788
        %vm790 = vcmp.eq.s32.totalorder %v664, %v786
        %vm791 = vcmp.eq.s32.totalorder %v664, %v789
        %v792 = vsel %vm790, %v731, 0.0
        %v793 = vsel %vm791, %v734, 0.0
        %794 = vadd.xlane.f32.xlu0 %v792
        %v795 = vpop.xlane.xlu0 %794
        %796 = vadd.xlane.f32.xlu0 %v793
        %v797 = vpop.xlane.xlu0 %796
        %v798 = vadd.f32 %v782, %v795
        %v799 = vadd.f32 %v783, %v797
        %800 = vst.msk [vmem:[#allocation6] sm:$0xff] %vm777, %v798
        %801 = vst.msk [vmem:[#allocation6 + $0x8] sm:$0xff] %vm777, %v799
        %v802 = vld [vmem:[#allocation3] sm:$0xff]
        %v803 = vld [vmem:[%s477] sm:$0xff]
        %v804 = vld [vmem:[%s477 + $0x8] sm:$0xff]
        %v806 = vsel %vm692, %v802, 0
        %808 = vmatprep.subr.bf16.mxu0 0
        %809 = vmatpush1.bf16.msra.mxu0 %v684
        %810 = vmatprep.subr.bf16.mxu0 0
        %811 = vmatpush1.bf16.msra.mxu0 %v685
        %812 = vmatprep.subr.bf16.mxu0 0
        %813 = vmatpush1.bf16.msra.mxu0 %v686
        %814 = vmatprep.subr.bf16.mxu0 0
        %815 = vmatpush1.bf16.msra.mxu0 %v687
        %816 = vmatprep.subr.bf16.mxu0 0
        %817 = vmatpush1.bf16.msra.mxu0 0
        %818 = vmatprep.subr.bf16.mxu0 0
        %819 = vmatpush1.bf16.msra.mxu0 0
        %820 = vmatprep.subr.bf16.mxu0 0
        %821 = vmatpush1.bf16.msra.mxu0 0
        %822 = vmatprep.subr.bf16.mxu0 0
        %823 = vmatpush1.bf16.msra.mxu0 0
        %824 = vmatprep.subr.bf16.mxu0 0
        %825 = vmatpush1.bf16.msra.mxu0 0
        %826 = vmatprep.subr.bf16.mxu0 0
        %827 = vmatpush1.bf16.msra.mxu0 0
        %828 = vmatprep.subr.bf16.mxu0 0
        %829 = vmatpush1.bf16.msra.mxu0 0
        %830 = vmatprep.subr.bf16.mxu0 0
        %831 = vmatpush1.bf16.msra.mxu0 0
        %832 = vmatprep.subr.bf16.mxu0 0
        %833 = vmatpush1.bf16.msra.mxu0 0
        %834 = vmatprep.subr.bf16.mxu0 0
        %835 = vmatpush1.bf16.msra.mxu0 0
        %836 = vmatprep.subr.bf16.mxu0 0
        %837 = vmatpush1.bf16.msra.mxu0 0
        %838 = vmatprep.subr.bf16.mxu0 0
        %839 = vmatpush1.bf16.msra.mxu0 0
        %840 = vmatprep.mubr.bf16.mxu0 0
        %841 = vmatmul.mubr.bf16.gmra.mrb[0].mxu0 %v806
        %v842 = vpop.f32.mrb[0].mxu0
        %v843 = vadd.f32 0.0, %v842
        %v844 = vpop.f32.mrb[0].mxu0
        %v845 = vpop.f32.mrb[0].mxu0
        %v846 = vadd.f32 0.0, %v845
        %v847 = vpop.f32.mrb[0].mxu0
        %848 = vdwg.mxu0
        %v849 = vld [vmem:[#allocation7] sm:$0xff]
        %v850 = vld [vmem:[#allocation7 + $0x8] sm:$0xff]
        %851 = vmax.xlane.f32.xlu0 %v843
        %v852 = vpop.xlane.xlu0 %851
        %853 = vmax.xlane.f32.xlu0 %v846
        %v854 = vpop.xlane.xlu0 %853
        %v855 = vmax.f32 %v849, %v852
        %v856 = vmax.f32 %v850, %v854
        %v857 = vld [vmem:[#allocation8] sm:$0xff]
        %v858 = vld [vmem:[#allocation8 + $0x8] sm:$0xff]
        %v859 = vsub.f32 %v849, %v855
        %v860 = vsub.f32 %v850, %v856
        %v861 = vmul.f32 %v859, 1.442695
        %v862 = vpow.pop %v861
        %v863 = vmul.f32 %v860, 1.442695
        %v864 = vpow.pop %v863
        %v865 = vmul.f32 %v857, %v862
        %v866 = vmul.f32 %v858, %v864
        %868 = vset.pattern.permute.xlu0 0
        %869 = vperm.xlu0 %868, %v855
        %v870 = vpop.permute.xlu0 %869
        %873 = vset.pattern.permute.xlu0 0
        %874 = vperm.xlu0 %873, %v856
        %v875 = vpop.permute.xlu0 %874
        %v877 = vsub.f32 %v843, %v870
        %v878 = vsub.f32 %v846, %v875
        %v879 = vmul.f32 %v877, 1.442695
        %v880 = vpow.pop %v879
        %v881 = vmul.f32 %v878, 1.442695
        %v882 = vpow.pop %v881
        %883 = vadd.xlane.f32.xlu0 %v880
        %v884 = vpop.xlane.xlu0 %883
        %885 = vadd.xlane.f32.xlu0 %v882
        %v886 = vpop.xlane.xlu0 %885
        %v887 = vadd.f32 %v865, %v884
        %v888 = vadd.f32 %v866, %v886
        %889 = vst.msk [vmem:[#allocation8] sm:$0xff] %vm777, %v887
        %890 = vst.msk [vmem:[#allocation8 + $0x8] sm:$0xff] %vm777, %v888
        %891 = vst.msk [vmem:[#allocation7] sm:$0xff] %vm777, %v855
        %892 = vst.msk [vmem:[#allocation7 + $0x8] sm:$0xff] %vm777, %v856
        %v893 = vld [vmem:[#allocation9] sm:$0xff]
        %v894 = vld [vmem:[#allocation9 + $0x8] sm:$0xff]
        %895 = vset.pattern.permute.xlu0 0
        %896 = vperm.xlu0 %895, %v803
        %v897 = vpop.permute.xlu0 %896
        %898 = vset.pattern.permute.xlu0 0
        %899 = vperm.xlu0 %898, %v804
        %v900 = vpop.permute.xlu0 %899
        %vm901 = vcmp.eq.s32.totalorder %v664, %v897
        %vm902 = vcmp.eq.s32.totalorder %v664, %v900
        %v903 = vsel %vm901, %v843, 0.0
        %v904 = vsel %vm902, %v846, 0.0
        %905 = vadd.xlane.f32.xlu0 %v903
        %v906 = vpop.xlane.xlu0 %905
        %907 = vadd.xlane.f32.xlu0 %v904
        %v908 = vpop.xlane.xlu0 %907
        %v909 = vadd.f32 %v893, %v906
        %v910 = vadd.f32 %v894, %v908
        %911 = vst.msk [vmem:[#allocation9] sm:$0xff] %vm777, %v909
        %912 = vst.msk [vmem:[#allocation9 + $0x8] sm:$0xff] %vm777, %v910
        // Predicated region
        $region69: #{_lambda_.11} parent=59 // pred_check
          %p913 = pneg %p493
        $region70: #{_lambda_.11} parent=59 // pred_check_branch
          %915 = sbr.rel (%p913) target = $region72
        $region71: #{_lambda_.11} parent=59 // pred_region
          %v916 = vld [vmem:[#allocation4] sm:$0xff]
          %v917 = vld [vmem:[#allocation4 + $0x8] sm:$0xff]
          %v918 = vld [vmem:[#allocation5] sm:$0xff]
          %v919 = vld [vmem:[#allocation5 + $0x8] sm:$0xff]
          %v920 = vlog2.pop %v918
          %v921 = vmul.f32 %v920, 0.6931472
          %v922 = vlog2.pop %v919
          %v923 = vmul.f32 %v922, 0.6931472
          %v924 = vadd.f32 %v916, %v921
          %v925 = vadd.f32 %v917, %v923
          %v926 = vld [vmem:[#allocation6] sm:$0xff]
          %v927 = vld [vmem:[#allocation6 + $0x8] sm:$0xff]
          %v928 = vsub.f32 %v924, %v926
          %v929 = vsub.f32 %v925, %v927
          %v930 = vld [vmem:[%s483] sm:$0xff]
          %v931 = vld [vmem:[%s483 + $0x8] sm:$0xff]
          %v932 = vmul.f32 %v928, %v930
          %v933 = vmul.f32 %v929, %v931
          %v934 = vld [vmem:[#allocation7] sm:$0xff]
          %v935 = vld [vmem:[#allocation7 + $0x8] sm:$0xff]
          %v936 = vld [vmem:[#allocation8] sm:$0xff]
          %v937 = vld [vmem:[#allocation8 + $0x8] sm:$0xff]
          %v938 = vlog2.pop %v936
          %v939 = vmul.f32 %v938, 0.6931472
          %v940 = vlog2.pop %v937
          %v941 = vmul.f32 %v940, 0.6931472
          %v942 = vadd.f32 %v934, %v939
          %v943 = vadd.f32 %v935, %v941
          %v944 = vld [vmem:[#allocation9] sm:$0xff]
          %v945 = vld [vmem:[#allocation9 + $0x8] sm:$0xff]
          %v946 = vsub.f32 %v942, %v944
          %v947 = vsub.f32 %v943, %v945
          %v948 = vld [vmem:[%s489] sm:$0xff]
          %v949 = vld [vmem:[%s489 + $0x8] sm:$0xff]
          %v950 = vmul.f32 %v946, %v948
          %v951 = vmul.f32 %v947, %v949
          %v952 = vld [vmem:[#allocation10] sm:$0x1]
          %v953 = vsel %vm777, %v932, 0.0
          %v954 = vsel %vm777, %v933, 0.0
          %v955 = vadd.f32 %v953, %v954
          %v956 = vrot.slane %v955, 4
          %v957 = vadd.f32 %v955, %v956
          %v958 = vrot.slane %v957, 2
          %v959 = vadd.f32 %v957, %v958
          %v960 = vrot.slane %v959, 1
          %v961 = vadd.f32 %v959, %v960
          %v962 = vadd.f32 %v952, %v961
          %vm963 = vcmask 0
          %964 = vst.msk [vmem:[#allocation10] sm:$0x1] %vm963, %v962
          %v965 = vld [vmem:[#allocation12] sm:$0x1]
          %v966 = vsel %vm777, %v950, 0.0
          %v967 = vsel %vm777, %v951, 0.0
          %v968 = vadd.f32 %v966, %v967
          %v969 = vrot.slane %v968, 4
          %v970 = vadd.f32 %v968, %v969
          %v971 = vrot.slane %v970, 2
          %v972 = vadd.f32 %v970, %v971
          %v973 = vrot.slane %v972, 1
          %v974 = vadd.f32 %v972, %v973
          %v975 = vadd.f32 %v965, %v974
          %976 = vst.msk [vmem:[#allocation12] sm:$0x1] %vm963, %v975
        $region72: #{_lambda_.11} parent=59 // pred_fallthru
          _
        // Predicated region
        $region73: #{_lambda_.11} parent=59 // pred_check
          %p977 = pneg %p290
        $region74: #{_lambda_.11} parent=59 // pred_check_branch
          %979 = sbr.rel (%p977) target = $region76
        $region75: #{_lambda_.11} parent=59 // pred_region
          %s981 = ssub.s32 16, 16
          %982 = vsyncadd [#allocation11], %s981
          %s984 = sshll.u32 [#allocation10], 4
          %s985 = int_to_ptr.vmem [resolvable:$true] %s984
          %987 = dma.vmem_to_hbm [thread:$0]  %s985, 16, %s10, [#allocation11]
        $region76: #{_lambda_.11} parent=59 // pred_fallthru
          _
        // Predicated region
        $region77: #{_lambda_.11} parent=59 // pred_check
          %p988 = pneg %p311
        $region78: #{_lambda_.11} parent=59 // pred_check_branch
          %990 = sbr.rel (%p988) target = $region80
        $region79: #{_lambda_.11} parent=59 // pred_region
          %s992 = ssub.s32 16, 16
          %993 = vsyncadd [#allocation13], %s992
          %s995 = sshll.u32 [#allocation12], 4
          %s996 = int_to_ptr.vmem [resolvable:$true] %s995
          %998 = dma.vmem_to_hbm [thread:$0]  %s996, 16, %s11, [#allocation13]
        $region80: #{_lambda_.11} parent=59 // pred_fallthru
          _
        // Predicated region
        $region81: #{_lambda_.11} parent=59 // pred_check
          %p999 = pneg %p290
        $region82: #{_lambda_.11} parent=59 // pred_check_branch
          %1001 = sbr.rel (%p999) target = $region84
        $region83: #{_lambda_.11} parent=59 // pred_region
          %1002 = dma.done [#allocation11], 16
        $region84: #{_lambda_.11} parent=59 // pred_fallthru
          _
        // Predicated region
        $region85: #{_lambda_.11} parent=59 // pred_check
          %p1003 = pneg %p311
        $region86: #{_lambda_.11} parent=59 // pred_check_branch
          %1005 = sbr.rel (%p1003) target = $region88
        $region87: #{_lambda_.11} parent=59 // pred_region
          %1006 = dma.done [#allocation13], 16
        $region88: #{_lambda_.11} parent=59 // pred_fallthru
          _
      $region60: #{_lambda_.11} parent=5 // pred_fallthru
        _
      %p1007 = scmp.le.s32.totalorder 2, %s20
      // Predicated region
      $region89: #{_lambda_.11} parent=5 // pred_check
        %p1008 = pneg %p1007
      $region90: #{_lambda_.11} parent=5 // pred_check_branch
        %1010 = sbr.rel (%p1008) target = $region92
      $region91: #{_lambda_.11} parent=5 // pred_region
        %s1011 = ssub.s32 %s20, 2
      $region92: #{_lambda_.11} parent=5 // pred_fallthru
        _
    $region6: #{_lambda_.11} parent=1 // loop_footer
      %s24 = sadd.s32 1, %s20
    $region7: #{_lambda_.11} parent=1 // loop_footer_branch
      %19 = sbr.rel target = $region3
    $region8: #{_lambda_.11} parent=1 // loop_exit
      _
    %1012 = vsyncpa [#allocation11], 1
    %s1013 = scalar_lea.sflag [#allocation11], 1
    %1014 = vsyncpa %s1013, 1
    %1015 = vsyncpa [#allocation13], 1

</llo_original>
